<compile_context>
chip_gen: v5e
topology: v5e:2x2
jax: 0.10.0
libtpu: 0.0.40
codegen_flags: <defaults>
</compile_context>

<pallas_src>
import numpy as np
import jax
import jax.numpy as jnp
from jax import lax
from jax.experimental import pallas as pl
from jax.experimental.pallas import tpu as pltpu

EPS = 1e-5


def coattention_v1_kernel(
    avg_ref, sem_ref, h_ref,
    wv_ref, bv_ref,
    whf_ref, bhf_ref,              # fused [W_v_h^T | W_a_h^T] (bf16), fused bias (f32)
    wvatt_ref, bvatt_ref,
    wa_ref, ba_ref,
    waatt_ref, baatt_ref,
    wfc_ref, bfc_ref,              # full W_fc^T (V+H, E) bf16 — fused concat matmul
    bn2d_g_ref, bn2d_b_ref,        # (3, V): rows = bn_v, bn_v_h, bn_v_att
    bna_g_ref, bna_b_ref,          # (1, K, 1): bn_a
    bnaatt_g_ref, bnaatt_b_ref,    # (1, K, 1): bn_a_att
    bnah_ref,                      # (1, 2): bn_a_h gamma, beta
    ctx_ref, alpha_v_ref, alpha_a_ref,
):
    B, V = avg_ref.shape
    Hh = h_ref.shape[1]
    K = sem_ref.shape[1]
    bf16 = jnp.bfloat16

    avg = avg_ref[...]
    h = h_ref[...]
    sem3 = sem_ref[...]

    def bn2d(x, row):
        # BatchNorm1d(C) on (B, C): per-feature batch stats, two-pass (compensated).
        g = bn2d_g_ref[row:row + 1, :]
        b = bn2d_b_ref[row:row + 1, :]
        m = jnp.mean(x, axis=0, keepdims=True)
        d = x - m
        v = jnp.mean(d * d, axis=0, keepdims=True)
        return d * lax.rsqrt(v + EPS) * g + b

    def bn_k(x, g, b):
        # BatchNorm1d(K) on (B, K, Hh): per-channel-K stats over (B, Hh), two-pass.
        n = float(x.shape[0] * x.shape[2])
        m = jnp.sum(jnp.sum(x, axis=2, keepdims=True), axis=0, keepdims=True) / n
        d = x - m
        v = jnp.sum(jnp.sum(d * d, axis=2, keepdims=True), axis=0, keepdims=True) / n
        return d * lax.rsqrt(v + EPS) * g + b

    def softmax_last(x):
        z = jnp.exp(x - jnp.max(x, axis=-1, keepdims=True))
        return z * pl.reciprocal(jnp.sum(z, axis=-1, keepdims=True), approx=True)

    # ---- fused shared-LHS projection of h_sent: [W_v_h | W_a_h] in one matmul ----
    h_proj = jnp.dot(h.astype(bf16), whf_ref[...],
                     preferred_element_type=jnp.float32) + bhf_ref[...]
    wvh_lin = h_proj[:, :V]        # W_v_h(h)  (B, V)
    wah_lin = h_proj[:, V:]        # W_a_h(h)  (B, Hh)

    # ---- visual attention path ----
    wv_lin = jnp.dot(avg.astype(bf16), wv_ref[...],
                     preferred_element_type=jnp.float32) + bv_ref[...]
    pre_v = jnp.tanh(bn2d(wv_lin, 0) + bn2d(wvh_lin, 1))
    att_v = jnp.dot(pre_v.astype(bf16), wvatt_ref[...],
                    preferred_element_type=jnp.float32) + bvatt_ref[...]
    alpha_v = softmax_last(bn2d(att_v, 2))
    alpha_v_ref[...] = alpha_v
    v_att = alpha_v * avg

    # ---- semantic attention path ----
    # (B,K,Hh) <-> (B*K,Hh) reshapes are tile-exact because K % 8 == 0 and Hh % 128 == 0.
    sem2 = sem3.reshape(B * K, Hh)
    wa_lin = (jnp.dot(sem2.astype(bf16), wa_ref[...],
                      preferred_element_type=jnp.float32)
              + ba_ref[...]).reshape(B, K, Hh)
    wa_bn = bn_k(wa_lin, bna_g_ref[...], bna_b_ref[...])

    # bn_a_h: BatchNorm1d(1) on (B, 1, Hh): single channel, stats over all B*Hh elems.
    m_ah = jnp.mean(wah_lin)
    d_ah = wah_lin - m_ah
    v_ah = jnp.mean(d_ah * d_ah)
    wah_bn = d_ah * lax.rsqrt(v_ah + EPS) * bnah_ref[0:1, 0:1] + bnah_ref[0:1, 1:2]

    pre_a = jnp.tanh(wah_bn[:, None, :] + wa_bn)        # (B, K, Hh)
    att_a = (jnp.dot(pre_a.reshape(B * K, Hh).astype(bf16), waatt_ref[...],
                     preferred_element_type=jnp.float32)
             + baatt_ref[...]).reshape(B, K, Hh)
    alpha_a = softmax_last(bn_k(att_a, bnaatt_g_ref[...], bnaatt_b_ref[...]))
    alpha_a_ref[...] = alpha_a
    a_att = jnp.sum(alpha_a * sem3, axis=1)             # (B, Hh)

    # ---- ctx = W_fc([v_att ; a_att]): single fused matmul on a lane concat ----
    va_cat = jnp.concatenate([v_att, a_att], axis=1).astype(bf16)   # (B, V+Hh)
    ctx_ref[...] = (jnp.dot(va_cat, wfc_ref[...],
                            preferred_element_type=jnp.float32) + bfc_ref[...])


def coattention_v1_steps(avg_features, semantic_features, h_steps, params):
    """Run CoAttention.v1 for T decode steps with weights resident across steps.

    avg_features: (B, V); semantic_features: (B, K, Hh); h_steps: (T, B, Hh)
    Returns ctx (T,B,E), alpha_v (T,B,V), alpha_a (T,B,K,Hh).
    """
    B, V = avg_features.shape
    K, Hh = semantic_features.shape[1], semantic_features.shape[2]
    T = h_steps.shape[0]
    E = params["bfc"].shape[1]

    # TODO(synk): for K not a multiple of 8 (module default k=10), zero-pad the K axis
    # (and bna_*/bnaatt_* params) to 8-alignment before the call and slice alpha_a back.

    weights = (
        params["wv"], params["bv"],
        params["whf"], params["bhf"],
        params["wvatt"], params["bvatt"],
        params["wa"], params["ba"],
        params["waatt"], params["baatt"],
        params["wfc"], params["bfc"],
        params["bn2d_g"], params["bn2d_b"],
        params["bna_g"], params["bna_b"],
        params["bnaatt_g"], params["bnaatt_b"],
        params["bnah"],
    )

    def const_spec(x):
        # Full-array block with constant block index: DMA'd once, then the re-DMA is
        # elided for subsequent grid steps (weight residency across decode steps).
        nd = x.ndim
        return pl.BlockSpec(x.shape, lambda t, nd=nd: (0,) * nd)

    in_specs = (
        [const_spec(avg_features), const_spec(semantic_features),
         pl.BlockSpec((None, B, Hh), lambda t: (t, 0, 0))]
        + [const_spec(w) for w in weights]
    )

    out_specs = (
        pl.BlockSpec((None, B, E), lambda t: (t, 0, 0)),
        pl.BlockSpec((None, B, V), lambda t: (t, 0, 0)),
        pl.BlockSpec((None, B, K, Hh), lambda t: (t, 0, 0, 0)),
    )

    out_shape = (
        jax.ShapeDtypeStruct((T, B, E), jnp.float32),       # ctx
        jax.ShapeDtypeStruct((T, B, V), jnp.float32),       # alpha_v
        jax.ShapeDtypeStruct((T, B, K, Hh), jnp.float32),   # alpha_a
    )

    # Advisory cost estimate so XLA can overlap this small call with neighbors.
    flops_per_step = 2.0 * B * (Hh * (V + Hh) + 2 * V * V
                                + 2 * K * Hh * Hh + (V + Hh) * E)
    trans_per_step = float(B * (2 * V + 2 * K * Hh))        # tanh + exp
    bytes_weights = sum(int(np.prod(w.shape)) * w.dtype.itemsize for w in weights)
    bytes_per_step = 4 * (B * V + B * K * Hh + B * Hh + B * E + B * V + B * K * Hh)
    cost = pl.CostEstimate(
        flops=int(T * flops_per_step),
        transcendentals=int(T * trans_per_step),
        bytes_accessed=int(bytes_weights + T * bytes_per_step),
    )

    return pl.pallas_call(
        coattention_v1_kernel,
        out_shape=out_shape,
        grid=(T,),
        in_specs=in_specs,
        out_specs=out_specs,
        compiler_params=pltpu.CompilerParams(
            dimension_semantics=("parallel",),       # v7x: steps split across 2 TCs
            vmem_limit_bytes=32 * 1024 * 1024,
        ),
        cost_estimate=cost,
    )(avg_features, semantic_features, h_steps, *weights)


# ---------------- pure-JAX reference (PyTorch semantics, f32 activations) ----------------
def reference_v1(avg, sem, h_sent, p):
    V = avg.shape[1]
    f32 = lambda x: x.astype(jnp.float32)
    h = h_sent[:, 0, :]

    def bn2d(x, g, b):           # BatchNorm1d(C) on (B, C), training, biased var
        m = x.mean(axis=0)
        v = ((x - m) ** 2).mean(axis=0)
        return (x - m) / jnp.sqrt(v + EPS) * g + b

    def bn_k(x, g, b):           # BatchNorm1d(K) on (B, K, Hh)
        m = x.mean(axis=(0, 2), keepdims=True)
        v = ((x - m) ** 2).mean(axis=(0, 2), keepdims=True)
        return (x - m) / jnp.sqrt(v + EPS) * g + b

    def bn1(x, g, b):            # BatchNorm1d(1) on (B, 1, Hh)
        m = x.mean()
        v = ((x - m) ** 2).mean()
        return (x - m) / jnp.sqrt(v + EPS) * g + b

    softmax = lambda x: jax.nn.softmax(x, axis=-1)

    wvh = f32(p["whf"][:, :V]); wah = f32(p["whf"][:, V:])
    bvh = p["bhf"][:, :V];      bah = p["bhf"][:, V:]

    W_v = bn2d(avg @ f32(p["wv"]) + p["bv"], p["bn2d_g"][0], p["bn2d_b"][0])
    W_v_h = bn2d(h @ wvh + bvh, p["bn2d_g"][1], p["bn2d_b"][1])
    alpha_v = softmax(bn2d(jnp.tanh(W_v + W_v_h) @ f32(p["wvatt"]) + p["bvatt"],
                           p["bn2d_g"][2], p["bn2d_b"][2]))
    v_att = alpha_v * avg

    W_a_h = bn1(h_sent @ wah + bah, p["bnah"][0, 0], p["bnah"][0, 1])          # (B,1,Hh)
    W_a = bn_k(jnp.einsum("bkh,hd->bkd", sem, f32(p["wa"])) + p["ba"],
               p["bna_g"], p["bna_b"])
    alpha_a = softmax(bn_k(jnp.einsum("bkh,hd->bkd", jnp.tanh(W_a_h + W_a),
                                      f32(p["waatt"])) + p["baatt"],
                           p["bnaatt_g"], p["bnaatt_b"]))
    a_att = (alpha_a * sem).sum(axis=1)

    ctx = jnp.concatenate([v_att, a_att], axis=1) @ f32(p["wfc"]) + p["bfc"]
    return ctx, alpha_v, alpha_a


def make_params(key, V, Hh, E, K):
    ks = jax.random.split(key, 7)

    def uni(k, shape):
        return jax.random.uniform(k, shape, jnp.float32, -0.1, 0.1)

    bf = lambda x: x.astype(jnp.bfloat16)
    zeros = lambda *s: jnp.zeros(s, jnp.float32)
    ones = lambda *s: jnp.ones(s, jnp.float32)

    # Weights generated directly in transposed (in, out) layout (init is symmetric).
    wv_t = uni(ks[0], (V, V))
    wvh_t = uni(ks[1], (Hh, V))
    wvatt_t = uni(ks[2], (V, V))
    wa_t = uni(ks[3], (Hh, Hh))
    wah_t = uni(ks[4], (Hh, Hh))
    waatt_t = uni(ks[5], (Hh, Hh))
    wfc_t = uni(ks[6], (V + Hh, E))

    return dict(
        # bf16 weight matrices (model representation used by both kernel & reference)
        wv=bf(wv_t), bv=zeros(1, V),
        whf=bf(jnp.concatenate([wvh_t, wah_t], axis=1)),   # (Hh, V+Hh)
        bhf=zeros(1, V + Hh),
        wvatt=bf(wvatt_t), bvatt=zeros(1, V),
        wa=bf(wa_t), ba=zeros(1, Hh),
        waatt=bf(waatt_t), baatt=zeros(1, Hh),
        wfc=bf(wfc_t), bfc=zeros(1, E),
        # BatchNorm affine params, PyTorch default init (weight=1, bias=0), f32
        bn2d_g=ones(3, V), bn2d_b=zeros(3, V),             # bn_v, bn_v_h, bn_v_att
        bna_g=ones(1, K, 1), bna_b=zeros(1, K, 1),         # bn_a
        bnaatt_g=ones(1, K, 1), bnaatt_b=zeros(1, K, 1),   # bn_a_att
        bnah=jnp.array([[1.0, 0.0]], jnp.float32),         # bn_a_h (gamma, beta)
    )


if __name__ == "__main__":
    # Small, lane/sublane-aligned shapes consistent with the module
    # (visual_size > hidden_size = embed_size, k semantic topics), T decode steps.
    B, V, Hh, E, K, T = 8, 256, 128, 128, 8, 4
    key = jax.random.PRNGKey(0)
    kp, ka, ksem, kh = jax.random.split(key, 4)
    params = make_params(kp, V, Hh, E, K)

    avg_features = jax.random.normal(ka, (B, V), jnp.float32)
    semantic_features = jax.random.normal(ksem, (B, K, Hh), jnp.float32)
    h_steps = jax.random.normal(kh, (T, B, Hh), jnp.float32)

    ctx, alpha_v, alpha_a = jax.block_until_ready(
        coattention_v1_steps(avg_features, semantic_features, h_steps, params)
    )

    for t in range(T):
        r_ctx, r_av, r_aa = reference_v1(
            avg_features, semantic_features, h_steps[t][:, None, :], params)
        np.testing.assert_allclose(np.asarray(ctx[t]), np.asarray(r_ctx),
                                   rtol=5e-2, atol=2e-3)
        np.testing.assert_allclose(np.asarray(alpha_v[t]), np.asarray(r_av),
                                   rtol=5e-2, atol=5e-4)
        np.testing.assert_allclose(np.asarray(alpha_a[t]), np.asarray(r_aa),
                                   rtol=5e-2, atol=5e-4)

    print("KERNEL_OK")
</pallas_src>

<mosaic_0001>
module attributes {stable_mosaic.version = 11 : i64} {
  func.func @coattention_v1_kernel(%arg0: i32, %arg1: memref<8x256xf32, #tpu.memory_space<vmem>>, %arg2: memref<8x8x128xf32, #tpu.memory_space<vmem>>, %arg3: memref<1x8x128xf32, #tpu.memory_space<vmem>>, %arg4: memref<256x256xbf16, #tpu.memory_space<vmem>>, %arg5: memref<1x256xf32, #tpu.memory_space<vmem>>, %arg6: memref<128x384xbf16, #tpu.memory_space<vmem>>, %arg7: memref<1x384xf32, #tpu.memory_space<vmem>>, %arg8: memref<256x256xbf16, #tpu.memory_space<vmem>>, %arg9: memref<1x256xf32, #tpu.memory_space<vmem>>, %arg10: memref<128x128xbf16, #tpu.memory_space<vmem>>, %arg11: memref<1x128xf32, #tpu.memory_space<vmem>>, %arg12: memref<128x128xbf16, #tpu.memory_space<vmem>>, %arg13: memref<1x128xf32, #tpu.memory_space<vmem>>, %arg14: memref<384x128xbf16, #tpu.memory_space<vmem>>, %arg15: memref<1x128xf32, #tpu.memory_space<vmem>>, %arg16: memref<3x256xf32, #tpu.memory_space<vmem>>, %arg17: memref<3x256xf32, #tpu.memory_space<vmem>>, %arg18: memref<1x8x1xf32, #tpu.memory_space<vmem>>, %arg19: memref<1x8x1xf32, #tpu.memory_space<vmem>>, %arg20: memref<1x8x1xf32, #tpu.memory_space<vmem>>, %arg21: memref<1x8x1xf32, #tpu.memory_space<vmem>>, %arg22: memref<1x2xf32, #tpu.memory_space<vmem>>, %arg23: memref<1x8x128xf32, #tpu.memory_space<vmem>>, %arg24: memref<1x8x256xf32, #tpu.memory_space<vmem>>, %arg25: memref<1x8x8x128xf32, #tpu.memory_space<vmem>>) attributes {dimension_semantics = [#tpu.dimension_semantics<parallel>], iteration_bounds = array<i64: 4>, scalar_prefetch = 0 : i64, scratch_operands = 0 : i64, tpu.core_type = #tpu.core_type<tc>, window_params = [{pipeline_mode = #tpu.pipeline_mode<synchronous>, transform_indices = @transform_0, window_bounds = array<i64: 8, 256>}, {pipeline_mode = #tpu.pipeline_mode<synchronous>, transform_indices = @transform_1, window_bounds = array<i64: 8, 8, 128>}, {transform_indices = @transform_2, window_bounds = array<i64: 1, 8, 128>}, {pipeline_mode = #tpu.pipeline_mode<synchronous>, transform_indices = @transform_3, window_bounds = array<i64: 256, 256>}, {pipeline_mode = #tpu.pipeline_mode<synchronous>, transform_indices = @transform_4, window_bounds = array<i64: 1, 256>}, {pipeline_mode = #tpu.pipeline_mode<synchronous>, transform_indices = @transform_5, window_bounds = array<i64: 128, 384>}, {pipeline_mode = #tpu.pipeline_mode<synchronous>, transform_indices = @transform_6, window_bounds = array<i64: 1, 384>}, {pipeline_mode = #tpu.pipeline_mode<synchronous>, transform_indices = @transform_7, window_bounds = array<i64: 256, 256>}, {pipeline_mode = #tpu.pipeline_mode<synchronous>, transform_indices = @transform_8, window_bounds = array<i64: 1, 256>}, {pipeline_mode = #tpu.pipeline_mode<synchronous>, transform_indices = @transform_9, window_bounds = array<i64: 128, 128>}, {pipeline_mode = #tpu.pipeline_mode<synchronous>, transform_indices = @transform_10, window_bounds = array<i64: 1, 128>}, {pipeline_mode = #tpu.pipeline_mode<synchronous>, transform_indices = @transform_11, window_bounds = array<i64: 128, 128>}, {pipeline_mode = #tpu.pipeline_mode<synchronous>, transform_indices = @transform_12, window_bounds = array<i64: 1, 128>}, {pipeline_mode = #tpu.pipeline_mode<synchronous>, transform_indices = @transform_13, window_bounds = array<i64: 384, 128>}, {pipeline_mode = #tpu.pipeline_mode<synchronous>, transform_indices = @transform_14, window_bounds = array<i64: 1, 128>}, {pipeline_mode = #tpu.pipeline_mode<synchronous>, transform_indices = @transform_15, window_bounds = array<i64: 3, 256>}, {pipeline_mode = #tpu.pipeline_mode<synchronous>, transform_indices = @transform_16, window_bounds = array<i64: 3, 256>}, {pipeline_mode = #tpu.pipeline_mode<synchronous>, transform_indices = @transform_17, window_bounds = array<i64: 1, 8, 1>}, {pipeline_mode = #tpu.pipeline_mode<synchronous>, transform_indices = @transform_18, window_bounds = array<i64: 1, 8, 1>}, {pipeline_mode = #tpu.pipeline_mode<synchronous>, transform_indices = @transform_19, window_bounds = array<i64: 1, 8, 1>}, {pipeline_mode = #tpu.pipeline_mode<synchronous>, transform_indices = @transform_20, window_bounds = array<i64: 1, 8, 1>}, {pipeline_mode = #tpu.pipeline_mode<synchronous>, transform_indices = @transform_21, window_bounds = array<i64: 1, 2>}, {transform_indices = @transform_22, window_bounds = array<i64: 1, 8, 128>}, {transform_indices = @transform_23, window_bounds = array<i64: 1, 8, 256>}, {transform_indices = @transform_24, window_bounds = array<i64: 1, 8, 8, 128>}]} {
    %c0 = arith.constant 0 : index
    %c0_0 = arith.constant 0 : index
    %0 = vector.load %arg1[%c0, %c0_0] : memref<8x256xf32, #tpu.memory_space<vmem>>, vector<8x256xf32>
    %c0_1 = arith.constant 0 : index
    %c0_2 = arith.constant 0 : index
    %c0_3 = arith.constant 0 : index
    %1 = vector.load %arg3[%c0_1, %c0_2, %c0_3] : memref<1x8x128xf32, #tpu.memory_space<vmem>>, vector<1x8x128xf32>
    %2 = vector.shape_cast %1 : vector<1x8x128xf32> to vector<8x128xf32>
    %c0_4 = arith.constant 0 : index
    %c0_5 = arith.constant 0 : index
    %c0_6 = arith.constant 0 : index
    %3 = vector.load %arg2[%c0_4, %c0_5, %c0_6] : memref<8x8x128xf32, #tpu.memory_space<vmem>>, vector<8x8x128xf32>
    %4 = arith.truncf %2 : vector<8x128xf32> to vector<8x128xbf16>
    %c0_7 = arith.constant 0 : index
    %c0_8 = arith.constant 0 : index
    %5 = vector.load %arg6[%c0_7, %c0_8] : memref<128x384xbf16, #tpu.memory_space<vmem>>, vector<128x384xbf16>
    %cst = arith.constant dense<0.000000e+00> : vector<8x384xf32>
    %6 = tpu.matmul %4, %5, %cst {dimension_numbers = #tpu.dot_dimension_numbers<[1], [0], [0], [1], [0, 0, 1, 1], [], []>} : vector<8x128xbf16>, vector<128x384xbf16>, vector<8x384xf32> -> vector<8x384xf32>
    %c0_9 = arith.constant 0 : index
    %c0_10 = arith.constant 0 : index
    %7 = vector.load %arg7[%c0_9, %c0_10] : memref<1x384xf32, #tpu.memory_space<vmem>>, vector<1x384xf32>
    %8 = vector.broadcast %7 : vector<1x384xf32> to vector<8x384xf32>
    %9 = arith.addf %6, %8 : vector<8x384xf32>
    %10 = vector.extract_strided_slice %9 {offsets = [0, 0], sizes = [8, 256], strides = [1, 1]} : vector<8x384xf32> to vector<8x256xf32>
    %11 = vector.extract_strided_slice %9 {offsets = [0, 256], sizes = [8, 128], strides = [1, 1]} : vector<8x384xf32> to vector<8x128xf32>
    %12 = arith.truncf %0 : vector<8x256xf32> to vector<8x256xbf16>
    %c0_11 = arith.constant 0 : index
    %c0_12 = arith.constant 0 : index
    %13 = vector.load %arg4[%c0_11, %c0_12] : memref<256x256xbf16, #tpu.memory_space<vmem>>, vector<256x256xbf16>
    %cst_13 = arith.constant dense<0.000000e+00> : vector<8x256xf32>
    %14 = tpu.matmul %12, %13, %cst_13 {dimension_numbers = #tpu.dot_dimension_numbers<[1], [0], [0], [1], [0, 0, 1, 1], [], []>} : vector<8x256xbf16>, vector<256x256xbf16>, vector<8x256xf32> -> vector<8x256xf32>
    %c0_14 = arith.constant 0 : index
    %c0_15 = arith.constant 0 : index
    %15 = vector.load %arg5[%c0_14, %c0_15] : memref<1x256xf32, #tpu.memory_space<vmem>>, vector<1x256xf32>
    %16 = vector.broadcast %15 : vector<1x256xf32> to vector<8x256xf32>
    %17 = arith.addf %14, %16 : vector<8x256xf32>
    %c0_16 = arith.constant 0 : index
    %c0_17 = arith.constant 0 : index
    %18 = vector.load %arg16[%c0_16, %c0_17] : memref<3x256xf32, #tpu.memory_space<vmem>>, vector<1x256xf32>
    %c0_18 = arith.constant 0 : index
    %c0_19 = arith.constant 0 : index
    %19 = vector.load %arg17[%c0_18, %c0_19] : memref<3x256xf32, #tpu.memory_space<vmem>>, vector<1x256xf32>
    %cst_20 = arith.constant dense<0.000000e+00> : vector<256xf32>
    %20 = vector.multi_reduction <add>, %17, %cst_20 [0] : vector<8x256xf32> to vector<256xf32>
    %21 = vector.shape_cast %20 : vector<256xf32> to vector<1x256xf32>
    %cst_21 = arith.constant 8.000000e+00 : f32
    %22 = vector.broadcast %cst_21 : f32 to vector<1x256xf32>
    %23 = arith.divf %21, %22 : vector<1x256xf32>
    %24 = vector.broadcast %23 : vector<1x256xf32> to vector<8x256xf32>
    %25 = arith.subf %17, %24 : vector<8x256xf32>
    %26 = arith.mulf %25, %25 : vector<8x256xf32>
    %cst_22 = arith.constant dense<0.000000e+00> : vector<256xf32>
    %27 = vector.multi_reduction <add>, %26, %cst_22 [0] : vector<8x256xf32> to vector<256xf32>
    %28 = vector.shape_cast %27 : vector<256xf32> to vector<1x256xf32>
    %cst_23 = arith.constant 8.000000e+00 : f32
    %29 = vector.broadcast %cst_23 : f32 to vector<1x256xf32>
    %30 = arith.divf %28, %29 : vector<1x256xf32>
    %cst_24 = arith.constant 9.99999974E-6 : f32
    %31 = vector.broadcast %cst_24 : f32 to vector<1x256xf32>
    %32 = arith.addf %30, %31 : vector<1x256xf32>
    %33 = math.rsqrt %32 : vector<1x256xf32>
    %34 = vector.broadcast %33 : vector<1x256xf32> to vector<8x256xf32>
    %35 = arith.mulf %25, %34 : vector<8x256xf32>
    %36 = vector.broadcast %18 : vector<1x256xf32> to vector<8x256xf32>
    %37 = arith.mulf %35, %36 : vector<8x256xf32>
    %38 = vector.broadcast %19 : vector<1x256xf32> to vector<8x256xf32>
    %39 = arith.addf %37, %38 : vector<8x256xf32>
    %c1 = arith.constant 1 : index
    %c0_25 = arith.constant 0 : index
    %40 = vector.load %arg16[%c1, %c0_25] : memref<3x256xf32, #tpu.memory_space<vmem>>, vector<1x256xf32>
    %c1_26 = arith.constant 1 : index
    %c0_27 = arith.constant 0 : index
    %41 = vector.load %arg17[%c1_26, %c0_27] : memref<3x256xf32, #tpu.memory_space<vmem>>, vector<1x256xf32>
    %cst_28 = arith.constant dense<0.000000e+00> : vector<256xf32>
    %42 = vector.multi_reduction <add>, %10, %cst_28 [0] : vector<8x256xf32> to vector<256xf32>
    %43 = vector.shape_cast %42 : vector<256xf32> to vector<1x256xf32>
    %cst_29 = arith.constant 8.000000e+00 : f32
    %44 = vector.broadcast %cst_29 : f32 to vector<1x256xf32>
    %45 = arith.divf %43, %44 : vector<1x256xf32>
    %46 = vector.broadcast %45 : vector<1x256xf32> to vector<8x256xf32>
    %47 = arith.subf %10, %46 : vector<8x256xf32>
    %48 = arith.mulf %47, %47 : vector<8x256xf32>
    %cst_30 = arith.constant dense<0.000000e+00> : vector<256xf32>
    %49 = vector.multi_reduction <add>, %48, %cst_30 [0] : vector<8x256xf32> to vector<256xf32>
    %50 = vector.shape_cast %49 : vector<256xf32> to vector<1x256xf32>
    %cst_31 = arith.constant 8.000000e+00 : f32
    %51 = vector.broadcast %cst_31 : f32 to vector<1x256xf32>
    %52 = arith.divf %50, %51 : vector<1x256xf32>
    %cst_32 = arith.constant 9.99999974E-6 : f32
    %53 = vector.broadcast %cst_32 : f32 to vector<1x256xf32>
    %54 = arith.addf %52, %53 : vector<1x256xf32>
    %55 = math.rsqrt %54 : vector<1x256xf32>
    %56 = vector.broadcast %55 : vector<1x256xf32> to vector<8x256xf32>
    %57 = arith.mulf %47, %56 : vector<8x256xf32>
    %58 = vector.broadcast %40 : vector<1x256xf32> to vector<8x256xf32>
    %59 = arith.mulf %57, %58 : vector<8x256xf32>
    %60 = vector.broadcast %41 : vector<1x256xf32> to vector<8x256xf32>
    %61 = arith.addf %59, %60 : vector<8x256xf32>
    %62 = arith.addf %39, %61 : vector<8x256xf32>
    %63 = math.tanh %62 : vector<8x256xf32>
    %64 = arith.truncf %63 : vector<8x256xf32> to vector<8x256xbf16>
    %c0_33 = arith.constant 0 : index
    %c0_34 = arith.constant 0 : index
    %65 = vector.load %arg8[%c0_33, %c0_34] : memref<256x256xbf16, #tpu.memory_space<vmem>>, vector<256x256xbf16>
    %cst_35 = arith.constant dense<0.000000e+00> : vector<8x256xf32>
    %66 = tpu.matmul %64, %65, %cst_35 {dimension_numbers = #tpu.dot_dimension_numbers<[1], [0], [0], [1], [0, 0, 1, 1], [], []>} : vector<8x256xbf16>, vector<256x256xbf16>, vector<8x256xf32> -> vector<8x256xf32>
    %c0_36 = arith.constant 0 : index
    %c0_37 = arith.constant 0 : index
    %67 = vector.load %arg9[%c0_36, %c0_37] : memref<1x256xf32, #tpu.memory_space<vmem>>, vector<1x256xf32>
    %68 = vector.broadcast %67 : vector<1x256xf32> to vector<8x256xf32>
    %69 = arith.addf %66, %68 : vector<8x256xf32>
    %c2 = arith.constant 2 : index
    %c0_38 = arith.constant 0 : index
    %70 = vector.load %arg16[%c2, %c0_38] : memref<3x256xf32, #tpu.memory_space<vmem>>, vector<1x256xf32>
    %c2_39 = arith.constant 2 : index
    %c0_40 = arith.constant 0 : index
    %71 = vector.load %arg17[%c2_39, %c0_40] : memref<3x256xf32, #tpu.memory_space<vmem>>, vector<1x256xf32>
    %cst_41 = arith.constant dense<0.000000e+00> : vector<256xf32>
    %72 = vector.multi_reduction <add>, %69, %cst_41 [0] : vector<8x256xf32> to vector<256xf32>
    %73 = vector.shape_cast %72 : vector<256xf32> to vector<1x256xf32>
    %cst_42 = arith.constant 8.000000e+00 : f32
    %74 = vector.broadcast %cst_42 : f32 to vector<1x256xf32>
    %75 = arith.divf %73, %74 : vector<1x256xf32>
    %76 = vector.broadcast %75 : vector<1x256xf32> to vector<8x256xf32>
    %77 = arith.subf %69, %76 : vector<8x256xf32>
    %78 = arith.mulf %77, %77 : vector<8x256xf32>
    %cst_43 = arith.constant dense<0.000000e+00> : vector<256xf32>
    %79 = vector.multi_reduction <add>, %78, %cst_43 [0] : vector<8x256xf32> to vector<256xf32>
    %80 = vector.shape_cast %79 : vector<256xf32> to vector<1x256xf32>
    %cst_44 = arith.constant 8.000000e+00 : f32
    %81 = vector.broadcast %cst_44 : f32 to vector<1x256xf32>
    %82 = arith.divf %80, %81 : vector<1x256xf32>
    %cst_45 = arith.constant 9.99999974E-6 : f32
    %83 = vector.broadcast %cst_45 : f32 to vector<1x256xf32>
    %84 = arith.addf %82, %83 : vector<1x256xf32>
    %85 = math.rsqrt %84 : vector<1x256xf32>
    %86 = vector.broadcast %85 : vector<1x256xf32> to vector<8x256xf32>
    %87 = arith.mulf %77, %86 : vector<8x256xf32>
    %88 = vector.broadcast %70 : vector<1x256xf32> to vector<8x256xf32>
    %89 = arith.mulf %87, %88 : vector<8x256xf32>
    %90 = vector.broadcast %71 : vector<1x256xf32> to vector<8x256xf32>
    %91 = arith.addf %89, %90 : vector<8x256xf32>
    %cst_46 = arith.constant dense<0xFF800000> : vector<8xf32>
    %92 = vector.multi_reduction <maximumf>, %91, %cst_46 [1] : vector<8x256xf32> to vector<8xf32>
    %93 = vector.shape_cast %92 : vector<8xf32> to vector<8x1xf32>
    %94 = vector.broadcast %93 : vector<8x1xf32> to vector<8x256xf32>
    %95 = arith.subf %91, %94 : vector<8x256xf32>
    %96 = math.exp %95 : vector<8x256xf32>
    %cst_47 = arith.constant dense<0.000000e+00> : vector<8xf32>
    %97 = vector.multi_reduction <add>, %96, %cst_47 [1] : vector<8x256xf32> to vector<8xf32>
    %98 = vector.shape_cast %97 : vector<8xf32> to vector<8x1xf32>
    %99 = tpu.reciprocal %98 {approx = true} : vector<8x1xf32> -> vector<8x1xf32>
    %100 = vector.broadcast %99 : vector<8x1xf32> to vector<8x256xf32>
    %101 = arith.mulf %96, %100 : vector<8x256xf32>
    %c0_48 = arith.constant 0 : index
    %c0_49 = arith.constant 0 : index
    %c0_50 = arith.constant 0 : index
    %102 = vector.load %arg24[%c0_48, %c0_49, %c0_50] : memref<1x8x256xf32, #tpu.memory_space<vmem>>, vector<1x8x256xf32>
    %103 = vector.shape_cast %102 : vector<1x8x256xf32> to vector<8x256xf32>
    %104 = vector.shape_cast %101 : vector<8x256xf32> to vector<1x8x256xf32>
    tpu.vector_store %arg24[%c0_48, %c0_49, %c0_50], %104 {strides = array<i32>} : memref<1x8x256xf32, #tpu.memory_space<vmem>>, vector<1x8x256xf32>,
    %105 = arith.mulf %101, %0 : vector<8x256xf32>
    %106 = vector.shape_cast %3 : vector<8x8x128xf32> to vector<64x128xf32>
    %107 = arith.truncf %106 : vector<64x128xf32> to vector<64x128xbf16>
    %c0_51 = arith.constant 0 : index
    %c0_52 = arith.constant 0 : index
    %108 = vector.load %arg10[%c0_51, %c0_52] : memref<128x128xbf16, #tpu.memory_space<vmem>>, vector<128x128xbf16>
    %cst_53 = arith.constant dense<0.000000e+00> : vector<64x128xf32>
    %109 = tpu.matmul %107, %108, %cst_53 {dimension_numbers = #tpu.dot_dimension_numbers<[1], [0], [0], [1], [0, 0, 1, 1], [], []>} : vector<64x128xbf16>, vector<128x128xbf16>, vector<64x128xf32> -> vector<64x128xf32>
    %c0_54 = arith.constant 0 : index
    %c0_55 = arith.constant 0 : index
    %110 = vector.load %arg11[%c0_54, %c0_55] : memref<1x128xf32, #tpu.memory_space<vmem>>, vector<1x128xf32>
    %111 = vector.broadcast %110 : vector<1x128xf32> to vector<64x128xf32>
    %112 = arith.addf %109, %111 : vector<64x128xf32>
    %113 = vector.shape_cast %112 : vector<64x128xf32> to vector<8x8x128xf32>
    %c0_56 = arith.constant 0 : index
    %c0_57 = arith.constant 0 : index
    %c0_58 = arith.constant 0 : index
    %114 = vector.load %arg18[%c0_56, %c0_57, %c0_58] : memref<1x8x1xf32, #tpu.memory_space<vmem>>, vector<1x8x1xf32>
    %c0_59 = arith.constant 0 : index
    %c0_60 = arith.constant 0 : index
    %c0_61 = arith.constant 0 : index
    %115 = vector.load %arg19[%c0_59, %c0_60, %c0_61] : memref<1x8x1xf32, #tpu.memory_space<vmem>>, vector<1x8x1xf32>
    %cst_62 = arith.constant dense<0.000000e+00> : vector<8x8xf32>
    %116 = vector.multi_reduction <add>, %113, %cst_62 [2] : vector<8x8x128xf32> to vector<8x8xf32>
    %117 = vector.shape_cast %116 : vector<8x8xf32> to vector<8x8x1xf32>
    %cst_63 = arith.constant dense<0.000000e+00> : vector<8x1xf32>
    %118 = vector.multi_reduction <add>, %117, %cst_63 [0] : vector<8x8x1xf32> to vector<8x1xf32>
    %119 = vector.shape_cast %118 : vector<8x1xf32> to vector<1x8x1xf32>
    %cst_64 = arith.constant 1.024000e+03 : f32
    %120 = vector.broadcast %cst_64 : f32 to vector<1x8x1xf32>
    %121 = arith.divf %119, %120 : vector<1x8x1xf32>
    %122 = vector.broadcast %121 : vector<1x8x1xf32> to vector<8x8x128xf32>
    %123 = arith.subf %113, %122 : vector<8x8x128xf32>
    %124 = arith.mulf %123, %123 : vector<8x8x128xf32>
    %cst_65 = arith.constant dense<0.000000e+00> : vector<8x8xf32>
    %125 = vector.multi_reduction <add>, %124, %cst_65 [2] : vector<8x8x128xf32> to vector<8x8xf32>
    %126 = vector.shape_cast %125 : vector<8x8xf32> to vector<8x8x1xf32>
    %cst_66 = arith.constant dense<0.000000e+00> : vector<8x1xf32>
    %127 = vector.multi_reduction <add>, %126, %cst_66 [0] : vector<8x8x1xf32> to vector<8x1xf32>
    %128 = vector.shape_cast %127 : vector<8x1xf32> to vector<1x8x1xf32>
    %cst_67 = arith.constant 1.024000e+03 : f32
    %129 = vector.broadcast %cst_67 : f32 to vector<1x8x1xf32>
    %130 = arith.divf %128, %129 : vector<1x8x1xf32>
    %cst_68 = arith.constant 9.99999974E-6 : f32
    %131 = vector.broadcast %cst_68 : f32 to vector<1x8x1xf32>
    %132 = arith.addf %130, %131 : vector<1x8x1xf32>
    %133 = math.rsqrt %132 : vector<1x8x1xf32>
    %134 = vector.broadcast %133 : vector<1x8x1xf32> to vector<8x8x128xf32>
    %135 = arith.mulf %123, %134 : vector<8x8x128xf32>
    %136 = vector.broadcast %114 : vector<1x8x1xf32> to vector<8x8x128xf32>
    %137 = arith.mulf %135, %136 : vector<8x8x128xf32>
    %138 = vector.broadcast %115 : vector<1x8x1xf32> to vector<8x8x128xf32>
    %139 = arith.addf %137, %138 : vector<8x8x128xf32>
    %140 = vector.shape_cast %11 : vector<8x128xf32> to vector<1x8x128xf32>
    %cst_69 = arith.constant dense<0.000000e+00> : vector<1xf32>
    %141 = vector.multi_reduction <add>, %140, %cst_69 [1, 2] : vector<1x8x128xf32> to vector<1xf32>
    %142 = vector.shape_cast %141 : vector<1xf32> to vector<1x1x1xf32>
    %143 = vector.extract %142[0, 0, 0] : f32 from vector<1x1x1xf32>
    %cst_70 = arith.constant 1.024000e+03 : f32
    %144 = arith.divf %143, %cst_70 : f32
    %145 = vector.broadcast %144 : f32 to vector<8x128xf32>
    %146 = arith.subf %11, %145 : vector<8x128xf32>
    %147 = arith.mulf %146, %146 : vector<8x128xf32>
    %148 = vector.shape_cast %147 : vector<8x128xf32> to vector<1x8x128xf32>
    %cst_71 = arith.constant dense<0.000000e+00> : vector<1xf32>
    %149 = vector.multi_reduction <add>, %148, %cst_71 [1, 2] : vector<1x8x128xf32> to vector<1xf32>
    %150 = vector.shape_cast %149 : vector<1xf32> to vector<1x1x1xf32>
    %151 = vector.extract %150[0, 0, 0] : f32 from vector<1x1x1xf32>
    %cst_72 = arith.constant 1.024000e+03 : f32
    %152 = arith.divf %151, %cst_72 : f32
    %cst_73 = arith.constant 9.99999974E-6 : f32
    %153 = arith.addf %152, %cst_73 : f32
    %154 = math.rsqrt %153 : f32
    %155 = vector.broadcast %154 : f32 to vector<8x128xf32>
    %156 = arith.mulf %146, %155 : vector<8x128xf32>
    %c0_74 = arith.constant 0 : index
    %c0_75 = arith.constant 0 : index
    %157 = vector.load %arg22[%c0_74, %c0_75] : memref<1x2xf32, #tpu.memory_space<vmem>>, vector<1x1xf32>
    %158 = vector.broadcast %157 : vector<1x1xf32> to vector<8x128xf32>
    %159 = arith.mulf %156, %158 : vector<8x128xf32>
    %c0_76 = arith.constant 0 : index
    %c1_77 = arith.constant 1 : index
    %160 = vector.load %arg22[%c0_76, %c1_77] : memref<1x2xf32, #tpu.memory_space<vmem>>, vector<1x1xf32>
    %161 = vector.broadcast %160 : vector<1x1xf32> to vector<8x128xf32>
    %162 = arith.addf %159, %161 : vector<8x128xf32>
    %163 = vector.shape_cast %162 : vector<8x128xf32> to vector<8x1x128xf32>
    %164 = vector.broadcast %163 : vector<8x1x128xf32> to vector<8x8x128xf32>
    %165 = arith.addf %164, %139 : vector<8x8x128xf32>
    %166 = math.tanh %165 : vector<8x8x128xf32>
    %167 = vector.shape_cast %166 : vector<8x8x128xf32> to vector<64x128xf32>
    %168 = arith.truncf %167 : vector<64x128xf32> to vector<64x128xbf16>
    %c0_78 = arith.constant 0 : index
    %c0_79 = arith.constant 0 : index
    %169 = vector.load %arg12[%c0_78, %c0_79] : memref<128x128xbf16, #tpu.memory_space<vmem>>, vector<128x128xbf16>
    %cst_80 = arith.constant dense<0.000000e+00> : vector<64x128xf32>
    %170 = tpu.matmul %168, %169, %cst_80 {dimension_numbers = #tpu.dot_dimension_numbers<[1], [0], [0], [1], [0, 0, 1, 1], [], []>} : vector<64x128xbf16>, vector<128x128xbf16>, vector<64x128xf32> -> vector<64x128xf32>
    %c0_81 = arith.constant 0 : index
    %c0_82 = arith.constant 0 : index
    %171 = vector.load %arg13[%c0_81, %c0_82] : memref<1x128xf32, #tpu.memory_space<vmem>>, vector<1x128xf32>
    %172 = vector.broadcast %171 : vector<1x128xf32> to vector<64x128xf32>
    %173 = arith.addf %170, %172 : vector<64x128xf32>
    %174 = vector.shape_cast %173 : vector<64x128xf32> to vector<8x8x128xf32>
    %c0_83 = arith.constant 0 : index
    %c0_84 = arith.constant 0 : index
    %c0_85 = arith.constant 0 : index
    %175 = vector.load %arg20[%c0_83, %c0_84, %c0_85] : memref<1x8x1xf32, #tpu.memory_space<vmem>>, vector<1x8x1xf32>
    %c0_86 = arith.constant 0 : index
    %c0_87 = arith.constant 0 : index
    %c0_88 = arith.constant 0 : index
    %176 = vector.load %arg21[%c0_86, %c0_87, %c0_88] : memref<1x8x1xf32, #tpu.memory_space<vmem>>, vector<1x8x1xf32>
    %cst_89 = arith.constant dense<0.000000e+00> : vector<8x8xf32>
    %177 = vector.multi_reduction <add>, %174, %cst_89 [2] : vector<8x8x128xf32> to vector<8x8xf32>
    %178 = vector.shape_cast %177 : vector<8x8xf32> to vector<8x8x1xf32>
    %cst_90 = arith.constant dense<0.000000e+00> : vector<8x1xf32>
    %179 = vector.multi_reduction <add>, %178, %cst_90 [0] : vector<8x8x1xf32> to vector<8x1xf32>
    %180 = vector.shape_cast %179 : vector<8x1xf32> to vector<1x8x1xf32>
    %cst_91 = arith.constant 1.024000e+03 : f32
    %181 = vector.broadcast %cst_91 : f32 to vector<1x8x1xf32>
    %182 = arith.divf %180, %181 : vector<1x8x1xf32>
    %183 = vector.broadcast %182 : vector<1x8x1xf32> to vector<8x8x128xf32>
    %184 = arith.subf %174, %183 : vector<8x8x128xf32>
    %185 = arith.mulf %184, %184 : vector<8x8x128xf32>
    %cst_92 = arith.constant dense<0.000000e+00> : vector<8x8xf32>
    %186 = vector.multi_reduction <add>, %185, %cst_92 [2] : vector<8x8x128xf32> to vector<8x8xf32>
    %187 = vector.shape_cast %186 : vector<8x8xf32> to vector<8x8x1xf32>
    %cst_93 = arith.constant dense<0.000000e+00> : vector<8x1xf32>
    %188 = vector.multi_reduction <add>, %187, %cst_93 [0] : vector<8x8x1xf32> to vector<8x1xf32>
    %189 = vector.shape_cast %188 : vector<8x1xf32> to vector<1x8x1xf32>
    %cst_94 = arith.constant 1.024000e+03 : f32
    %190 = vector.broadcast %cst_94 : f32 to vector<1x8x1xf32>
    %191 = arith.divf %189, %190 : vector<1x8x1xf32>
    %cst_95 = arith.constant 9.99999974E-6 : f32
    %192 = vector.broadcast %cst_95 : f32 to vector<1x8x1xf32>
    %193 = arith.addf %191, %192 : vector<1x8x1xf32>
    %194 = math.rsqrt %193 : vector<1x8x1xf32>
    %195 = vector.broadcast %194 : vector<1x8x1xf32> to vector<8x8x128xf32>
    %196 = arith.mulf %184, %195 : vector<8x8x128xf32>
    %197 = vector.broadcast %175 : vector<1x8x1xf32> to vector<8x8x128xf32>
    %198 = arith.mulf %196, %197 : vector<8x8x128xf32>
    %199 = vector.broadcast %176 : vector<1x8x1xf32> to vector<8x8x128xf32>
    %200 = arith.addf %198, %199 : vector<8x8x128xf32>
    %cst_96 = arith.constant dense<0xFF800000> : vector<8x8xf32>
    %201 = vector.multi_reduction <maximumf>, %200, %cst_96 [2] : vector<8x8x128xf32> to vector<8x8xf32>
    %202 = vector.shape_cast %201 : vector<8x8xf32> to vector<8x8x1xf32>
    %203 = vector.broadcast %202 : vector<8x8x1xf32> to vector<8x8x128xf32>
    %204 = arith.subf %200, %203 : vector<8x8x128xf32>
    %205 = math.exp %204 : vector<8x8x128xf32>
    %cst_97 = arith.constant dense<0.000000e+00> : vector<8x8xf32>
    %206 = vector.multi_reduction <add>, %205, %cst_97 [2] : vector<8x8x128xf32> to vector<8x8xf32>
    %207 = vector.shape_cast %206 : vector<8x8xf32> to vector<8x8x1xf32>
    %208 = tpu.reciprocal %207 {approx = true} : vector<8x8x1xf32> -> vector<8x8x1xf32>
    %209 = vector.broadcast %208 : vector<8x8x1xf32> to vector<8x8x128xf32>
    %210 = arith.mulf %205, %209 : vector<8x8x128xf32>
    %c0_98 = arith.constant 0 : index
    %c0_99 = arith.constant 0 : index
    %c0_100 = arith.constant 0 : index
    %c0_101 = arith.constant 0 : index
    %211 = vector.load %arg25[%c0_98, %c0_99, %c0_100, %c0_101] : memref<1x8x8x128xf32, #tpu.memory_space<vmem>>, vector<1x8x8x128xf32>
    %212 = vector.shape_cast %211 : vector<1x8x8x128xf32> to vector<8x8x128xf32>
    %213 = vector.shape_cast %210 : vector<8x8x128xf32> to vector<1x8x8x128xf32>
    tpu.vector_store %arg25[%c0_98, %c0_99, %c0_100, %c0_101], %213 {strides = array<i32>} : memref<1x8x8x128xf32, #tpu.memory_space<vmem>>, vector<1x8x8x128xf32>,
    %214 = arith.mulf %210, %3 : vector<8x8x128xf32>
    %cst_102 = arith.constant dense<0.000000e+00> : vector<8x128xf32>
    %215 = vector.multi_reduction <add>, %214, %cst_102 [1] : vector<8x8x128xf32> to vector<8x128xf32>
    %216 = tpu.concatenate %105, %215 in 1 : vector<8x256xf32>, vector<8x128xf32> -> vector<8x384xf32>
    %217 = arith.truncf %216 : vector<8x384xf32> to vector<8x384xbf16>
    %c0_103 = arith.constant 0 : index
    %c0_104 = arith.constant 0 : index
    %218 = vector.load %arg14[%c0_103, %c0_104] : memref<384x128xbf16, #tpu.memory_space<vmem>>, vector<384x128xbf16>
    %cst_105 = arith.constant dense<0.000000e+00> : vector<8x128xf32>
    %219 = tpu.matmul %217, %218, %cst_105 {dimension_numbers = #tpu.dot_dimension_numbers<[1], [0], [0], [1], [0, 0, 1, 1], [], []>} : vector<8x384xbf16>, vector<384x128xbf16>, vector<8x128xf32> -> vector<8x128xf32>
    %c0_106 = arith.constant 0 : index
    %c0_107 = arith.constant 0 : index
    %220 = vector.load %arg15[%c0_106, %c0_107] : memref<1x128xf32, #tpu.memory_space<vmem>>, vector<1x128xf32>
    %221 = vector.broadcast %220 : vector<1x128xf32> to vector<8x128xf32>
    %222 = arith.addf %219, %221 : vector<8x128xf32>
    %c0_108 = arith.constant 0 : index
    %c0_109 = arith.constant 0 : index
    %c0_110 = arith.constant 0 : index
    %223 = vector.load %arg23[%c0_108, %c0_109, %c0_110] : memref<1x8x128xf32, #tpu.memory_space<vmem>>, vector<1x8x128xf32>
    %224 = vector.shape_cast %223 : vector<1x8x128xf32> to vector<8x128xf32>
    %225 = vector.shape_cast %222 : vector<8x128xf32> to vector<1x8x128xf32>
    tpu.vector_store %arg23[%c0_108, %c0_109, %c0_110], %225 {strides = array<i32>} : memref<1x8x128xf32, #tpu.memory_space<vmem>>, vector<1x8x128xf32>,
    return
  }
  func.func @transform_0(%arg0: i32) -> (i32, i32) {
    %c0_i32 = arith.constant 0 : i32
    %c0_i32_0 = arith.constant 0 : i32
    %c0_i32_1 = arith.constant 0 : i32
    return %c0_i32, %c0_i32_0 : i32, i32
  }
  func.func @transform_1(%arg0: i32) -> (i32, i32, i32) {
    %c0_i32 = arith.constant 0 : i32
    %c0_i32_0 = arith.constant 0 : i32
    %c0_i32_1 = arith.constant 0 : i32
    %c0_i32_2 = arith.constant 0 : i32
    return %c0_i32, %c0_i32_0, %c0_i32_1 : i32, i32, i32
  }
  func.func @transform_2(%arg0: i32) -> (i32, i32, i32) {
    %c0_i32 = arith.constant 0 : i32
    %c0_i32_0 = arith.constant 0 : i32
    %c0_i32_1 = arith.constant 0 : i32
    return %arg0, %c0_i32, %c0_i32_0 : i32, i32, i32
  }
  func.func @transform_3(%arg0: i32) -> (i32, i32) {
    %c0_i32 = arith.constant 0 : i32
    %c0_i32_0 = arith.constant 0 : i32
    %c0_i32_1 = arith.constant 0 : i32
    return %c0_i32, %c0_i32_0 : i32, i32
  }
  func.func @transform_4(%arg0: i32) -> (i32, i32) {
    %c0_i32 = arith.constant 0 : i32
    %c0_i32_0 = arith.constant 0 : i32
    %c0_i32_1 = arith.constant 0 : i32
    return %c0_i32, %c0_i32_0 : i32, i32
  }
  func.func @transform_5(%arg0: i32) -> (i32, i32) {
    %c0_i32 = arith.constant 0 : i32
    %c0_i32_0 = arith.constant 0 : i32
    %c0_i32_1 = arith.constant 0 : i32
    return %c0_i32, %c0_i32_0 : i32, i32
  }
  func.func @transform_6(%arg0: i32) -> (i32, i32) {
    %c0_i32 = arith.constant 0 : i32
    %c0_i32_0 = arith.constant 0 : i32
    %c0_i32_1 = arith.constant 0 : i32
    return %c0_i32, %c0_i32_0 : i32, i32
  }
  func.func @transform_7(%arg0: i32) -> (i32, i32) {
    %c0_i32 = arith.constant 0 : i32
    %c0_i32_0 = arith.constant 0 : i32
    %c0_i32_1 = arith.constant 0 : i32
    return %c0_i32, %c0_i32_0 : i32, i32
  }
  func.func @transform_8(%arg0: i32) -> (i32, i32) {
    %c0_i32 = arith.constant 0 : i32
    %c0_i32_0 = arith.constant 0 : i32
    %c0_i32_1 = arith.constant 0 : i32
    return %c0_i32, %c0_i32_0 : i32, i32
  }
  func.func @transform_9(%arg0: i32) -> (i32, i32) {
    %c0_i32 = arith.constant 0 : i32
    %c0_i32_0 = arith.constant 0 : i32
    %c0_i32_1 = arith.constant 0 : i32
    return %c0_i32, %c0_i32_0 : i32, i32
  }
  func.func @transform_10(%arg0: i32) -> (i32, i32) {
    %c0_i32 = arith.constant 0 : i32
    %c0_i32_0 = arith.constant 0 : i32
    %c0_i32_1 = arith.constant 0 : i32
    return %c0_i32, %c0_i32_0 : i32, i32
  }
  func.func @transform_11(%arg0: i32) -> (i32, i32) {
    %c0_i32 = arith.constant 0 : i32
    %c0_i32_0 = arith.constant 0 : i32
    %c0_i32_1 = arith.constant 0 : i32
    return %c0_i32, %c0_i32_0 : i32, i32
  }
  func.func @transform_12(%arg0: i32) -> (i32, i32) {
    %c0_i32 = arith.constant 0 : i32
    %c0_i32_0 = arith.constant 0 : i32
    %c0_i32_1 = arith.constant 0 : i32
    return %c0_i32, %c0_i32_0 : i32, i32
  }
  func.func @transform_13(%arg0: i32) -> (i32, i32) {
    %c0_i32 = arith.constant 0 : i32
    %c0_i32_0 = arith.constant 0 : i32
    %c0_i32_1 = arith.constant 0 : i32
    return %c0_i32, %c0_i32_0 : i32, i32
  }
  func.func @transform_14(%arg0: i32) -> (i32, i32) {
    %c0_i32 = arith.constant 0 : i32
    %c0_i32_0 = arith.constant 0 : i32
    %c0_i32_1 = arith.constant 0 : i32
    return %c0_i32, %c0_i32_0 : i32, i32
  }
  func.func @transform_15(%arg0: i32) -> (i32, i32) {
    %c0_i32 = arith.constant 0 : i32
    %c0_i32_0 = arith.constant 0 : i32
    %c0_i32_1 = arith.constant 0 : i32
    return %c0_i32, %c0_i32_0 : i32, i32
  }
  func.func @transform_16(%arg0: i32) -> (i32, i32) {
    %c0_i32 = arith.constant 0 : i32
    %c0_i32_0 = arith.constant 0 : i32
    %c0_i32_1 = arith.constant 0 : i32
    return %c0_i32, %c0_i32_0 : i32, i32
  }
  func.func @transform_17(%arg0: i32) -> (i32, i32, i32) {
    %c0_i32 = arith.constant 0 : i32
    %c0_i32_0 = arith.constant 0 : i32
    %c0_i32_1 = arith.constant 0 : i32
    %c0_i32_2 = arith.constant 0 : i32
    return %c0_i32, %c0_i32_0, %c0_i32_1 : i32, i32, i32
  }
  func.func @transform_18(%arg0: i32) -> (i32, i32, i32) {
    %c0_i32 = arith.constant 0 : i32
    %c0_i32_0 = arith.constant 0 : i32
    %c0_i32_1 = arith.constant 0 : i32
    %c0_i32_2 = arith.constant 0 : i32
    return %c0_i32, %c0_i32_0, %c0_i32_1 : i32, i32, i32
  }
  func.func @transform_19(%arg0: i32) -> (i32, i32, i32) {
    %c0_i32 = arith.constant 0 : i32
    %c0_i32_0 = arith.constant 0 : i32
    %c0_i32_1 = arith.constant 0 : i32
    %c0_i32_2 = arith.constant 0 : i32
    return %c0_i32, %c0_i32_0, %c0_i32_1 : i32, i32, i32
  }
  func.func @transform_20(%arg0: i32) -> (i32, i32, i32) {
    %c0_i32 = arith.constant 0 : i32
    %c0_i32_0 = arith.constant 0 : i32
    %c0_i32_1 = arith.constant 0 : i32
    %c0_i32_2 = arith.constant 0 : i32
    return %c0_i32, %c0_i32_0, %c0_i32_1 : i32, i32, i32
  }
  func.func @transform_21(%arg0: i32) -> (i32, i32) {
    %c0_i32 = arith.constant 0 : i32
    %c0_i32_0 = arith.constant 0 : i32
    %c0_i32_1 = arith.constant 0 : i32
    return %c0_i32, %c0_i32_0 : i32, i32
  }
  func.func @transform_22(%arg0: i32) -> (i32, i32, i32) {
    %c0_i32 = arith.constant 0 : i32
    %c0_i32_0 = arith.constant 0 : i32
    %c0_i32_1 = arith.constant 0 : i32
    return %arg0, %c0_i32, %c0_i32_0 : i32, i32, i32
  }
  func.func @transform_23(%arg0: i32) -> (i32, i32, i32) {
    %c0_i32 = arith.constant 0 : i32
    %c0_i32_0 = arith.constant 0 : i32
    %c0_i32_1 = arith.constant 0 : i32
    return %arg0, %c0_i32, %c0_i32_0 : i32, i32, i32
  }
  func.func @transform_24(%arg0: i32) -> (i32, i32, i32, i32) {
    %c0_i32 = arith.constant 0 : i32
    %c0_i32_0 = arith.constant 0 : i32
    %c0_i32_1 = arith.constant 0 : i32
    %c0_i32_2 = arith.constant 0 : i32
    return %arg0, %c0_i32, %c0_i32_0, %c0_i32_1 : i32, i32, i32, i32
  }
}

</mosaic_0001>

<llo_original>
// kernel: tpu_custom_call.1
$region0: #{tpu_custom_call.1}
  #allocation0 [shape = 'u32[]', space=smem, size = 0x4, offset = 0x4, fixed_abs, tag = 'smem constant byte address 0x4 - core index']
  #allocation1 [shape = 'u32[72,128]{1,0:T(1,128)}', space=vmem, size = 0x9000, scoped, tag = 'internal scratch']
  %s0 = inlined_call_operand.hbm [shape: f32[8,256], index: 0, kind: input, shape index: {}]
  %s1 = inlined_call_operand.hbm [shape: f32[8,8,128], index: 1, kind: input, shape index: {}]
  %s2 = inlined_call_operand.vmem [shape: f32[4,8,128], index: 2, kind: input, shape index: {}]
  %s3 = inlined_call_operand.hbm [shape: bf16[256,256], index: 3, kind: input, shape index: {}]
  %s4 = inlined_call_operand.hbm [shape: f32[1,256], index: 4, kind: input, shape index: {}]
  %s5 = inlined_call_operand.hbm [shape: bf16[128,384], index: 5, kind: input, shape index: {}]
  %s6 = inlined_call_operand.hbm [shape: f32[1,384], index: 6, kind: input, shape index: {}]
  %s7 = inlined_call_operand.hbm [shape: bf16[256,256], index: 7, kind: input, shape index: {}]
  %s8 = inlined_call_operand.hbm [shape: f32[1,256], index: 8, kind: input, shape index: {}]
  %s9 = inlined_call_operand.hbm [shape: bf16[128,128], index: 9, kind: input, shape index: {}]
  %s10 = inlined_call_operand.hbm [shape: f32[1,128], index: 10, kind: input, shape index: {}]
  %s11 = inlined_call_operand.hbm [shape: bf16[128,128], index: 11, kind: input, shape index: {}]
  %s12 = inlined_call_operand.hbm [shape: f32[1,128], index: 12, kind: input, shape index: {}]
  %s13 = inlined_call_operand.hbm [shape: bf16[384,128], index: 13, kind: input, shape index: {}]
  %s14 = inlined_call_operand.vmem [shape: f32[1,128], index: 14, kind: input, shape index: {}]
  %s15 = inlined_call_operand.vmem [shape: f32[3,256], index: 15, kind: input, shape index: {}]
  %s16 = inlined_call_operand.vmem [shape: f32[3,256], index: 16, kind: input, shape index: {}]
  %s17 = inlined_call_operand.vmem [shape: f32[1,8,1], index: 17, kind: input, shape index: {}]
  %s18 = inlined_call_operand.vmem [shape: f32[1,8,1], index: 18, kind: input, shape index: {}]
  %s19 = inlined_call_operand.vmem [shape: f32[1,8,1], index: 19, kind: input, shape index: {}]
  %s20 = inlined_call_operand.vmem [shape: f32[1,8,1], index: 20, kind: input, shape index: {}]
  %s21 = inlined_call_operand.vmem [shape: f32[1,2], index: 21, kind: input, shape index: {}]
  %s22 = inlined_call_operand.hbm [shape: f32[4,8,128], index: 22, kind: output, shape index: {0}]
  %s23 = inlined_call_operand.hbm [shape: f32[4,8,256], index: 23, kind: output, shape index: {1}]
  %s24 = inlined_call_operand.hbm [shape: f32[4,8,8,128], index: 24, kind: output, shape index: {2}]
  %25 = xla_tuple %s22, %s23, %s24
  %s26 = sld [smem:[#allocation0]]
  $region189: #{tpu_custom_call.1} parent=0
    _
  %s28 = ssub.s32 1, %s26
  %s29 = scalar_select 0, %s28, %s26
  $region1: #{tpu_custom_call.1} parent=0
    #allocation2 [shape = 'u8[8192]{0}', space=vmem, size = 0x2000, scoped, tag = 'input window, operand 0, single buffered']
    #allocation3 [shape = 's32[2]{0}', space=sflag, size = 0x8, scoped, tag = 'scoped memory for tpu_custom_call.1']
    #allocation4 [shape = 's32[2]{0}', space=sflag, size = 0x8, scoped, tag = 'scoped memory for tpu_custom_call.1']
    #allocation5 [shape = 'u8[32768]{0}', space=vmem, size = 0x8000, scoped, tag = 'input window, operand 1, single buffered']
    #allocation6 [shape = 's32[1]{0}', space=sflag, size = 0x4, scoped, tag = 'scoped memory for tpu_custom_call.1']
    #allocation7 [shape = 'u8[131072]{0}', space=vmem, size = 0x20000, scoped, tag = 'input window, operand 3, single buffered']
    #allocation8 [shape = 'u8[1024]{0}', space=vmem, size = 0x400, scoped, tag = 'input window, operand 4, single buffered']
    #allocation9 [shape = 's32[1]{0}', space=sflag, size = 0x4, scoped, tag = 'scoped memory for tpu_custom_call.1']
    #allocation10 [shape = 'u8[98304]{0}', space=vmem, size = 0x18000, scoped, tag = 'input window, operand 5, single buffered']
    #allocation11 [shape = 'u8[1536]{0}', space=vmem, size = 0x800, scoped, tag = 'input window, operand 6, single buffered']
    #allocation12 [shape = 's32[1]{0}', space=sflag, size = 0x4, scoped, tag = 'scoped memory for tpu_custom_call.1']
    #allocation13 [shape = 'u8[131072]{0}', space=vmem, size = 0x20000, scoped, tag = 'input window, operand 7, single buffered']
    #allocation14 [shape = 'u8[1024]{0}', space=vmem, size = 0x400, scoped, tag = 'input window, operand 8, single buffered']
    #allocation15 [shape = 's32[1]{0}', space=sflag, size = 0x4, scoped, tag = 'scoped memory for tpu_custom_call.1']
    #allocation16 [shape = 'u8[32768]{0}', space=vmem, size = 0x8000, scoped, tag = 'input window, operand 9, single buffered']
    #allocation17 [shape = 'u8[512]{0}', space=vmem, size = 0x400, scoped, tag = 'input window, operand 10, single buffered']
    #allocation18 [shape = 's32[1]{0}', space=sflag, size = 0x4, scoped, tag = 'scoped memory for tpu_custom_call.1']
    #allocation19 [shape = 'u8[32768]{0}', space=vmem, size = 0x8000, scoped, tag = 'input window, operand 11, single buffered']
    #allocation20 [shape = 'u8[512]{0}', space=vmem, size = 0x400, scoped, tag = 'input window, operand 12, single buffered']
    #allocation21 [shape = 's32[1]{0}', space=sflag, size = 0x4, scoped, tag = 'scoped memory for tpu_custom_call.1']
    #allocation22 [shape = 'u8[98304]{0}', space=vmem, size = 0x18000, scoped, tag = 'input window, operand 13, single buffered']
    #allocation23 [shape = 'u8[8192]{0}', space=vmem, size = 0x2000, scoped, tag = 'output window, operand 0']
    #allocation24 [shape = 'u8[16384]{0}', space=vmem, size = 0x4000, scoped, tag = 'output window, operand 1']
    #allocation25 [shape = 's32[2]{0}', space=sflag, size = 0x8, scoped, tag = 'scoped memory for tpu_custom_call.1']
    #allocation26 [shape = 'u8[65536]{0}', space=vmem, size = 0x10000, scoped, tag = 'output window, operand 2']
    %30 = vsyncpa [#allocation3], 0
    %31 = vsyncpa [#allocation6], 0
    %32 = vsyncpa [#allocation9], 0
    %33 = vsyncpa [#allocation12], 0
    %34 = vsyncpa [#allocation15], 0
    %35 = vsyncpa [#allocation18], 0
    %36 = vsyncpa [#allocation21], 0
    %37 = vsyncpa [#allocation4], 0
    %s38 = scalar_lea.sflag [#allocation4], 1
    %39 = vsyncpa %s38, 0
    %40 = vsyncpa [#allocation25], 0
    %s41 = scalar_lea.sflag [#allocation25], 1
    %42 = vsyncpa %s41, 0
    loop: start=0, step=1, limit=6
    $region2: #{tpu_custom_call.1} parent=1 // loop_pre_header
      _
    $region3: #{tpu_custom_call.1} parent=1 // loop_header
      %s44 = sphi 0, %s48
      %p45 = scmp.ge.s32.totalorder %s44, 6
      %s52 = sphi 0, %s52
      %s54 = sphi 0, %s52
      %s55 = sphi 0, %s54
      %s69 = sphi 0, %s55
      %s73 = sphi 0, %s73
      %s75 = sphi 0, %s73
      %s76 = sphi 0, %s75
      %s90 = sphi 0, %s76
      %s96 = sphi 0, %s98
      %s99 = sphi 0, %s96
      %s100 = sphi 0, %s99
      %s116 = sphi 0, %s100
      %s120 = sphi 0, %s120
      %s122 = sphi 0, %s120
      %s123 = sphi 0, %s122
      %s137 = sphi 0, %s123
      %s141 = sphi 0, %s141
      %s143 = sphi 0, %s141
      %s144 = sphi 0, %s143
      %s158 = sphi 0, %s144
      %s162 = sphi 0, %s162
      %s164 = sphi 0, %s162
      %s165 = sphi 0, %s164
      %s179 = sphi 0, %s165
      %s183 = sphi 0, %s183
      %s185 = sphi 0, %s183
      %s186 = sphi 0, %s185
      %s200 = sphi 0, %s186
      %s204 = sphi 0, %s204
      %s206 = sphi 0, %s204
      %s207 = sphi 0, %s206
      %s221 = sphi 0, %s207
      %s225 = sphi 0, %s225
      %s227 = sphi 0, %s225
      %s228 = sphi 0, %s227
      %s242 = sphi 0, %s228
      %s246 = sphi 0, %s246
      %s248 = sphi 0, %s246
      %s249 = sphi 0, %s248
      %s263 = sphi 0, %s249
      %s267 = sphi 0, %s267
      %s269 = sphi 0, %s267
      %s270 = sphi 0, %s269
      %s284 = sphi 0, %s270
      %s288 = sphi 0, %s288
      %s290 = sphi 0, %s288
      %s291 = sphi 0, %s290
      %s305 = sphi 0, %s291
      %s309 = sphi 0, %s309
      %s311 = sphi 0, %s309
      %s312 = sphi 0, %s311
      %s326 = sphi 0, %s312
      %s330 = sphi 0, %s330
      %s332 = sphi 0, %s330
      %s333 = sphi 0, %s332
      %s347 = sphi 0, %s333
      %s351 = sphi 0, %s351
      %s353 = sphi 0, %s351
      %s354 = sphi 0, %s353
      %s368 = sphi 0, %s354
      %s372 = sphi 0, %s372
      %s374 = sphi 0, %s372
      %s375 = sphi 0, %s374
      %s389 = sphi 0, %s375
      %s393 = sphi 0, %s393
      %s395 = sphi 0, %s393
      %s396 = sphi 0, %s395
      %s410 = sphi 0, %s396
      %s414 = sphi 0, %s414
      %s416 = sphi 0, %s414
      %s417 = sphi 0, %s416
      %s431 = sphi 0, %s417
      %s435 = sphi 0, %s435
      %s437 = sphi 0, %s435
      %s438 = sphi 0, %s437
      %s452 = sphi 0, %s438
      %s456 = sphi 0, %s456
      %s458 = sphi 0, %s456
      %s459 = sphi 0, %s458
      %s473 = sphi 0, %s459
      %s477 = sphi 0, %s477
      %s479 = sphi 0, %s477
      %s480 = sphi 0, %s479
      %s494 = sphi 0, %s480
      %s498 = sphi 0, %s498
      %s500 = sphi 0, %s498
      %s501 = sphi 0, %s500
      %s515 = sphi 0, %s501
      %s521 = sphi 0, %s523
      %s524 = sphi 0, %s521
      %s525 = sphi 0, %s524
      %s541 = sphi 0, %s525
      %s547 = sphi 0, %s549
      %s550 = sphi 0, %s547
      %s551 = sphi 0, %s550
      %s567 = sphi 0, %s551
      %s573 = sphi 0, %s575
      %s576 = sphi 0, %s573
      %s577 = sphi 0, %s576
      %s593 = sphi 0, %s577
    $region4: #{tpu_custom_call.1} parent=1 // loop_header_branch
      %47 = sbr.rel (%p45) target = $region8
    $region5: #{tpu_custom_call.1} parent=1 // loop_body
      %s49 = ssub.s32 %s44, 1
      %s50 = ssub.s32 %s44, 2
      %s51 = sadd.s32 %s44, 1
      %s53 = sadd.s32 %s52, 1
      %p56 = scmp.eq.s32.totalorder %s44, 3
      %p57 = scmp.ne.s32.totalorder %s52, %s54
      %p58 = scmp.eq.s32.totalorder %s44, 0
      %p59 = por %p57, %p58
      %p60 = scmp.ne.s32.totalorder %s52, %s54
      %p61 = scmp.eq.s32.totalorder %s49, 3
      %p62 = por %p60, %p61
      %p63 = scmp.ne.s32.totalorder %s54, %s55
      %p64 = scmp.eq.s32.totalorder %s49, 0
      %p65 = por %p63, %p64
      %p66 = scmp.ne.s32.totalorder %s54, %s55
      %p67 = scmp.eq.s32.totalorder %s50, 3
      %p68 = por %p66, %p67
      %p70 = scmp.ne.s32.totalorder %s55, %s69
      %p71 = scmp.eq.s32.totalorder %s50, 0
      %p72 = por %p70, %p71
      %s74 = sadd.s32 %s73, 1
      %p77 = scmp.eq.s32.totalorder %s44, 3
      %p78 = scmp.ne.s32.totalorder %s73, %s75
      %p79 = scmp.eq.s32.totalorder %s44, 0
      %p80 = por %p78, %p79
      %p81 = scmp.ne.s32.totalorder %s73, %s75
      %p82 = scmp.eq.s32.totalorder %s49, 3
      %p83 = por %p81, %p82
      %p84 = scmp.ne.s32.totalorder %s75, %s76
      %p85 = scmp.eq.s32.totalorder %s49, 0
      %p86 = por %p84, %p85
      %p87 = scmp.ne.s32.totalorder %s75, %s76
      %p88 = scmp.eq.s32.totalorder %s50, 3
      %p89 = por %p87, %p88
      %p91 = scmp.ne.s32.totalorder %s76, %s90
      %p92 = scmp.eq.s32.totalorder %s50, 0
      %p93 = por %p91, %p92
      %s94 = ssub.s32 %s44, %s51
      %p95 = scmp.eq.s32.totalorder %s94, 0
      %s97 = sadd.s32 %s96, 1
      %s98 = scalar_select %p95, %s96, %s97
      %p101 = pneg %p95
      %p102 = scmp.eq.s32.totalorder %s44, 3
      %p103 = por %p101, %p102
      %p104 = scmp.ne.s32.totalorder %s96, %s99
      %p105 = scmp.eq.s32.totalorder %s44, 0
      %p106 = por %p104, %p105
      %p107 = scmp.ne.s32.totalorder %s96, %s99
      %p108 = scmp.eq.s32.totalorder %s49, 3
      %p109 = por %p107, %p108
      %p110 = scmp.ne.s32.totalorder %s99, %s100
      %p111 = scmp.eq.s32.totalorder %s49, 0
      %p112 = por %p110, %p111
      %p113 = scmp.ne.s32.totalorder %s99, %s100
      %p114 = scmp.eq.s32.totalorder %s50, 3
      %p115 = por %p113, %p114
      %p117 = scmp.ne.s32.totalorder %s100, %s116
      %p118 = scmp.eq.s32.totalorder %s50, 0
      %p119 = por %p117, %p118
      %s121 = sadd.s32 %s120, 1
      %p124 = scmp.eq.s32.totalorder %s44, 3
      %p125 = scmp.ne.s32.totalorder %s120, %s122
      %p126 = scmp.eq.s32.totalorder %s44, 0
      %p127 = por %p125, %p126
      %p128 = scmp.ne.s32.totalorder %s120, %s122
      %p129 = scmp.eq.s32.totalorder %s49, 3
      %p130 = por %p128, %p129
      %p131 = scmp.ne.s32.totalorder %s122, %s123
      %p132 = scmp.eq.s32.totalorder %s49, 0
      %p133 = por %p131, %p132
      %p134 = scmp.ne.s32.totalorder %s122, %s123
      %p135 = scmp.eq.s32.totalorder %s50, 3
      %p136 = por %p134, %p135
      %p138 = scmp.ne.s32.totalorder %s123, %s137
      %p139 = scmp.eq.s32.totalorder %s50, 0
      %p140 = por %p138, %p139
      %s142 = sadd.s32 %s141, 1
      %p145 = scmp.eq.s32.totalorder %s44, 3
      %p146 = scmp.ne.s32.totalorder %s141, %s143
      %p147 = scmp.eq.s32.totalorder %s44, 0
      %p148 = por %p146, %p147
      %p149 = scmp.ne.s32.totalorder %s141, %s143
      %p150 = scmp.eq.s32.totalorder %s49, 3
      %p151 = por %p149, %p150
      %p152 = scmp.ne.s32.totalorder %s143, %s144
      %p153 = scmp.eq.s32.totalorder %s49, 0
      %p154 = por %p152, %p153
      %p155 = scmp.ne.s32.totalorder %s143, %s144
      %p156 = scmp.eq.s32.totalorder %s50, 3
      %p157 = por %p155, %p156
      %p159 = scmp.ne.s32.totalorder %s144, %s158
      %p160 = scmp.eq.s32.totalorder %s50, 0
      %p161 = por %p159, %p160
      %s163 = sadd.s32 %s162, 1
      %p166 = scmp.eq.s32.totalorder %s44, 3
      %p167 = scmp.ne.s32.totalorder %s162, %s164
      %p168 = scmp.eq.s32.totalorder %s44, 0
      %p169 = por %p167, %p168
      %p170 = scmp.ne.s32.totalorder %s162, %s164
      %p171 = scmp.eq.s32.totalorder %s49, 3
      %p172 = por %p170, %p171
      %p173 = scmp.ne.s32.totalorder %s164, %s165
      %p174 = scmp.eq.s32.totalorder %s49, 0
      %p175 = por %p173, %p174
      %p176 = scmp.ne.s32.totalorder %s164, %s165
      %p177 = scmp.eq.s32.totalorder %s50, 3
      %p178 = por %p176, %p177
      %p180 = scmp.ne.s32.totalorder %s165, %s179
      %p181 = scmp.eq.s32.totalorder %s50, 0
      %p182 = por %p180, %p181
      %s184 = sadd.s32 %s183, 1
      %p187 = scmp.eq.s32.totalorder %s44, 3
      %p188 = scmp.ne.s32.totalorder %s183, %s185
      %p189 = scmp.eq.s32.totalorder %s44, 0
      %p190 = por %p188, %p189
      %p191 = scmp.ne.s32.totalorder %s183, %s185
      %p192 = scmp.eq.s32.totalorder %s49, 3
      %p193 = por %p191, %p192
      %p194 = scmp.ne.s32.totalorder %s185, %s186
      %p195 = scmp.eq.s32.totalorder %s49, 0
      %p196 = por %p194, %p195
      %p197 = scmp.ne.s32.totalorder %s185, %s186
      %p198 = scmp.eq.s32.totalorder %s50, 3
      %p199 = por %p197, %p198
      %p201 = scmp.ne.s32.totalorder %s186, %s200
      %p202 = scmp.eq.s32.totalorder %s50, 0
      %p203 = por %p201, %p202
      %s205 = sadd.s32 %s204, 1
      %p208 = scmp.eq.s32.totalorder %s44, 3
      %p209 = scmp.ne.s32.totalorder %s204, %s206
      %p210 = scmp.eq.s32.totalorder %s44, 0
      %p211 = por %p209, %p210
      %p212 = scmp.ne.s32.totalorder %s204, %s206
      %p213 = scmp.eq.s32.totalorder %s49, 3
      %p214 = por %p212, %p213
      %p215 = scmp.ne.s32.totalorder %s206, %s207
      %p216 = scmp.eq.s32.totalorder %s49, 0
      %p217 = por %p215, %p216
      %p218 = scmp.ne.s32.totalorder %s206, %s207
      %p219 = scmp.eq.s32.totalorder %s50, 3
      %p220 = por %p218, %p219
      %p222 = scmp.ne.s32.totalorder %s207, %s221
      %p223 = scmp.eq.s32.totalorder %s50, 0
      %p224 = por %p222, %p223
      %s226 = sadd.s32 %s225, 1
      %p229 = scmp.eq.s32.totalorder %s44, 3
      %p230 = scmp.ne.s32.totalorder %s225, %s227
      %p231 = scmp.eq.s32.totalorder %s44, 0
      %p232 = por %p230, %p231
      %p233 = scmp.ne.s32.totalorder %s225, %s227
      %p234 = scmp.eq.s32.totalorder %s49, 3
      %p235 = por %p233, %p234
      %p236 = scmp.ne.s32.totalorder %s227, %s228
      %p237 = scmp.eq.s32.totalorder %s49, 0
      %p238 = por %p236, %p237
      %p239 = scmp.ne.s32.totalorder %s227, %s228
      %p240 = scmp.eq.s32.totalorder %s50, 3
      %p241 = por %p239, %p240
      %p243 = scmp.ne.s32.totalorder %s228, %s242
      %p244 = scmp.eq.s32.totalorder %s50, 0
      %p245 = por %p243, %p244
      %s247 = sadd.s32 %s246, 1
      %p250 = scmp.eq.s32.totalorder %s44, 3
      %p251 = scmp.ne.s32.totalorder %s246, %s248
      %p252 = scmp.eq.s32.totalorder %s44, 0
      %p253 = por %p251, %p252
      %p254 = scmp.ne.s32.totalorder %s246, %s248
      %p255 = scmp.eq.s32.totalorder %s49, 3
      %p256 = por %p254, %p255
      %p257 = scmp.ne.s32.totalorder %s248, %s249
      %p258 = scmp.eq.s32.totalorder %s49, 0
      %p259 = por %p257, %p258
      %p260 = scmp.ne.s32.totalorder %s248, %s249
      %p261 = scmp.eq.s32.totalorder %s50, 3
      %p262 = por %p260, %p261
      %p264 = scmp.ne.s32.totalorder %s249, %s263
      %p265 = scmp.eq.s32.totalorder %s50, 0
      %p266 = por %p264, %p265
      %s268 = sadd.s32 %s267, 1
      %p271 = scmp.eq.s32.totalorder %s44, 3
      %p272 = scmp.ne.s32.totalorder %s267, %s269
      %p273 = scmp.eq.s32.totalorder %s44, 0
      %p274 = por %p272, %p273
      %p275 = scmp.ne.s32.totalorder %s267, %s269
      %p276 = scmp.eq.s32.totalorder %s49, 3
      %p277 = por %p275, %p276
      %p278 = scmp.ne.s32.totalorder %s269, %s270
      %p279 = scmp.eq.s32.totalorder %s49, 0
      %p280 = por %p278, %p279
      %p281 = scmp.ne.s32.totalorder %s269, %s270
      %p282 = scmp.eq.s32.totalorder %s50, 3
      %p283 = por %p281, %p282
      %p285 = scmp.ne.s32.totalorder %s270, %s284
      %p286 = scmp.eq.s32.totalorder %s50, 0
      %p287 = por %p285, %p286
      %s289 = sadd.s32 %s288, 1
      %p292 = scmp.eq.s32.totalorder %s44, 3
      %p293 = scmp.ne.s32.totalorder %s288, %s290
      %p294 = scmp.eq.s32.totalorder %s44, 0
      %p295 = por %p293, %p294
      %p296 = scmp.ne.s32.totalorder %s288, %s290
      %p297 = scmp.eq.s32.totalorder %s49, 3
      %p298 = por %p296, %p297
      %p299 = scmp.ne.s32.totalorder %s290, %s291
      %p300 = scmp.eq.s32.totalorder %s49, 0
      %p301 = por %p299, %p300
      %p302 = scmp.ne.s32.totalorder %s290, %s291
      %p303 = scmp.eq.s32.totalorder %s50, 3
      %p304 = por %p302, %p303
      %p306 = scmp.ne.s32.totalorder %s291, %s305
      %p307 = scmp.eq.s32.totalorder %s50, 0
      %p308 = por %p306, %p307
      %s310 = sadd.s32 %s309, 1
      %p313 = scmp.eq.s32.totalorder %s44, 3
      %p314 = scmp.ne.s32.totalorder %s309, %s311
      %p315 = scmp.eq.s32.totalorder %s44, 0
      %p316 = por %p314, %p315
      %p317 = scmp.ne.s32.totalorder %s309, %s311
      %p318 = scmp.eq.s32.totalorder %s49, 3
      %p319 = por %p317, %p318
      %p320 = scmp.ne.s32.totalorder %s311, %s312
      %p321 = scmp.eq.s32.totalorder %s49, 0
      %p322 = por %p320, %p321
      %p323 = scmp.ne.s32.totalorder %s311, %s312
      %p324 = scmp.eq.s32.totalorder %s50, 3
      %p325 = por %p323, %p324
      %p327 = scmp.ne.s32.totalorder %s312, %s326
      %p328 = scmp.eq.s32.totalorder %s50, 0
      %p329 = por %p327, %p328
      %s331 = sadd.s32 %s330, 1
      %p334 = scmp.eq.s32.totalorder %s44, 3
      %p335 = scmp.ne.s32.totalorder %s330, %s332
      %p336 = scmp.eq.s32.totalorder %s44, 0
      %p337 = por %p335, %p336
      %p338 = scmp.ne.s32.totalorder %s330, %s332
      %p339 = scmp.eq.s32.totalorder %s49, 3
      %p340 = por %p338, %p339
      %p341 = scmp.ne.s32.totalorder %s332, %s333
      %p342 = scmp.eq.s32.totalorder %s49, 0
      %p343 = por %p341, %p342
      %p344 = scmp.ne.s32.totalorder %s332, %s333
      %p345 = scmp.eq.s32.totalorder %s50, 3
      %p346 = por %p344, %p345
      %p348 = scmp.ne.s32.totalorder %s333, %s347
      %p349 = scmp.eq.s32.totalorder %s50, 0
      %p350 = por %p348, %p349
      %s352 = sadd.s32 %s351, 1
      %p355 = scmp.eq.s32.totalorder %s44, 3
      %p356 = scmp.ne.s32.totalorder %s351, %s353
      %p357 = scmp.eq.s32.totalorder %s44, 0
      %p358 = por %p356, %p357
      %p359 = scmp.ne.s32.totalorder %s351, %s353
      %p360 = scmp.eq.s32.totalorder %s49, 3
      %p361 = por %p359, %p360
      %p362 = scmp.ne.s32.totalorder %s353, %s354
      %p363 = scmp.eq.s32.totalorder %s49, 0
      %p364 = por %p362, %p363
      %p365 = scmp.ne.s32.totalorder %s353, %s354
      %p366 = scmp.eq.s32.totalorder %s50, 3
      %p367 = por %p365, %p366
      %p369 = scmp.ne.s32.totalorder %s354, %s368
      %p370 = scmp.eq.s32.totalorder %s50, 0
      %p371 = por %p369, %p370
      %s373 = sadd.s32 %s372, 1
      %p376 = scmp.eq.s32.totalorder %s44, 3
      %p377 = scmp.ne.s32.totalorder %s372, %s374
      %p378 = scmp.eq.s32.totalorder %s44, 0
      %p379 = por %p377, %p378
      %p380 = scmp.ne.s32.totalorder %s372, %s374
      %p381 = scmp.eq.s32.totalorder %s49, 3
      %p382 = por %p380, %p381
      %p383 = scmp.ne.s32.totalorder %s374, %s375
      %p384 = scmp.eq.s32.totalorder %s49, 0
      %p385 = por %p383, %p384
      %p386 = scmp.ne.s32.totalorder %s374, %s375
      %p387 = scmp.eq.s32.totalorder %s50, 3
      %p388 = por %p386, %p387
      %p390 = scmp.ne.s32.totalorder %s375, %s389
      %p391 = scmp.eq.s32.totalorder %s50, 0
      %p392 = por %p390, %p391
      %s394 = sadd.s32 %s393, 1
      %p397 = scmp.eq.s32.totalorder %s44, 3
      %p398 = scmp.ne.s32.totalorder %s393, %s395
      %p399 = scmp.eq.s32.totalorder %s44, 0
      %p400 = por %p398, %p399
      %p401 = scmp.ne.s32.totalorder %s393, %s395
      %p402 = scmp.eq.s32.totalorder %s49, 3
      %p403 = por %p401, %p402
      %p404 = scmp.ne.s32.totalorder %s395, %s396
      %p405 = scmp.eq.s32.totalorder %s49, 0
      %p406 = por %p404, %p405
      %p407 = scmp.ne.s32.totalorder %s395, %s396
      %p408 = scmp.eq.s32.totalorder %s50, 3
      %p409 = por %p407, %p408
      %p411 = scmp.ne.s32.totalorder %s396, %s410
      %p412 = scmp.eq.s32.totalorder %s50, 0
      %p413 = por %p411, %p412
      %s415 = sadd.s32 %s414, 1
      %p418 = scmp.eq.s32.totalorder %s44, 3
      %p419 = scmp.ne.s32.totalorder %s414, %s416
      %p420 = scmp.eq.s32.totalorder %s44, 0
      %p421 = por %p419, %p420
      %p422 = scmp.ne.s32.totalorder %s414, %s416
      %p423 = scmp.eq.s32.totalorder %s49, 3
      %p424 = por %p422, %p423
      %p425 = scmp.ne.s32.totalorder %s416, %s417
      %p426 = scmp.eq.s32.totalorder %s49, 0
      %p427 = por %p425, %p426
      %p428 = scmp.ne.s32.totalorder %s416, %s417
      %p429 = scmp.eq.s32.totalorder %s50, 3
      %p430 = por %p428, %p429
      %p432 = scmp.ne.s32.totalorder %s417, %s431
      %p433 = scmp.eq.s32.totalorder %s50, 0
      %p434 = por %p432, %p433
      %s436 = sadd.s32 %s435, 1
      %p439 = scmp.eq.s32.totalorder %s44, 3
      %p440 = scmp.ne.s32.totalorder %s435, %s437
      %p441 = scmp.eq.s32.totalorder %s44, 0
      %p442 = por %p440, %p441
      %p443 = scmp.ne.s32.totalorder %s435, %s437
      %p444 = scmp.eq.s32.totalorder %s49, 3
      %p445 = por %p443, %p444
      %p446 = scmp.ne.s32.totalorder %s437, %s438
      %p447 = scmp.eq.s32.totalorder %s49, 0
      %p448 = por %p446, %p447
      %p449 = scmp.ne.s32.totalorder %s437, %s438
      %p450 = scmp.eq.s32.totalorder %s50, 3
      %p451 = por %p449, %p450
      %p453 = scmp.ne.s32.totalorder %s438, %s452
      %p454 = scmp.eq.s32.totalorder %s50, 0
      %p455 = por %p453, %p454
      %s457 = sadd.s32 %s456, 1
      %p460 = scmp.eq.s32.totalorder %s44, 3
      %p461 = scmp.ne.s32.totalorder %s456, %s458
      %p462 = scmp.eq.s32.totalorder %s44, 0
      %p463 = por %p461, %p462
      %p464 = scmp.ne.s32.totalorder %s456, %s458
      %p465 = scmp.eq.s32.totalorder %s49, 3
      %p466 = por %p464, %p465
      %p467 = scmp.ne.s32.totalorder %s458, %s459
      %p468 = scmp.eq.s32.totalorder %s49, 0
      %p469 = por %p467, %p468
      %p470 = scmp.ne.s32.totalorder %s458, %s459
      %p471 = scmp.eq.s32.totalorder %s50, 3
      %p472 = por %p470, %p471
      %p474 = scmp.ne.s32.totalorder %s459, %s473
      %p475 = scmp.eq.s32.totalorder %s50, 0
      %p476 = por %p474, %p475
      %s478 = sadd.s32 %s477, 1
      %p481 = scmp.eq.s32.totalorder %s44, 3
      %p482 = scmp.ne.s32.totalorder %s477, %s479
      %p483 = scmp.eq.s32.totalorder %s44, 0
      %p484 = por %p482, %p483
      %p485 = scmp.ne.s32.totalorder %s477, %s479
      %p486 = scmp.eq.s32.totalorder %s49, 3
      %p487 = por %p485, %p486
      %p488 = scmp.ne.s32.totalorder %s479, %s480
      %p489 = scmp.eq.s32.totalorder %s49, 0
      %p490 = por %p488, %p489
      %p491 = scmp.ne.s32.totalorder %s479, %s480
      %p492 = scmp.eq.s32.totalorder %s50, 3
      %p493 = por %p491, %p492
      %p495 = scmp.ne.s32.totalorder %s480, %s494
      %p496 = scmp.eq.s32.totalorder %s50, 0
      %p497 = por %p495, %p496
      %s499 = sadd.s32 %s498, 1
      %p502 = scmp.eq.s32.totalorder %s44, 3
      %p503 = scmp.ne.s32.totalorder %s498, %s500
      %p504 = scmp.eq.s32.totalorder %s44, 0
      %p505 = por %p503, %p504
      %p506 = scmp.ne.s32.totalorder %s498, %s500
      %p507 = scmp.eq.s32.totalorder %s49, 3
      %p508 = por %p506, %p507
      %p509 = scmp.ne.s32.totalorder %s500, %s501
      %p510 = scmp.eq.s32.totalorder %s49, 0
      %p511 = por %p509, %p510
      %p512 = scmp.ne.s32.totalorder %s500, %s501
      %p513 = scmp.eq.s32.totalorder %s50, 3
      %p514 = por %p512, %p513
      %p516 = scmp.ne.s32.totalorder %s501, %s515
      %p517 = scmp.eq.s32.totalorder %s50, 0
      %p518 = por %p516, %p517
      %s519 = ssub.s32 %s44, %s51
      %p520 = scmp.eq.s32.totalorder %s519, 0
      %s522 = sadd.s32 %s521, 1
      %s523 = scalar_select %p520, %s521, %s522
      %p526 = pneg %p520
      %p527 = scmp.eq.s32.totalorder %s44, 3
      %p528 = por %p526, %p527
      %p529 = scmp.ne.s32.totalorder %s521, %s524
      %p530 = scmp.eq.s32.totalorder %s44, 0
      %p531 = por %p529, %p530
      %p532 = scmp.ne.s32.totalorder %s521, %s524
      %p533 = scmp.eq.s32.totalorder %s49, 3
      %p534 = por %p532, %p533
      %p535 = scmp.ne.s32.totalorder %s524, %s525
      %p536 = scmp.eq.s32.totalorder %s49, 0
      %p537 = por %p535, %p536
      %p538 = scmp.ne.s32.totalorder %s524, %s525
      %p539 = scmp.eq.s32.totalorder %s50, 3
      %p540 = por %p538, %p539
      %p542 = scmp.ne.s32.totalorder %s525, %s541
      %p543 = scmp.eq.s32.totalorder %s50, 0
      %p544 = por %p542, %p543
      %s545 = ssub.s32 %s44, %s51
      %p546 = scmp.eq.s32.totalorder %s545, 0
      %s548 = sadd.s32 %s547, 1
      %s549 = scalar_select %p546, %s547, %s548
      %p552 = pneg %p546
      %p553 = scmp.eq.s32.totalorder %s44, 3
      %p554 = por %p552, %p553
      %p555 = scmp.ne.s32.totalorder %s547, %s550
      %p556 = scmp.eq.s32.totalorder %s44, 0
      %p557 = por %p555, %p556
      %p558 = scmp.ne.s32.totalorder %s547, %s550
      %p559 = scmp.eq.s32.totalorder %s49, 3
      %p560 = por %p558, %p559
      %p561 = scmp.ne.s32.totalorder %s550, %s551
      %p562 = scmp.eq.s32.totalorder %s49, 0
      %p563 = por %p561, %p562
      %p564 = scmp.ne.s32.totalorder %s550, %s551
      %p565 = scmp.eq.s32.totalorder %s50, 3
      %p566 = por %p564, %p565
      %p568 = scmp.ne.s32.totalorder %s551, %s567
      %p569 = scmp.eq.s32.totalorder %s50, 0
      %p570 = por %p568, %p569
      %s571 = ssub.s32 %s44, %s51
      %p572 = scmp.eq.s32.totalorder %s571, 0
      %s574 = sadd.s32 %s573, 1
      %s575 = scalar_select %p572, %s573, %s574
      %p578 = pneg %p572
      %p579 = scmp.eq.s32.totalorder %s44, 3
      %p580 = por %p578, %p579
      %p581 = scmp.ne.s32.totalorder %s573, %s576
      %p582 = scmp.eq.s32.totalorder %s44, 0
      %p583 = por %p581, %p582
      %p584 = scmp.ne.s32.totalorder %s573, %s576
      %p585 = scmp.eq.s32.totalorder %s49, 3
      %p586 = por %p584, %p585
      %p587 = scmp.ne.s32.totalorder %s576, %s577
      %p588 = scmp.eq.s32.totalorder %s49, 0
      %p589 = por %p587, %p588
      %p590 = scmp.ne.s32.totalorder %s576, %s577
      %p591 = scmp.eq.s32.totalorder %s50, 3
      %p592 = por %p590, %p591
      %p594 = scmp.ne.s32.totalorder %s577, %s593
      %p595 = scmp.eq.s32.totalorder %s50, 0
      %p596 = por %p594, %p595
      %p597 = scmp.le.s32.totalorder 1, %s44
      %p598 = scmp.lt.s32.totalorder %s44, 5
      %p599 = pnand %p597, %p598
      %p600 = pneg %p599
      // Predicated region
      $region9: #{tpu_custom_call.1} parent=5 // pred_check
        _
      $region10: #{tpu_custom_call.1} parent=5 // pred_check_branch
        %602 = sbr.rel (%p599) target = $region12
      $region11: #{tpu_custom_call.1} parent=5 // pred_region
        %s603 = ssub.s32 %s44, 1
        // Predicated region
        $region13: #{tpu_custom_call.1} parent=11 // pred_check
          %p604 = pneg %p65
        $region14: #{tpu_custom_call.1} parent=11 // pred_check_branch
          %606 = sbr.rel (%p604) target = $region16
        $region15: #{tpu_custom_call.1} parent=11 // pred_region
          %608 = vsyncadd [#allocation3], 0
          %s610 = sshll.u32 %s0, 4
          %s611 = int_to_ptr.hbm [resolvable:$true] %s610
          %s612 = sshll.u32 [#allocation2], 4
          %s613 = int_to_ptr.vmem [resolvable:$true] %s612
          %615 = dma.hbm_to_vmem [thread:$0]  %s611, 256, %s613, [#allocation3]
        $region16: #{tpu_custom_call.1} parent=11 // pred_fallthru
          _
        // Predicated region
        $region17: #{tpu_custom_call.1} parent=11 // pred_check
          %p616 = pneg %p86
        $region18: #{tpu_custom_call.1} parent=11 // pred_check_branch
          %618 = sbr.rel (%p616) target = $region20
        $region19: #{tpu_custom_call.1} parent=11 // pred_region
          %620 = vsyncadd [#allocation6], 0
          %s621 = sshll.u32 %s1, 4
          %s622 = int_to_ptr.hbm [resolvable:$true] %s621
          %s623 = sshll.u32 [#allocation5], 4
          %s624 = int_to_ptr.vmem [resolvable:$true] %s623
          %629 = dma.hbm_to_vmem [thread:$0]  %s622, 1024, %s624, [#allocation6], 128, 128, 8
        $region20: #{tpu_custom_call.1} parent=11 // pred_fallthru
          _
        // Predicated region
        $region21: #{tpu_custom_call.1} parent=11 // pred_check
          %p630 = pneg %p133
        $region22: #{tpu_custom_call.1} parent=11 // pred_check_branch
          %632 = sbr.rel (%p630) target = $region24
        $region23: #{tpu_custom_call.1} parent=11 // pred_region
          %634 = vsyncadd [#allocation6], 0
          %s635 = sshll.u32 %s3, 4
          %s636 = int_to_ptr.hbm [resolvable:$true] %s635
          %s637 = sshll.u32 [#allocation7], 4
          %s638 = int_to_ptr.vmem [resolvable:$true] %s637
          %643 = dma.hbm_to_vmem [thread:$0]  %s636, 4096, %s638, [#allocation6], 128, 128, 8
        $region24: #{tpu_custom_call.1} parent=11 // pred_fallthru
          _
        // Predicated region
        $region25: #{tpu_custom_call.1} parent=11 // pred_check
          %p644 = pneg %p154
        $region26: #{tpu_custom_call.1} parent=11 // pred_check_branch
          %646 = sbr.rel (%p644) target = $region28
        $region27: #{tpu_custom_call.1} parent=11 // pred_region
          %648 = vsyncadd [#allocation9], 0
          %s650 = sshll.u32 %s4, 4
          %s651 = int_to_ptr.hbm [resolvable:$true] %s650
          %s652 = sshll.u32 [#allocation8], 4
          %s653 = int_to_ptr.vmem [resolvable:$true] %s652
          %655 = dma.hbm_to_vmem [thread:$0]  %s651, 32, %s653, [#allocation9]
        $region28: #{tpu_custom_call.1} parent=11 // pred_fallthru
          _
        // Predicated region
        $region29: #{tpu_custom_call.1} parent=11 // pred_check
          %p656 = pneg %p175
        $region30: #{tpu_custom_call.1} parent=11 // pred_check_branch
          %658 = sbr.rel (%p656) target = $region32
        $region31: #{tpu_custom_call.1} parent=11 // pred_region
          %660 = vsyncadd [#allocation9], 0
          %s661 = sshll.u32 %s5, 4
          %s662 = int_to_ptr.hbm [resolvable:$true] %s661
          %s663 = sshll.u32 [#allocation10], 4
          %s664 = int_to_ptr.vmem [resolvable:$true] %s663
          %669 = dma.hbm_to_vmem [thread:$0]  %s662, 3072, %s664, [#allocation9], 192, 192, 12
        $region32: #{tpu_custom_call.1} parent=11 // pred_fallthru
          _
        // Predicated region
        $region33: #{tpu_custom_call.1} parent=11 // pred_check
          %p670 = pneg %p196
        $region34: #{tpu_custom_call.1} parent=11 // pred_check_branch
          %672 = sbr.rel (%p670) target = $region36
        $region35: #{tpu_custom_call.1} parent=11 // pred_region
          %674 = vsyncadd [#allocation12], 0
          %s676 = sshll.u32 %s6, 4
          %s677 = int_to_ptr.hbm [resolvable:$true] %s676
          %s678 = sshll.u32 [#allocation11], 4
          %s679 = int_to_ptr.vmem [resolvable:$true] %s678
          %681 = dma.hbm_to_vmem [thread:$0]  %s677, 48, %s679, [#allocation12]
        $region36: #{tpu_custom_call.1} parent=11 // pred_fallthru
          _
        // Predicated region
        $region37: #{tpu_custom_call.1} parent=11 // pred_check
          %p682 = pneg %p217
        $region38: #{tpu_custom_call.1} parent=11 // pred_check_branch
          %684 = sbr.rel (%p682) target = $region40
        $region39: #{tpu_custom_call.1} parent=11 // pred_region
          %686 = vsyncadd [#allocation12], 0
          %s687 = sshll.u32 %s7, 4
          %s688 = int_to_ptr.hbm [resolvable:$true] %s687
          %s689 = sshll.u32 [#allocation13], 4
          %s690 = int_to_ptr.vmem [resolvable:$true] %s689
          %695 = dma.hbm_to_vmem [thread:$0]  %s688, 4096, %s690, [#allocation12], 128, 128, 8
        $region40: #{tpu_custom_call.1} parent=11 // pred_fallthru
          _
        // Predicated region
        $region41: #{tpu_custom_call.1} parent=11 // pred_check
          %p696 = pneg %p238
        $region42: #{tpu_custom_call.1} parent=11 // pred_check_branch
          %698 = sbr.rel (%p696) target = $region44
        $region43: #{tpu_custom_call.1} parent=11 // pred_region
          %700 = vsyncadd [#allocation15], 0
          %s702 = sshll.u32 %s8, 4
          %s703 = int_to_ptr.hbm [resolvable:$true] %s702
          %s704 = sshll.u32 [#allocation14], 4
          %s705 = int_to_ptr.vmem [resolvable:$true] %s704
          %707 = dma.hbm_to_vmem [thread:$0]  %s703, 32, %s705, [#allocation15]
        $region44: #{tpu_custom_call.1} parent=11 // pred_fallthru
          _
        // Predicated region
        $region45: #{tpu_custom_call.1} parent=11 // pred_check
          %p708 = pneg %p259
        $region46: #{tpu_custom_call.1} parent=11 // pred_check_branch
          %710 = sbr.rel (%p708) target = $region48
        $region47: #{tpu_custom_call.1} parent=11 // pred_region
          %712 = vsyncadd [#allocation15], 0
          %s713 = sshll.u32 %s9, 4
          %s714 = int_to_ptr.hbm [resolvable:$true] %s713
          %s715 = sshll.u32 [#allocation16], 4
          %s716 = int_to_ptr.vmem [resolvable:$true] %s715
          %721 = dma.hbm_to_vmem [thread:$0]  %s714, 1024, %s716, [#allocation15], 64, 64, 4
        $region48: #{tpu_custom_call.1} parent=11 // pred_fallthru
          _
        // Predicated region
        $region49: #{tpu_custom_call.1} parent=11 // pred_check
          %p722 = pneg %p280
        $region50: #{tpu_custom_call.1} parent=11 // pred_check_branch
          %724 = sbr.rel (%p722) target = $region52
        $region51: #{tpu_custom_call.1} parent=11 // pred_region
          %726 = vsyncadd [#allocation18], 0
          %s728 = sshll.u32 %s10, 4
          %s729 = int_to_ptr.hbm [resolvable:$true] %s728
          %s730 = sshll.u32 [#allocation17], 4
          %s731 = int_to_ptr.vmem [resolvable:$true] %s730
          %733 = dma.hbm_to_vmem [thread:$0]  %s729, 16, %s731, [#allocation18]
        $region52: #{tpu_custom_call.1} parent=11 // pred_fallthru
          _
        // Predicated region
        $region53: #{tpu_custom_call.1} parent=11 // pred_check
          %p734 = pneg %p301
        $region54: #{tpu_custom_call.1} parent=11 // pred_check_branch
          %736 = sbr.rel (%p734) target = $region56
        $region55: #{tpu_custom_call.1} parent=11 // pred_region
          %738 = vsyncadd [#allocation18], 0
          %s739 = sshll.u32 %s11, 4
          %s740 = int_to_ptr.hbm [resolvable:$true] %s739
          %s741 = sshll.u32 [#allocation19], 4
          %s742 = int_to_ptr.vmem [resolvable:$true] %s741
          %747 = dma.hbm_to_vmem [thread:$0]  %s740, 1024, %s742, [#allocation18], 64, 64, 4
        $region56: #{tpu_custom_call.1} parent=11 // pred_fallthru
          _
        // Predicated region
        $region57: #{tpu_custom_call.1} parent=11 // pred_check
          %p748 = pneg %p322
        $region58: #{tpu_custom_call.1} parent=11 // pred_check_branch
          %750 = sbr.rel (%p748) target = $region60
        $region59: #{tpu_custom_call.1} parent=11 // pred_region
          %752 = vsyncadd [#allocation21], 0
          %s754 = sshll.u32 %s12, 4
          %s755 = int_to_ptr.hbm [resolvable:$true] %s754
          %s756 = sshll.u32 [#allocation20], 4
          %s757 = int_to_ptr.vmem [resolvable:$true] %s756
          %759 = dma.hbm_to_vmem [thread:$0]  %s755, 16, %s757, [#allocation21]
        $region60: #{tpu_custom_call.1} parent=11 // pred_fallthru
          _
        // Predicated region
        $region61: #{tpu_custom_call.1} parent=11 // pred_check
          %p760 = pneg %p343
        $region62: #{tpu_custom_call.1} parent=11 // pred_check_branch
          %762 = sbr.rel (%p760) target = $region64
        $region63: #{tpu_custom_call.1} parent=11 // pred_region
          %764 = vsyncadd [#allocation21], 0
          %s765 = sshll.u32 %s13, 4
          %s766 = int_to_ptr.hbm [resolvable:$true] %s765
          %s767 = sshll.u32 [#allocation22], 4
          %s768 = int_to_ptr.vmem [resolvable:$true] %s767
          %773 = dma.hbm_to_vmem [thread:$0]  %s766, 3072, %s768, [#allocation21], 64, 64, 4
        $region64: #{tpu_custom_call.1} parent=11 // pred_fallthru
          _
        // Predicated region
        $region65: #{tpu_custom_call.1} parent=11 // pred_check
          %p774 = pneg %p364
        $region66: #{tpu_custom_call.1} parent=11 // pred_check_branch
          %776 = sbr.rel (%p774) target = $region68
        $region67: #{tpu_custom_call.1} parent=11 // pred_region
          _
        $region68: #{tpu_custom_call.1} parent=11 // pred_fallthru
          _
        // Predicated region
        $region69: #{tpu_custom_call.1} parent=11 // pred_check
          %p777 = pneg %p385
        $region70: #{tpu_custom_call.1} parent=11 // pred_check_branch
          %779 = sbr.rel (%p777) target = $region72
        $region71: #{tpu_custom_call.1} parent=11 // pred_region
          _
        $region72: #{tpu_custom_call.1} parent=11 // pred_fallthru
          _
        // Predicated region
        $region73: #{tpu_custom_call.1} parent=11 // pred_check
          %p780 = pneg %p406
        $region74: #{tpu_custom_call.1} parent=11 // pred_check_branch
          %782 = sbr.rel (%p780) target = $region76
        $region75: #{tpu_custom_call.1} parent=11 // pred_region
          _
        $region76: #{tpu_custom_call.1} parent=11 // pred_fallthru
          _
        // Predicated region
        $region77: #{tpu_custom_call.1} parent=11 // pred_check
          %p783 = pneg %p427
        $region78: #{tpu_custom_call.1} parent=11 // pred_check_branch
          %785 = sbr.rel (%p783) target = $region80
        $region79: #{tpu_custom_call.1} parent=11 // pred_region
          _
        $region80: #{tpu_custom_call.1} parent=11 // pred_fallthru
          _
        // Predicated region
        $region81: #{tpu_custom_call.1} parent=11 // pred_check
          %p786 = pneg %p448
        $region82: #{tpu_custom_call.1} parent=11 // pred_check_branch
          %788 = sbr.rel (%p786) target = $region84
        $region83: #{tpu_custom_call.1} parent=11 // pred_region
          _
        $region84: #{tpu_custom_call.1} parent=11 // pred_fallthru
          _
        // Predicated region
        $region85: #{tpu_custom_call.1} parent=11 // pred_check
          %p789 = pneg %p469
        $region86: #{tpu_custom_call.1} parent=11 // pred_check_branch
          %791 = sbr.rel (%p789) target = $region88
        $region87: #{tpu_custom_call.1} parent=11 // pred_region
          _
        $region88: #{tpu_custom_call.1} parent=11 // pred_fallthru
          _
        // Predicated region
        $region89: #{tpu_custom_call.1} parent=11 // pred_check
          %p792 = pneg %p490
        $region90: #{tpu_custom_call.1} parent=11 // pred_check_branch
          %794 = sbr.rel (%p792) target = $region92
        $region91: #{tpu_custom_call.1} parent=11 // pred_region
          _
        $region92: #{tpu_custom_call.1} parent=11 // pred_fallthru
          _
        // Predicated region
        $region93: #{tpu_custom_call.1} parent=11 // pred_check
          %p795 = pneg %p511
        $region94: #{tpu_custom_call.1} parent=11 // pred_check_branch
          %797 = sbr.rel (%p795) target = $region96
        $region95: #{tpu_custom_call.1} parent=11 // pred_region
          _
        $region96: #{tpu_custom_call.1} parent=11 // pred_fallthru
          _
      $region12: #{tpu_custom_call.1} parent=5 // pred_fallthru
        _
      %p798 = scmp.lt.s32.totalorder %s44, 4
      // Predicated region
      $region97: #{tpu_custom_call.1} parent=5 // pred_check
        %p799 = pneg %p798
      $region98: #{tpu_custom_call.1} parent=5 // pred_check_branch
        %801 = sbr.rel (%p799) target = $region100
      $region99: #{tpu_custom_call.1} parent=5 // pred_region
        // Predicated region
        $region101: #{tpu_custom_call.1} parent=99 // pred_check
          %p802 = pneg %p106
        $region102: #{tpu_custom_call.1} parent=99 // pred_check_branch
          %804 = sbr.rel (%p802) target = $region104
        $region103: #{tpu_custom_call.1} parent=99 // pred_region
          %p805 = scmp.lt.s32.totalorder %s44, 3
          %s806 = scalar_select %p805, %s44, 3
          %s807 = smul.addr %s806, 8
          %s808 = scalar_lea.vmem %s2, %s807
        $region104: #{tpu_custom_call.1} parent=99 // pred_fallthru
          _
      $region100: #{tpu_custom_call.1} parent=5 // pred_fallthru
        _
      %p809 = scmp.le.s32.totalorder 1, %s44
      %p810 = scmp.lt.s32.totalorder %s44, 5
      %p811 = pnand %p809, %p810
      %p812 = pneg %p811
      // Predicated region
      $region105: #{tpu_custom_call.1} parent=5 // pred_check
        _
      $region106: #{tpu_custom_call.1} parent=5 // pred_check_branch
        %814 = sbr.rel (%p811) target = $region108
      $region107: #{tpu_custom_call.1} parent=5 // pred_region
        %s815 = ssub.s32 %s44, 1
        // Predicated region
        $region109: #{tpu_custom_call.1} parent=107 // pred_check
          %p816 = pneg %p65
        $region110: #{tpu_custom_call.1} parent=107 // pred_check_branch
          %818 = sbr.rel (%p816) target = $region112
        $region111: #{tpu_custom_call.1} parent=107 // pred_region
          %820 = dma.done [#allocation3], 256
        $region112: #{tpu_custom_call.1} parent=107 // pred_fallthru
          _
        // Predicated region
        $region113: #{tpu_custom_call.1} parent=107 // pred_check
          %p821 = pneg %p86
        $region114: #{tpu_custom_call.1} parent=107 // pred_check_branch
          %823 = sbr.rel (%p821) target = $region116
        $region115: #{tpu_custom_call.1} parent=107 // pred_region
          %825 = dma.done [#allocation6], 1024
        $region116: #{tpu_custom_call.1} parent=107 // pred_fallthru
          _
        // Predicated region
        $region117: #{tpu_custom_call.1} parent=107 // pred_check
          %p826 = pneg %p133
        $region118: #{tpu_custom_call.1} parent=107 // pred_check_branch
          %828 = sbr.rel (%p826) target = $region120
        $region119: #{tpu_custom_call.1} parent=107 // pred_region
          %830 = dma.done [#allocation6], 4096
        $region120: #{tpu_custom_call.1} parent=107 // pred_fallthru
          _
        // Predicated region
        $region121: #{tpu_custom_call.1} parent=107 // pred_check
          %p831 = pneg %p154
        $region122: #{tpu_custom_call.1} parent=107 // pred_check_branch
          %833 = sbr.rel (%p831) target = $region124
        $region123: #{tpu_custom_call.1} parent=107 // pred_region
          %835 = dma.done [#allocation9], 32
        $region124: #{tpu_custom_call.1} parent=107 // pred_fallthru
          _
        // Predicated region
        $region125: #{tpu_custom_call.1} parent=107 // pred_check
          %p836 = pneg %p175
        $region126: #{tpu_custom_call.1} parent=107 // pred_check_branch
          %838 = sbr.rel (%p836) target = $region128
        $region127: #{tpu_custom_call.1} parent=107 // pred_region
          %840 = dma.done [#allocation9], 3072
        $region128: #{tpu_custom_call.1} parent=107 // pred_fallthru
          _
        // Predicated region
        $region129: #{tpu_custom_call.1} parent=107 // pred_check
          %p841 = pneg %p196
        $region130: #{tpu_custom_call.1} parent=107 // pred_check_branch
          %843 = sbr.rel (%p841) target = $region132
        $region131: #{tpu_custom_call.1} parent=107 // pred_region
          %845 = dma.done [#allocation12], 48
        $region132: #{tpu_custom_call.1} parent=107 // pred_fallthru
          _
        // Predicated region
        $region133: #{tpu_custom_call.1} parent=107 // pred_check
          %p846 = pneg %p217
        $region134: #{tpu_custom_call.1} parent=107 // pred_check_branch
          %848 = sbr.rel (%p846) target = $region136
        $region135: #{tpu_custom_call.1} parent=107 // pred_region
          %850 = dma.done [#allocation12], 4096
        $region136: #{tpu_custom_call.1} parent=107 // pred_fallthru
          _
        // Predicated region
        $region137: #{tpu_custom_call.1} parent=107 // pred_check
          %p851 = pneg %p238
        $region138: #{tpu_custom_call.1} parent=107 // pred_check_branch
          %853 = sbr.rel (%p851) target = $region140
        $region139: #{tpu_custom_call.1} parent=107 // pred_region
          %855 = dma.done [#allocation15], 32
        $region140: #{tpu_custom_call.1} parent=107 // pred_fallthru
          _
        // Predicated region
        $region141: #{tpu_custom_call.1} parent=107 // pred_check
          %p856 = pneg %p259
        $region142: #{tpu_custom_call.1} parent=107 // pred_check_branch
          %858 = sbr.rel (%p856) target = $region144
        $region143: #{tpu_custom_call.1} parent=107 // pred_region
          %860 = dma.done [#allocation15], 1024
        $region144: #{tpu_custom_call.1} parent=107 // pred_fallthru
          _
        // Predicated region
        $region145: #{tpu_custom_call.1} parent=107 // pred_check
          %p861 = pneg %p280
        $region146: #{tpu_custom_call.1} parent=107 // pred_check_branch
          %863 = sbr.rel (%p861) target = $region148
        $region147: #{tpu_custom_call.1} parent=107 // pred_region
          %865 = dma.done [#allocation18], 16
        $region148: #{tpu_custom_call.1} parent=107 // pred_fallthru
          _
        // Predicated region
        $region149: #{tpu_custom_call.1} parent=107 // pred_check
          %p866 = pneg %p301
        $region150: #{tpu_custom_call.1} parent=107 // pred_check_branch
          %868 = sbr.rel (%p866) target = $region152
        $region151: #{tpu_custom_call.1} parent=107 // pred_region
          %870 = dma.done [#allocation18], 1024
        $region152: #{tpu_custom_call.1} parent=107 // pred_fallthru
          _
        // Predicated region
        $region153: #{tpu_custom_call.1} parent=107 // pred_check
          %p871 = pneg %p322
        $region154: #{tpu_custom_call.1} parent=107 // pred_check_branch
          %873 = sbr.rel (%p871) target = $region156
        $region155: #{tpu_custom_call.1} parent=107 // pred_region
          %875 = dma.done [#allocation21], 16
        $region156: #{tpu_custom_call.1} parent=107 // pred_fallthru
          _
        // Predicated region
        $region157: #{tpu_custom_call.1} parent=107 // pred_check
          %p876 = pneg %p343
        $region158: #{tpu_custom_call.1} parent=107 // pred_check_branch
          %878 = sbr.rel (%p876) target = $region160
        $region159: #{tpu_custom_call.1} parent=107 // pred_region
          %880 = dma.done [#allocation21], 3072
        $region160: #{tpu_custom_call.1} parent=107 // pred_fallthru
          _
        %p881 = pneg %p65
        %p882 = pneg %p62
        %p883 = pneg %p86
        %p884 = pneg %p83
        %p885 = scmp.lt.s32.totalorder %s49, 3
        %s886 = scalar_select %p885, %s49, 3
        %s887 = smul.addr %s886, 8
        %s888 = scalar_lea.vmem %s2, %s887
        %p889 = pneg %p112
        %p890 = pneg %p109
        %p891 = pneg %p133
        %p892 = pneg %p130
        %p893 = pneg %p154
        %p894 = pneg %p151
        %p895 = pneg %p175
        %p896 = pneg %p172
        %p897 = pneg %p196
        %p898 = pneg %p193
        %p899 = pneg %p217
        %p900 = pneg %p214
        %p901 = pneg %p238
        %p902 = pneg %p235
        %p903 = pneg %p259
        %p904 = pneg %p256
        %p905 = pneg %p280
        %p906 = pneg %p277
        %p907 = pneg %p301
        %p908 = pneg %p298
        %p909 = pneg %p322
        %p910 = pneg %p319
        %p911 = pneg %p343
        %p912 = pneg %p340
        %p913 = pneg %p364
        %p914 = pneg %p361
        %p915 = pneg %p385
        %p916 = pneg %p382
        %p917 = pneg %p406
        %p918 = pneg %p403
        %p919 = pneg %p427
        %p920 = pneg %p424
        %p921 = pneg %p448
        %p922 = pneg %p445
        %p923 = pneg %p469
        %p924 = pneg %p466
        %p925 = pneg %p490
        %p926 = pneg %p487
        %p927 = pneg %p511
        %p928 = pneg %p508
        %p929 = pneg %p537
        %p930 = pneg %p534
        %s931 = sand.u32 %s524, 1
        %s932 = scalar_lea.sflag [#allocation4], %s931
        %s933 = sand.u32 %s524, 1
        %s934 = smul.addr %s933, 8
        %s935 = scalar_lea.vmem [#allocation23], %s934
        %p936 = pneg %p563
        %p937 = pneg %p560
        %s938 = sand.u32 %s49, 1
        %s939 = scalar_lea.sflag [#allocation25], %s938
        %s940 = sand.u32 %s550, 1
        %s941 = smul.addr %s940, 16
        %s942 = scalar_lea.vmem [#allocation24], %s941
        %p943 = pneg %p589
        %p944 = pneg %p586
        %s945 = sand.u32 %s49, 1
        %s946 = scalar_lea.sflag [#allocation25], %s945
        %s947 = sand.u32 %s576, 1
        %s948 = smul.addr %s947, 64
        %s949 = scalar_lea.vmem [#allocation26], %s948
        %p950 = scmp.lt.s32.totalorder %s49, 3
        %s951 = scalar_select %p950, %s49, 3
        %s952 = smul.addr %s951, 8
        %s953 = scalar_lea.vmem %s2, %s952
        %v954 = vld [vmem:[#allocation2] sm:$0xff]
        %v955 = vld [vmem:[#allocation2 + $0x8] sm:$0xff]
        %v956 = vld [vmem:[%s953] sm:$0xff]
        %v957 = vld [vmem:[#allocation5] sm:$0xff]
        %v958 = vld [vmem:[#allocation5 + $0x8] sm:$0xff]
        %v959 = vld [vmem:[#allocation5 + $0x10] sm:$0xff]
        %v960 = vld [vmem:[#allocation5 + $0x18] sm:$0xff]
        %v961 = vld [vmem:[#allocation5 + $0x20] sm:$0xff]
        %v962 = vld [vmem:[#allocation5 + $0x28] sm:$0xff]
        %v963 = vld [vmem:[#allocation5 + $0x30] sm:$0xff]
        %v964 = vld [vmem:[#allocation5 + $0x38] sm:$0xff]
        %v965 = vpack.c.bf16 %v956, %v956
        %v966 = vld [vmem:[#allocation10] sm:$0xff]
        %v967 = vld [vmem:[#allocation10 + $0x8] sm:$0xf]
        %v968 = vld [vmem:[#allocation10 + $0xc] sm:$0xff]
        %v969 = vld [vmem:[#allocation10 + $0x14] sm:$0xf]
        %v970 = vld [vmem:[#allocation10 + $0x18] sm:$0xff]
        %v971 = vld [vmem:[#allocation10 + $0x20] sm:$0xf]
        %v972 = vld [vmem:[#allocation10 + $0x24] sm:$0xff]
        %v973 = vld [vmem:[#allocation10 + $0x2c] sm:$0xf]
        %v974 = vld [vmem:[#allocation10 + $0x30] sm:$0xff]
        %v975 = vld [vmem:[#allocation10 + $0x38] sm:$0xf]
        %v976 = vld [vmem:[#allocation10 + $0x3c] sm:$0xff]
        %v977 = vld [vmem:[#allocation10 + $0x44] sm:$0xf]
        %v978 = vld [vmem:[#allocation10 + $0x48] sm:$0xff]
        %v979 = vld [vmem:[#allocation10 + $0x50] sm:$0xf]
        %v980 = vld [vmem:[#allocation10 + $0x54] sm:$0xff]
        %v981 = vld [vmem:[#allocation10 + $0x5c] sm:$0xf]
        %v982 = vld [vmem:[#allocation10 + $0x60] sm:$0xff]
        %v983 = vld [vmem:[#allocation10 + $0x68] sm:$0xf]
        %v984 = vld [vmem:[#allocation10 + $0x6c] sm:$0xff]
        %v985 = vld [vmem:[#allocation10 + $0x74] sm:$0xf]
        %v986 = vld [vmem:[#allocation10 + $0x78] sm:$0xff]
        %v987 = vld [vmem:[#allocation10 + $0x80] sm:$0xf]
        %v988 = vld [vmem:[#allocation10 + $0x84] sm:$0xff]
        %v989 = vld [vmem:[#allocation10 + $0x8c] sm:$0xf]
        %v990 = vld [vmem:[#allocation10 + $0x90] sm:$0xff]
        %v991 = vld [vmem:[#allocation10 + $0x98] sm:$0xf]
        %v992 = vld [vmem:[#allocation10 + $0x9c] sm:$0xff]
        %v993 = vld [vmem:[#allocation10 + $0xa4] sm:$0xf]
        %v994 = vld [vmem:[#allocation10 + $0xa8] sm:$0xff]
        %v995 = vld [vmem:[#allocation10 + $0xb0] sm:$0xf]
        %v996 = vld [vmem:[#allocation10 + $0xb4] sm:$0xff]
        %v997 = vld [vmem:[#allocation10 + $0xbc] sm:$0xf]
        %v998 = vld [vmem:[#allocation11] sm:$0x7]
        %v1000 = vperm.slane %v998, 0
        %v1001 = vperm.slane %v998, 1
        %v1002 = vperm.slane %v998, 2
        %v1038 = vunpack.c.l.b16 %v966
        %v1039 = vunpack.c.h.b16 %v966
        %v1040 = vunpack.c.l.b16 %v967
        %v1041 = vunpack.c.l.b16 %v968
        %v1042 = vunpack.c.h.b16 %v968
        %v1043 = vunpack.c.l.b16 %v969
        %v1044 = vunpack.c.l.b16 %v970
        %v1045 = vunpack.c.h.b16 %v970
        %v1046 = vunpack.c.l.b16 %v971
        %v1047 = vunpack.c.l.b16 %v972
        %v1048 = vunpack.c.h.b16 %v972
        %v1049 = vunpack.c.l.b16 %v973
        %v1050 = vunpack.c.l.b16 %v974
        %v1051 = vunpack.c.h.b16 %v974
        %v1052 = vunpack.c.l.b16 %v975
        %v1053 = vunpack.c.l.b16 %v976
        %v1054 = vunpack.c.h.b16 %v976
        %v1055 = vunpack.c.l.b16 %v977
        %v1056 = vunpack.c.l.b16 %v978
        %v1057 = vunpack.c.h.b16 %v978
        %v1058 = vunpack.c.l.b16 %v979
        %v1059 = vunpack.c.l.b16 %v980
        %v1060 = vunpack.c.h.b16 %v980
        %v1061 = vunpack.c.l.b16 %v981
        %v1062 = vunpack.c.l.b16 %v982
        %v1063 = vunpack.c.h.b16 %v982
        %v1064 = vunpack.c.l.b16 %v983
        %v1065 = vunpack.c.l.b16 %v984
        %v1066 = vunpack.c.h.b16 %v984
        %v1067 = vunpack.c.l.b16 %v985
        %v1068 = vunpack.c.l.b16 %v986
        %v1069 = vunpack.c.h.b16 %v986
        %v1070 = vunpack.c.l.b16 %v987
        %v1071 = vunpack.c.l.b16 %v988
        %v1072 = vunpack.c.h.b16 %v988
        %v1073 = vunpack.c.l.b16 %v989
        %v1074 = vunpack.c.l.b16 %v990
        %v1075 = vunpack.c.h.b16 %v990
        %v1076 = vunpack.c.l.b16 %v991
        %v1077 = vunpack.c.l.b16 %v992
        %v1078 = vunpack.c.h.b16 %v992
        %v1079 = vunpack.c.l.b16 %v993
        %v1080 = vunpack.c.l.b16 %v994
        %v1081 = vunpack.c.h.b16 %v994
        %v1082 = vunpack.c.l.b16 %v995
        %v1083 = vunpack.c.l.b16 %v996
        %v1084 = vunpack.c.h.b16 %v996
        %v1085 = vunpack.c.l.b16 %v997
        %v1086 = vpack.c.b16 %v1041, %v1038
        %v1087 = vpack.c.b16 %v1042, %v1039
        %v1088 = vpack.c.b16 %v1043, %v1040
        %v1089 = vpack.c.b16 %v1047, %v1044
        %v1090 = vpack.c.b16 %v1048, %v1045
        %v1091 = vpack.c.b16 %v1049, %v1046
        %v1092 = vpack.c.b16 %v1053, %v1050
        %v1093 = vpack.c.b16 %v1054, %v1051
        %v1094 = vpack.c.b16 %v1055, %v1052
        %v1095 = vpack.c.b16 %v1059, %v1056
        %v1096 = vpack.c.b16 %v1060, %v1057
        %v1097 = vpack.c.b16 %v1061, %v1058
        %v1098 = vpack.c.b16 %v1065, %v1062
        %v1099 = vpack.c.b16 %v1066, %v1063
        %v1100 = vpack.c.b16 %v1067, %v1064
        %v1101 = vpack.c.b16 %v1071, %v1068
        %v1102 = vpack.c.b16 %v1072, %v1069
        %v1103 = vpack.c.b16 %v1073, %v1070
        %v1104 = vpack.c.b16 %v1077, %v1074
        %v1105 = vpack.c.b16 %v1078, %v1075
        %v1106 = vpack.c.b16 %v1079, %v1076
        %v1107 = vpack.c.b16 %v1083, %v1080
        %v1108 = vpack.c.b16 %v1084, %v1081
        %v1109 = vpack.c.b16 %v1085, %v1082
        %1134 = vmatpush.bf16.msra.mxu0 %v1107
        %1135 = vmatpush.bf16.msra.mxu0 %v1104
        %1136 = vmatpush.bf16.msra.mxu0 %v1101
        %1137 = vmatpush.bf16.msra.mxu0 %v1098
        %1138 = vmatpush.bf16.msra.mxu0 %v1095
        %1139 = vmatpush.bf16.msra.mxu0 %v1092
        %1140 = vmatpush.bf16.msra.mxu0 %v1089
        %1141 = vmatpush.bf16.msra.mxu0 %v1086
        %1142 = vmatmul.bf16.gmra.mxu0 %v965
        %v1143 = vpop.f32.mrf.mxu0
        %v1144 = vadd.f32 %v1000, %v1143
        %v1145 = vpop.f32.mrf.mxu0
        %1146 = vdwg.mxu0
        %1147 = vmatpush.bf16.msra.mxu0 %v1108
        %1148 = vmatpush.bf16.msra.mxu0 %v1105
        %1149 = vmatpush.bf16.msra.mxu0 %v1102
        %1150 = vmatpush.bf16.msra.mxu0 %v1099
        %1151 = vmatpush.bf16.msra.mxu0 %v1096
        %1152 = vmatpush.bf16.msra.mxu0 %v1093
        %1153 = vmatpush.bf16.msra.mxu0 %v1090
        %1154 = vmatpush.bf16.msra.mxu0 %v1087
        %1155 = vmatmul.bf16.gmra.mxu0 %v965
        %v1156 = vpop.f32.mrf.mxu0
        %v1157 = vadd.f32 %v1001, %v1156
        %v1158 = vpop.f32.mrf.mxu0
        %1159 = vdwg.mxu0
        %1160 = vmatpush.bf16.msra.mxu0 %v1109
        %1161 = vmatpush.bf16.msra.mxu0 %v1106
        %1162 = vmatpush.bf16.msra.mxu0 %v1103
        %1163 = vmatpush.bf16.msra.mxu0 %v1100
        %1164 = vmatpush.bf16.msra.mxu0 %v1097
        %1165 = vmatpush.bf16.msra.mxu0 %v1094
        %1166 = vmatpush.bf16.msra.mxu0 %v1091
        %1167 = vmatpush.bf16.msra.mxu0 %v1088
        %1168 = vmatmul.bf16.gmra.mxu0 %v965
        %v1169 = vpop.f32.mrf.mxu0
        %v1170 = vadd.f32 %v1002, %v1169
        %v1171 = vpop.f32.mrf.mxu0
        %1172 = vdwg.mxu0
        %v1173 = vpack.c.bf16 %v954, %v954
        %v1174 = vpack.c.bf16 %v955, %v955
        %v1175 = vld [vmem:[#allocation7] sm:$0xff]
        %v1176 = vld [vmem:[#allocation7 + $0x8] sm:$0xff]
        %v1177 = vld [vmem:[#allocation7 + $0x10] sm:$0xff]
        %v1178 = vld [vmem:[#allocation7 + $0x18] sm:$0xff]
        %v1179 = vld [vmem:[#allocation7 + $0x20] sm:$0xff]
        %v1180 = vld [vmem:[#allocation7 + $0x28] sm:$0xff]
        %v1181 = vld [vmem:[#allocation7 + $0x30] sm:$0xff]
        %v1182 = vld [vmem:[#allocation7 + $0x38] sm:$0xff]
        %v1183 = vld [vmem:[#allocation7 + $0x40] sm:$0xff]
        %v1184 = vld [vmem:[#allocation7 + $0x48] sm:$0xff]
        %v1185 = vld [vmem:[#allocation7 + $0x50] sm:$0xff]
        %v1186 = vld [vmem:[#allocation7 + $0x58] sm:$0xff]
        %v1187 = vld [vmem:[#allocation7 + $0x60] sm:$0xff]
        %v1188 = vld [vmem:[#allocation7 + $0x68] sm:$0xff]
        %v1189 = vld [vmem:[#allocation7 + $0x70] sm:$0xff]
        %v1190 = vld [vmem:[#allocation7 + $0x78] sm:$0xff]
        %v1191 = vld [vmem:[#allocation7 + $0x80] sm:$0xff]
        %v1192 = vld [vmem:[#allocation7 + $0x88] sm:$0xff]
        %v1193 = vld [vmem:[#allocation7 + $0x90] sm:$0xff]
        %v1194 = vld [vmem:[#allocation7 + $0x98] sm:$0xff]
        %v1195 = vld [vmem:[#allocation7 + $0xa0] sm:$0xff]
        %v1196 = vld [vmem:[#allocation7 + $0xa8] sm:$0xff]
        %v1197 = vld [vmem:[#allocation7 + $0xb0] sm:$0xff]
        %v1198 = vld [vmem:[#allocation7 + $0xb8] sm:$0xff]
        %v1199 = vld [vmem:[#allocation7 + $0xc0] sm:$0xff]
        %v1200 = vld [vmem:[#allocation7 + $0xc8] sm:$0xff]
        %v1201 = vld [vmem:[#allocation7 + $0xd0] sm:$0xff]
        %v1202 = vld [vmem:[#allocation7 + $0xd8] sm:$0xff]
        %v1203 = vld [vmem:[#allocation7 + $0xe0] sm:$0xff]
        %v1204 = vld [vmem:[#allocation7 + $0xe8] sm:$0xff]
        %v1205 = vld [vmem:[#allocation7 + $0xf0] sm:$0xff]
        %v1206 = vld [vmem:[#allocation7 + $0xf8] sm:$0xff]
        %v1207 = vld [vmem:[#allocation8] sm:$0x3]
        %v1209 = vperm.slane %v1207, 0
        %v1210 = vperm.slane %v1207, 1
        %v1245 = vunpack.c.l.b16 %v1175
        %v1246 = vunpack.c.h.b16 %v1175
        %v1247 = vunpack.c.l.b16 %v1176
        %v1248 = vunpack.c.h.b16 %v1176
        %v1249 = vunpack.c.l.b16 %v1177
        %v1250 = vunpack.c.h.b16 %v1177
        %v1251 = vunpack.c.l.b16 %v1178
        %v1252 = vunpack.c.h.b16 %v1178
        %v1253 = vunpack.c.l.b16 %v1179
        %v1254 = vunpack.c.h.b16 %v1179
        %v1255 = vunpack.c.l.b16 %v1180
        %v1256 = vunpack.c.h.b16 %v1180
        %v1257 = vunpack.c.l.b16 %v1181
        %v1258 = vunpack.c.h.b16 %v1181
        %v1259 = vunpack.c.l.b16 %v1182
        %v1260 = vunpack.c.h.b16 %v1182
        %v1261 = vunpack.c.l.b16 %v1183
        %v1262 = vunpack.c.h.b16 %v1183
        %v1263 = vunpack.c.l.b16 %v1184
        %v1264 = vunpack.c.h.b16 %v1184
        %v1265 = vunpack.c.l.b16 %v1185
        %v1266 = vunpack.c.h.b16 %v1185
        %v1267 = vunpack.c.l.b16 %v1186
        %v1268 = vunpack.c.h.b16 %v1186
        %v1269 = vunpack.c.l.b16 %v1187
        %v1270 = vunpack.c.h.b16 %v1187
        %v1271 = vunpack.c.l.b16 %v1188
        %v1272 = vunpack.c.h.b16 %v1188
        %v1273 = vunpack.c.l.b16 %v1189
        %v1274 = vunpack.c.h.b16 %v1189
        %v1275 = vunpack.c.l.b16 %v1190
        %v1276 = vunpack.c.h.b16 %v1190
        %v1277 = vunpack.c.l.b16 %v1191
        %v1278 = vunpack.c.h.b16 %v1191
        %v1279 = vunpack.c.l.b16 %v1192
        %v1280 = vunpack.c.h.b16 %v1192
        %v1281 = vunpack.c.l.b16 %v1193
        %v1282 = vunpack.c.h.b16 %v1193
        %v1283 = vunpack.c.l.b16 %v1194
        %v1284 = vunpack.c.h.b16 %v1194
        %v1285 = vunpack.c.l.b16 %v1195
        %v1286 = vunpack.c.h.b16 %v1195
        %v1287 = vunpack.c.l.b16 %v1196
        %v1288 = vunpack.c.h.b16 %v1196
        %v1289 = vunpack.c.l.b16 %v1197
        %v1290 = vunpack.c.h.b16 %v1197
        %v1291 = vunpack.c.l.b16 %v1198
        %v1292 = vunpack.c.h.b16 %v1198
        %v1293 = vunpack.c.l.b16 %v1199
        %v1294 = vunpack.c.h.b16 %v1199
        %v1295 = vunpack.c.l.b16 %v1200
        %v1296 = vunpack.c.h.b16 %v1200
        %v1297 = vunpack.c.l.b16 %v1201
        %v1298 = vunpack.c.h.b16 %v1201
        %v1299 = vunpack.c.l.b16 %v1202
        %v1300 = vunpack.c.h.b16 %v1202
        %v1301 = vunpack.c.l.b16 %v1203
        %v1302 = vunpack.c.h.b16 %v1203
        %v1303 = vunpack.c.l.b16 %v1204
        %v1304 = vunpack.c.h.b16 %v1204
        %v1305 = vunpack.c.l.b16 %v1205
        %v1306 = vunpack.c.h.b16 %v1205
        %v1307 = vunpack.c.l.b16 %v1206
        %v1308 = vunpack.c.h.b16 %v1206
        %v1309 = vpack.c.b16 %v1247, %v1245
        %v1310 = vpack.c.b16 %v1248, %v1246
        %v1311 = vpack.c.b16 %v1251, %v1249
        %v1312 = vpack.c.b16 %v1252, %v1250
        %v1313 = vpack.c.b16 %v1255, %v1253
        %v1314 = vpack.c.b16 %v1256, %v1254
        %v1315 = vpack.c.b16 %v1259, %v1257
        %v1316 = vpack.c.b16 %v1260, %v1258
        %v1317 = vpack.c.b16 %v1263, %v1261
        %v1318 = vpack.c.b16 %v1264, %v1262
        %v1319 = vpack.c.b16 %v1267, %v1265
        %v1320 = vpack.c.b16 %v1268, %v1266
        %v1321 = vpack.c.b16 %v1271, %v1269
        %v1322 = vpack.c.b16 %v1272, %v1270
        %v1323 = vpack.c.b16 %v1275, %v1273
        %v1324 = vpack.c.b16 %v1276, %v1274
        %v1325 = vpack.c.b16 %v1279, %v1277
        %v1326 = vpack.c.b16 %v1280, %v1278
        %v1327 = vpack.c.b16 %v1283, %v1281
        %v1328 = vpack.c.b16 %v1284, %v1282
        %v1329 = vpack.c.b16 %v1287, %v1285
        %v1330 = vpack.c.b16 %v1288, %v1286
        %v1331 = vpack.c.b16 %v1291, %v1289
        %v1332 = vpack.c.b16 %v1292, %v1290
        %v1333 = vpack.c.b16 %v1295, %v1293
        %v1334 = vpack.c.b16 %v1296, %v1294
        %v1335 = vpack.c.b16 %v1299, %v1297
        %v1336 = vpack.c.b16 %v1300, %v1298
        %v1337 = vpack.c.b16 %v1303, %v1301
        %v1338 = vpack.c.b16 %v1304, %v1302
        %v1339 = vpack.c.b16 %v1307, %v1305
        %v1340 = vpack.c.b16 %v1308, %v1306
        %1373 = vmatpush.bf16.msra.mxu0 %v1323
        %1374 = vmatpush.bf16.msra.mxu0 %v1321
        %1375 = vmatpush.bf16.msra.mxu0 %v1319
        %1376 = vmatpush.bf16.msra.mxu0 %v1317
        %1377 = vmatpush.bf16.msra.mxu0 %v1315
        %1378 = vmatpush.bf16.msra.mxu0 %v1313
        %1379 = vmatpush.bf16.msra.mxu0 %v1311
        %1380 = vmatpush.bf16.msra.mxu0 %v1309
        %1381 = vmatmul.bf16.gmra.mxu0 %v1173
        %v1382 = vpop.f32.mrf.mxu0
        %v1383 = vadd.f32 %v1209, %v1382
        %v1384 = vpop.f32.mrf.mxu0
        %1385 = vdwg.mxu0
        %1386 = vmatpush.bf16.msra.mxu0 %v1339
        %1387 = vmatpush.bf16.msra.mxu0 %v1337
        %1388 = vmatpush.bf16.msra.mxu0 %v1335
        %1389 = vmatpush.bf16.msra.mxu0 %v1333
        %1390 = vmatpush.bf16.msra.mxu0 %v1331
        %1391 = vmatpush.bf16.msra.mxu0 %v1329
        %1392 = vmatpush.bf16.msra.mxu0 %v1327
        %1393 = vmatpush.bf16.msra.mxu0 %v1325
        %1394 = vmatmul.bf16.gmra.mxu0 %v1174
        %v1395 = vpop.f32.mrf.mxu0
        %v1396 = vadd.f32 %v1383, %v1395
        %v1397 = vpop.f32.mrf.mxu0
        %1398 = vdwg.mxu0
        %1399 = vmatpush.bf16.msra.mxu0 %v1324
        %1400 = vmatpush.bf16.msra.mxu0 %v1322
        %1401 = vmatpush.bf16.msra.mxu0 %v1320
        %1402 = vmatpush.bf16.msra.mxu0 %v1318
        %1403 = vmatpush.bf16.msra.mxu0 %v1316
        %1404 = vmatpush.bf16.msra.mxu0 %v1314
        %1405 = vmatpush.bf16.msra.mxu0 %v1312
        %1406 = vmatpush.bf16.msra.mxu0 %v1310
        %1407 = vmatmul.bf16.gmra.mxu0 %v1173
        %v1408 = vpop.f32.mrf.mxu0
        %v1409 = vadd.f32 %v1210, %v1408
        %v1410 = vpop.f32.mrf.mxu0
        %1411 = vdwg.mxu0
        %1412 = vmatpush.bf16.msra.mxu0 %v1340
        %1413 = vmatpush.bf16.msra.mxu0 %v1338
        %1414 = vmatpush.bf16.msra.mxu0 %v1336
        %1415 = vmatpush.bf16.msra.mxu0 %v1334
        %1416 = vmatpush.bf16.msra.mxu0 %v1332
        %1417 = vmatpush.bf16.msra.mxu0 %v1330
        %1418 = vmatpush.bf16.msra.mxu0 %v1328
        %1419 = vmatpush.bf16.msra.mxu0 %v1326
        %1420 = vmatmul.bf16.gmra.mxu0 %v1174
        %v1421 = vpop.f32.mrf.mxu0
        %v1422 = vadd.f32 %v1409, %v1421
        %v1423 = vpop.f32.mrf.mxu0
        %1424 = vdwg.mxu0
        %v1425 = vld [vmem:[%s15] ss:$4 sm:$0x3]
        %v1426 = vld [vmem:[%s16] ss:$4 sm:$0x3]
        %v1427 = vrot.slane %v1396, 4
        %v1428 = vadd.f32 %v1396, %v1427
        %v1429 = vrot.slane %v1428, 2
        %v1430 = vadd.f32 %v1428, %v1429
        %v1431 = vrot.slane %v1430, 1
        %v1432 = vadd.f32 %v1430, %v1431
        %v1433 = vrot.slane %v1422, 4
        %v1434 = vadd.f32 %v1422, %v1433
        %v1435 = vrot.slane %v1434, 2
        %v1436 = vadd.f32 %v1434, %v1435
        %v1437 = vrot.slane %v1436, 1
        %v1438 = vadd.f32 %v1436, %v1437
        %v1439 = vrcp.pop 8.0
        %v1440 = vmul.f32 8.0, %v1439
        %v1441 = vsub.f32 1.0, %v1440
        %v1442 = vmul.f32 %v1439, %v1441
        %v1443 = vadd.f32 %v1439, %v1442
        %vm1444 = vweird.f32 %v1439
        %v1445 = vsel %vm1444, %v1439, %v1443
        %v1446 = vmul.f32 %v1432, %v1445
        %v1447 = vmul.f32 %v1438, %v1445
        %v1448 = vsub.f32 %v1396, %v1446
        %v1449 = vsub.f32 %v1422, %v1447
        %v1450 = vmul.f32 %v1448, %v1448
        %v1451 = vmul.f32 %v1449, %v1449
        %v1452 = vrot.slane %v1450, 4
        %v1453 = vadd.f32 %v1450, %v1452
        %v1454 = vrot.slane %v1453, 2
        %v1455 = vadd.f32 %v1453, %v1454
        %v1456 = vrot.slane %v1455, 1
        %v1457 = vadd.f32 %v1455, %v1456
        %v1458 = vrot.slane %v1451, 4
        %v1459 = vadd.f32 %v1451, %v1458
        %v1460 = vrot.slane %v1459, 2
        %v1461 = vadd.f32 %v1459, %v1460
        %v1462 = vrot.slane %v1461, 1
        %v1463 = vadd.f32 %v1461, %v1462
        %v1464 = vmul.f32 %v1457, %v1445
        %v1465 = vmul.f32 %v1463, %v1445
        %v1466 = vadd.f32 %v1464, 1e-05
        %v1467 = vadd.f32 %v1465, 1e-05
        %v1468 = vrsqrt.pop %v1466
        %v1469 = vmul.f32 %v1468, %v1466
        %v1470 = vmul.f32 %v1469, %v1468
        %v1471 = vmul.f32 0.5, %v1470
        %v1472 = vsub.f32 1.5, %v1471
        %v1473 = vmul.f32 %v1468, %v1472
        %vm1474 = vweird.f32 %v1466
        %vm1475 = vweird.f32 %v1468
        %vm1476 = vmor %vm1474, %vm1475
        %v1477 = vsel %vm1476, %v1468, %v1473
        %v1478 = vrsqrt.pop %v1467
        %v1479 = vmul.f32 %v1478, %v1467
        %v1480 = vmul.f32 %v1479, %v1478
        %v1481 = vmul.f32 0.5, %v1480
        %v1482 = vsub.f32 1.5, %v1481
        %v1483 = vmul.f32 %v1478, %v1482
        %vm1484 = vweird.f32 %v1467
        %vm1485 = vweird.f32 %v1478
        %vm1486 = vmor %vm1484, %vm1485
        %v1487 = vsel %vm1486, %v1478, %v1483
        %v1488 = vmul.f32 %v1448, %v1477
        %v1489 = vmul.f32 %v1449, %v1487
        %v1491 = vperm.slane %v1425, 0
        %v1492 = vperm.slane %v1425, 1
        %v1495 = vmul.f32 %v1488, %v1491
        %v1496 = vmul.f32 %v1489, %v1492
        %v1498 = vperm.slane %v1426, 0
        %v1499 = vperm.slane %v1426, 1
        %v1502 = vadd.f32 %v1495, %v1498
        %v1503 = vadd.f32 %v1496, %v1499
        %s1504 = scalar_lea.vmem %s15, 1
        %v1505 = vld [vmem:[%s1504] ss:$4 sm:$0x3]
        %s1506 = scalar_lea.vmem %s16, 1
        %v1507 = vld [vmem:[%s1506] ss:$4 sm:$0x3]
        %v1508 = vrot.slane %v1144, 4
        %v1509 = vadd.f32 %v1144, %v1508
        %v1510 = vrot.slane %v1509, 2
        %v1511 = vadd.f32 %v1509, %v1510
        %v1512 = vrot.slane %v1511, 1
        %v1513 = vadd.f32 %v1511, %v1512
        %v1514 = vrot.slane %v1157, 4
        %v1515 = vadd.f32 %v1157, %v1514
        %v1516 = vrot.slane %v1515, 2
        %v1517 = vadd.f32 %v1515, %v1516
        %v1518 = vrot.slane %v1517, 1
        %v1519 = vadd.f32 %v1517, %v1518
        %v1520 = vmul.f32 %v1513, %v1445
        %v1521 = vmul.f32 %v1519, %v1445
        %v1522 = vsub.f32 %v1144, %v1520
        %v1523 = vsub.f32 %v1157, %v1521
        %v1524 = vmul.f32 %v1522, %v1522
        %v1525 = vmul.f32 %v1523, %v1523
        %v1526 = vrot.slane %v1524, 4
        %v1527 = vadd.f32 %v1524, %v1526
        %v1528 = vrot.slane %v1527, 2
        %v1529 = vadd.f32 %v1527, %v1528
        %v1530 = vrot.slane %v1529, 1
        %v1531 = vadd.f32 %v1529, %v1530
        %v1532 = vrot.slane %v1525, 4
        %v1533 = vadd.f32 %v1525, %v1532
        %v1534 = vrot.slane %v1533, 2
        %v1535 = vadd.f32 %v1533, %v1534
        %v1536 = vrot.slane %v1535, 1
        %v1537 = vadd.f32 %v1535, %v1536
        %v1538 = vmul.f32 %v1531, %v1445
        %v1539 = vmul.f32 %v1537, %v1445
        %v1540 = vadd.f32 %v1538, 1e-05
        %v1541 = vadd.f32 %v1539, 1e-05
        %v1542 = vrsqrt.pop %v1540
        %v1543 = vmul.f32 %v1542, %v1540
        %v1544 = vmul.f32 %v1543, %v1542
        %v1545 = vmul.f32 0.5, %v1544
        %v1546 = vsub.f32 1.5, %v1545
        %v1547 = vmul.f32 %v1542, %v1546
        %vm1548 = vweird.f32 %v1540
        %vm1549 = vweird.f32 %v1542
        %vm1550 = vmor %vm1548, %vm1549
        %v1551 = vsel %vm1550, %v1542, %v1547
        %v1552 = vrsqrt.pop %v1541
        %v1553 = vmul.f32 %v1552, %v1541
        %v1554 = vmul.f32 %v1553, %v1552
        %v1555 = vmul.f32 0.5, %v1554
        %v1556 = vsub.f32 1.5, %v1555
        %v1557 = vmul.f32 %v1552, %v1556
        %vm1558 = vweird.f32 %v1541
        %vm1559 = vweird.f32 %v1552
        %vm1560 = vmor %vm1558, %vm1559
        %v1561 = vsel %vm1560, %v1552, %v1557
        %v1562 = vmul.f32 %v1522, %v1551
        %v1563 = vmul.f32 %v1523, %v1561
        %v1565 = vperm.slane %v1505, 0
        %v1566 = vperm.slane %v1505, 1
        %v1569 = vmul.f32 %v1562, %v1565
        %v1570 = vmul.f32 %v1563, %v1566
        %v1572 = vperm.slane %v1507, 0
        %v1573 = vperm.slane %v1507, 1
        %v1576 = vadd.f32 %v1569, %v1572
        %v1577 = vadd.f32 %v1570, %v1573
        %v1578 = vadd.f32 %v1502, %v1576
        %v1579 = vadd.f32 %v1503, %v1577
        %v1580 = vtanh.pop %v1578
        %v1581 = vtanh.pop %v1579
        %v1582 = vpack.c.bf16 %v1580, %v1580
        %v1583 = vpack.c.bf16 %v1581, %v1581
        %v1584 = vld [vmem:[#allocation13] sm:$0xff]
        %v1585 = vld [vmem:[#allocation13 + $0x8] sm:$0xff]
        %v1586 = vld [vmem:[#allocation13 + $0x10] sm:$0xff]
        %v1587 = vld [vmem:[#allocation13 + $0x18] sm:$0xff]
        %v1588 = vld [vmem:[#allocation13 + $0x20] sm:$0xff]
        %v1589 = vld [vmem:[#allocation13 + $0x28] sm:$0xff]
        %v1590 = vld [vmem:[#allocation13 + $0x30] sm:$0xff]
        %v1591 = vld [vmem:[#allocation13 + $0x38] sm:$0xff]
        %v1592 = vld [vmem:[#allocation13 + $0x40] sm:$0xff]
        %v1593 = vld [vmem:[#allocation13 + $0x48] sm:$0xff]
        %v1594 = vld [vmem:[#allocation13 + $0x50] sm:$0xff]
        %v1595 = vld [vmem:[#allocation13 + $0x58] sm:$0xff]
        %v1596 = vld [vmem:[#allocation13 + $0x60] sm:$0xff]
        %v1597 = vld [vmem:[#allocation13 + $0x68] sm:$0xff]
        %v1598 = vld [vmem:[#allocation13 + $0x70] sm:$0xff]
        %v1599 = vld [vmem:[#allocation13 + $0x78] sm:$0xff]
        %v1600 = vld [vmem:[#allocation13 + $0x80] sm:$0xff]
        %v1601 = vld [vmem:[#allocation13 + $0x88] sm:$0xff]
        %v1602 = vld [vmem:[#allocation13 + $0x90] sm:$0xff]
        %v1603 = vld [vmem:[#allocation13 + $0x98] sm:$0xff]
        %v1604 = vld [vmem:[#allocation13 + $0xa0] sm:$0xff]
        %v1605 = vld [vmem:[#allocation13 + $0xa8] sm:$0xff]
        %v1606 = vld [vmem:[#allocation13 + $0xb0] sm:$0xff]
        %v1607 = vld [vmem:[#allocation13 + $0xb8] sm:$0xff]
        %v1608 = vld [vmem:[#allocation13 + $0xc0] sm:$0xff]
        %v1609 = vld [vmem:[#allocation13 + $0xc8] sm:$0xff]
        %v1610 = vld [vmem:[#allocation13 + $0xd0] sm:$0xff]
        %v1611 = vld [vmem:[#allocation13 + $0xd8] sm:$0xff]
        %v1612 = vld [vmem:[#allocation13 + $0xe0] sm:$0xff]
        %v1613 = vld [vmem:[#allocation13 + $0xe8] sm:$0xff]
        %v1614 = vld [vmem:[#allocation13 + $0xf0] sm:$0xff]
        %v1615 = vld [vmem:[#allocation13 + $0xf8] sm:$0xff]
        %v1616 = vld [vmem:[#allocation14] sm:$0x3]
        %v1618 = vperm.slane %v1616, 0
        %v1619 = vperm.slane %v1616, 1
        %v1654 = vunpack.c.l.b16 %v1584
        %v1655 = vunpack.c.h.b16 %v1584
        %v1656 = vunpack.c.l.b16 %v1585
        %v1657 = vunpack.c.h.b16 %v1585
        %v1658 = vunpack.c.l.b16 %v1586
        %v1659 = vunpack.c.h.b16 %v1586
        %v1660 = vunpack.c.l.b16 %v1587
        %v1661 = vunpack.c.h.b16 %v1587
        %v1662 = vunpack.c.l.b16 %v1588
        %v1663 = vunpack.c.h.b16 %v1588
        %v1664 = vunpack.c.l.b16 %v1589
        %v1665 = vunpack.c.h.b16 %v1589
        %v1666 = vunpack.c.l.b16 %v1590
        %v1667 = vunpack.c.h.b16 %v1590
        %v1668 = vunpack.c.l.b16 %v1591
        %v1669 = vunpack.c.h.b16 %v1591
        %v1670 = vunpack.c.l.b16 %v1592
        %v1671 = vunpack.c.h.b16 %v1592
        %v1672 = vunpack.c.l.b16 %v1593
        %v1673 = vunpack.c.h.b16 %v1593
        %v1674 = vunpack.c.l.b16 %v1594
        %v1675 = vunpack.c.h.b16 %v1594
        %v1676 = vunpack.c.l.b16 %v1595
        %v1677 = vunpack.c.h.b16 %v1595
        %v1678 = vunpack.c.l.b16 %v1596
        %v1679 = vunpack.c.h.b16 %v1596
        %v1680 = vunpack.c.l.b16 %v1597
        %v1681 = vunpack.c.h.b16 %v1597
        %v1682 = vunpack.c.l.b16 %v1598
        %v1683 = vunpack.c.h.b16 %v1598
        %v1684 = vunpack.c.l.b16 %v1599
        %v1685 = vunpack.c.h.b16 %v1599
        %v1686 = vunpack.c.l.b16 %v1600
        %v1687 = vunpack.c.h.b16 %v1600
        %v1688 = vunpack.c.l.b16 %v1601
        %v1689 = vunpack.c.h.b16 %v1601
        %v1690 = vunpack.c.l.b16 %v1602
        %v1691 = vunpack.c.h.b16 %v1602
        %v1692 = vunpack.c.l.b16 %v1603
        %v1693 = vunpack.c.h.b16 %v1603
        %v1694 = vunpack.c.l.b16 %v1604
        %v1695 = vunpack.c.h.b16 %v1604
        %v1696 = vunpack.c.l.b16 %v1605
        %v1697 = vunpack.c.h.b16 %v1605
        %v1698 = vunpack.c.l.b16 %v1606
        %v1699 = vunpack.c.h.b16 %v1606
        %v1700 = vunpack.c.l.b16 %v1607
        %v1701 = vunpack.c.h.b16 %v1607
        %v1702 = vunpack.c.l.b16 %v1608
        %v1703 = vunpack.c.h.b16 %v1608
        %v1704 = vunpack.c.l.b16 %v1609
        %v1705 = vunpack.c.h.b16 %v1609
        %v1706 = vunpack.c.l.b16 %v1610
        %v1707 = vunpack.c.h.b16 %v1610
        %v1708 = vunpack.c.l.b16 %v1611
        %v1709 = vunpack.c.h.b16 %v1611
        %v1710 = vunpack.c.l.b16 %v1612
        %v1711 = vunpack.c.h.b16 %v1612
        %v1712 = vunpack.c.l.b16 %v1613
        %v1713 = vunpack.c.h.b16 %v1613
        %v1714 = vunpack.c.l.b16 %v1614
        %v1715 = vunpack.c.h.b16 %v1614
        %v1716 = vunpack.c.l.b16 %v1615
        %v1717 = vunpack.c.h.b16 %v1615
        %v1718 = vpack.c.b16 %v1656, %v1654
        %v1719 = vpack.c.b16 %v1657, %v1655
        %v1720 = vpack.c.b16 %v1660, %v1658
        %v1721 = vpack.c.b16 %v1661, %v1659
        %v1722 = vpack.c.b16 %v1664, %v1662
        %v1723 = vpack.c.b16 %v1665, %v1663
        %v1724 = vpack.c.b16 %v1668, %v1666
        %v1725 = vpack.c.b16 %v1669, %v1667
        %v1726 = vpack.c.b16 %v1672, %v1670
        %v1727 = vpack.c.b16 %v1673, %v1671
        %v1728 = vpack.c.b16 %v1676, %v1674
        %v1729 = vpack.c.b16 %v1677, %v1675
        %v1730 = vpack.c.b16 %v1680, %v1678
        %v1731 = vpack.c.b16 %v1681, %v1679
        %v1732 = vpack.c.b16 %v1684, %v1682
        %v1733 = vpack.c.b16 %v1685, %v1683
        %v1734 = vpack.c.b16 %v1688, %v1686
        %v1735 = vpack.c.b16 %v1689, %v1687
        %v1736 = vpack.c.b16 %v1692, %v1690
        %v1737 = vpack.c.b16 %v1693, %v1691
        %v1738 = vpack.c.b16 %v1696, %v1694
        %v1739 = vpack.c.b16 %v1697, %v1695
        %v1740 = vpack.c.b16 %v1700, %v1698
        %v1741 = vpack.c.b16 %v1701, %v1699
        %v1742 = vpack.c.b16 %v1704, %v1702
        %v1743 = vpack.c.b16 %v1705, %v1703
        %v1744 = vpack.c.b16 %v1708, %v1706
        %v1745 = vpack.c.b16 %v1709, %v1707
        %v1746 = vpack.c.b16 %v1712, %v1710
        %v1747 = vpack.c.b16 %v1713, %v1711
        %v1748 = vpack.c.b16 %v1716, %v1714
        %v1749 = vpack.c.b16 %v1717, %v1715
        %1782 = vmatpush.bf16.msra.mxu0 %v1732
        %1783 = vmatpush.bf16.msra.mxu0 %v1730
        %1784 = vmatpush.bf16.msra.mxu0 %v1728
        %1785 = vmatpush.bf16.msra.mxu0 %v1726
        %1786 = vmatpush.bf16.msra.mxu0 %v1724
        %1787 = vmatpush.bf16.msra.mxu0 %v1722
        %1788 = vmatpush.bf16.msra.mxu0 %v1720
        %1789 = vmatpush.bf16.msra.mxu0 %v1718
        %1790 = vmatmul.bf16.gmra.mxu0 %v1582
        %v1791 = vpop.f32.mrf.mxu0
        %v1792 = vadd.f32 %v1618, %v1791
        %v1793 = vpop.f32.mrf.mxu0
        %1794 = vdwg.mxu0
        %1795 = vmatpush.bf16.msra.mxu0 %v1748
        %1796 = vmatpush.bf16.msra.mxu0 %v1746
        %1797 = vmatpush.bf16.msra.mxu0 %v1744
        %1798 = vmatpush.bf16.msra.mxu0 %v1742
        %1799 = vmatpush.bf16.msra.mxu0 %v1740
        %1800 = vmatpush.bf16.msra.mxu0 %v1738
        %1801 = vmatpush.bf16.msra.mxu0 %v1736
        %1802 = vmatpush.bf16.msra.mxu0 %v1734
        %1803 = vmatmul.bf16.gmra.mxu0 %v1583
        %v1804 = vpop.f32.mrf.mxu0
        %v1805 = vadd.f32 %v1792, %v1804
        %v1806 = vpop.f32.mrf.mxu0
        %1807 = vdwg.mxu0
        %1808 = vmatpush.bf16.msra.mxu0 %v1733
        %1809 = vmatpush.bf16.msra.mxu0 %v1731
        %1810 = vmatpush.bf16.msra.mxu0 %v1729
        %1811 = vmatpush.bf16.msra.mxu0 %v1727
        %1812 = vmatpush.bf16.msra.mxu0 %v1725
        %1813 = vmatpush.bf16.msra.mxu0 %v1723
        %1814 = vmatpush.bf16.msra.mxu0 %v1721
        %1815 = vmatpush.bf16.msra.mxu0 %v1719
        %1816 = vmatmul.bf16.gmra.mxu0 %v1582
        %v1817 = vpop.f32.mrf.mxu0
        %v1818 = vadd.f32 %v1619, %v1817
        %v1819 = vpop.f32.mrf.mxu0
        %1820 = vdwg.mxu0
        %1821 = vmatpush.bf16.msra.mxu0 %v1749
        %1822 = vmatpush.bf16.msra.mxu0 %v1747
        %1823 = vmatpush.bf16.msra.mxu0 %v1745
        %1824 = vmatpush.bf16.msra.mxu0 %v1743
        %1825 = vmatpush.bf16.msra.mxu0 %v1741
        %1826 = vmatpush.bf16.msra.mxu0 %v1739
        %1827 = vmatpush.bf16.msra.mxu0 %v1737
        %1828 = vmatpush.bf16.msra.mxu0 %v1735
        %1829 = vmatmul.bf16.gmra.mxu0 %v1583
        %v1830 = vpop.f32.mrf.mxu0
        %v1831 = vadd.f32 %v1818, %v1830
        %v1832 = vpop.f32.mrf.mxu0
        %1833 = vdwg.mxu0
        %s1834 = scalar_lea.vmem %s15, 2
        %v1835 = vld [vmem:[%s1834] ss:$4 sm:$0x3]
        %s1836 = scalar_lea.vmem %s16, 2
        %v1837 = vld [vmem:[%s1836] ss:$4 sm:$0x3]
        %v1838 = vrot.slane %v1805, 4
        %v1839 = vadd.f32 %v1805, %v1838
        %v1840 = vrot.slane %v1839, 2
        %v1841 = vadd.f32 %v1839, %v1840
        %v1842 = vrot.slane %v1841, 1
        %v1843 = vadd.f32 %v1841, %v1842
        %v1844 = vrot.slane %v1831, 4
        %v1845 = vadd.f32 %v1831, %v1844
        %v1846 = vrot.slane %v1845, 2
        %v1847 = vadd.f32 %v1845, %v1846
        %v1848 = vrot.slane %v1847, 1
        %v1849 = vadd.f32 %v1847, %v1848
        %v1850 = vmul.f32 %v1843, %v1445
        %v1851 = vmul.f32 %v1849, %v1445
        %v1852 = vsub.f32 %v1805, %v1850
        %v1853 = vsub.f32 %v1831, %v1851
        %v1854 = vmul.f32 %v1852, %v1852
        %v1855 = vmul.f32 %v1853, %v1853
        %v1856 = vrot.slane %v1854, 4
        %v1857 = vadd.f32 %v1854, %v1856
        %v1858 = vrot.slane %v1857, 2
        %v1859 = vadd.f32 %v1857, %v1858
        %v1860 = vrot.slane %v1859, 1
        %v1861 = vadd.f32 %v1859, %v1860
        %v1862 = vrot.slane %v1855, 4
        %v1863 = vadd.f32 %v1855, %v1862
        %v1864 = vrot.slane %v1863, 2
        %v1865 = vadd.f32 %v1863, %v1864
        %v1866 = vrot.slane %v1865, 1
        %v1867 = vadd.f32 %v1865, %v1866
        %v1868 = vmul.f32 %v1861, %v1445
        %v1869 = vmul.f32 %v1867, %v1445
        %v1870 = vadd.f32 %v1868, 1e-05
        %v1871 = vadd.f32 %v1869, 1e-05
        %v1872 = vrsqrt.pop %v1870
        %v1873 = vmul.f32 %v1872, %v1870
        %v1874 = vmul.f32 %v1873, %v1872
        %v1875 = vmul.f32 0.5, %v1874
        %v1876 = vsub.f32 1.5, %v1875
        %v1877 = vmul.f32 %v1872, %v1876
        %vm1878 = vweird.f32 %v1870
        %vm1879 = vweird.f32 %v1872
        %vm1880 = vmor %vm1878, %vm1879
        %v1881 = vsel %vm1880, %v1872, %v1877
        %v1882 = vrsqrt.pop %v1871
        %v1883 = vmul.f32 %v1882, %v1871
        %v1884 = vmul.f32 %v1883, %v1882
        %v1885 = vmul.f32 0.5, %v1884
        %v1886 = vsub.f32 1.5, %v1885
        %v1887 = vmul.f32 %v1882, %v1886
        %vm1888 = vweird.f32 %v1871
        %vm1889 = vweird.f32 %v1882
        %vm1890 = vmor %vm1888, %vm1889
        %v1891 = vsel %vm1890, %v1882, %v1887
        %v1892 = vmul.f32 %v1852, %v1881
        %v1893 = vmul.f32 %v1853, %v1891
        %v1895 = vperm.slane %v1835, 0
        %v1896 = vperm.slane %v1835, 1
        %v1899 = vmul.f32 %v1892, %v1895
        %v1900 = vmul.f32 %v1893, %v1896
        %v1902 = vperm.slane %v1837, 0
        %v1903 = vperm.slane %v1837, 1
        %v1906 = vadd.f32 %v1899, %v1902
        %v1907 = vadd.f32 %v1900, %v1903
        %v1908 = vmax.f32 %v1906, %v1907
        %1909 = vmax.xlane.f32.xlu0 %v1908
        %v1910 = vpop.xlane.xlu0 %1909
        %v1911 = vsub.f32 %v1906, %v1910
        %v1912 = vsub.f32 %v1907, %v1910
        %v1913 = vmul.f32 %v1911, 1.442695
        %v1914 = vpow.pop %v1913
        %v1915 = vmul.f32 %v1912, 1.442695
        %v1916 = vpow.pop %v1915
        %v1917 = vadd.f32 %v1914, %v1916
        %1918 = vadd.xlane.f32.xlu0 %v1917
        %v1919 = vpop.xlane.xlu0 %1918
        %v1920 = vrcp.pop %v1919
        %v1921 = vmul.f32 %v1914, %v1920
        %v1922 = vmul.f32 %v1916, %v1920
        %1923 = vst [vmem:[%s942] sm:$0xff] %v1921
        %1924 = vst [vmem:[%s942 + $0x8] sm:$0xff] %v1922
        %v1925 = vmul.f32 %v1921, %v954
        %v1926 = vmul.f32 %v1922, %v955
        %v1927 = vpack.c.bf16 %v958, %v957
        %v1928 = vpack.c.bf16 %v960, %v959
        %v1929 = vpack.c.bf16 %v962, %v961
        %v1930 = vpack.c.bf16 %v964, %v963
        %v1931 = vld [vmem:[#allocation16] sm:$0xf]
        %v1932 = vld [vmem:[#allocation16 + $0x4] sm:$0xf]
        %v1933 = vld [vmem:[#allocation16 + $0x8] sm:$0xf]
        %v1934 = vld [vmem:[#allocation16 + $0xc] sm:$0xf]
        %v1935 = vld [vmem:[#allocation16 + $0x10] sm:$0xf]
        %v1936 = vld [vmem:[#allocation16 + $0x14] sm:$0xf]
        %v1937 = vld [vmem:[#allocation16 + $0x18] sm:$0xf]
        %v1938 = vld [vmem:[#allocation16 + $0x1c] sm:$0xf]
        %v1939 = vld [vmem:[#allocation16 + $0x20] sm:$0xf]
        %v1940 = vld [vmem:[#allocation16 + $0x24] sm:$0xf]
        %v1941 = vld [vmem:[#allocation16 + $0x28] sm:$0xf]
        %v1942 = vld [vmem:[#allocation16 + $0x2c] sm:$0xf]
        %v1943 = vld [vmem:[#allocation16 + $0x30] sm:$0xf]
        %v1944 = vld [vmem:[#allocation16 + $0x34] sm:$0xf]
        %v1945 = vld [vmem:[#allocation16 + $0x38] sm:$0xf]
        %v1946 = vld [vmem:[#allocation16 + $0x3c] sm:$0xf]
        %v1947 = vld [vmem:[#allocation17] sm:$0x1]
        %v1949 = vperm.slane %v1947, 0
        %v1967 = vunpack.c.l.b16 %v1931
        %v1968 = vunpack.c.l.b16 %v1932
        %v1969 = vunpack.c.l.b16 %v1933
        %v1970 = vunpack.c.l.b16 %v1934
        %v1971 = vunpack.c.l.b16 %v1935
        %v1972 = vunpack.c.l.b16 %v1936
        %v1973 = vunpack.c.l.b16 %v1937
        %v1974 = vunpack.c.l.b16 %v1938
        %v1975 = vunpack.c.l.b16 %v1939
        %v1976 = vunpack.c.l.b16 %v1940
        %v1977 = vunpack.c.l.b16 %v1941
        %v1978 = vunpack.c.l.b16 %v1942
        %v1979 = vunpack.c.l.b16 %v1943
        %v1980 = vunpack.c.l.b16 %v1944
        %v1981 = vunpack.c.l.b16 %v1945
        %v1982 = vunpack.c.l.b16 %v1946
        %v1983 = vpack.c.b16 %v1968, %v1967
        %v1984 = vpack.c.b16 %v1970, %v1969
        %v1985 = vpack.c.b16 %v1972, %v1971
        %v1986 = vpack.c.b16 %v1974, %v1973
        %v1987 = vpack.c.b16 %v1976, %v1975
        %v1988 = vpack.c.b16 %v1978, %v1977
        %v1989 = vpack.c.b16 %v1980, %v1979
        %v1990 = vpack.c.b16 %v1982, %v1981
        %1999 = vmatpush.bf16.msra.mxu0 %v1990
        %2000 = vmatpush.bf16.msra.mxu0 %v1989
        %2001 = vmatpush.bf16.msra.mxu0 %v1988
        %2002 = vmatpush.bf16.msra.mxu0 %v1987
        %2003 = vmatpush.bf16.msra.mxu0 %v1986
        %2004 = vmatpush.bf16.msra.mxu0 %v1985
        %2005 = vmatpush.bf16.msra.mxu0 %v1984
        %2006 = vmatpush.bf16.msra.mxu0 %v1983
        %2007 = vmatmul.bf16.gmra.mxu0 %v1927
        %v2008 = vpop.f32.mrf.mxu0
        %v2009 = vadd.f32 %v1949, %v2008
        %v2010 = vpop.f32.mrf.mxu0
        %v2011 = vadd.f32 %v1949, %v2010
        %2012 = vmatmul.bf16.gmra.mxu0 %v1928
        %v2013 = vpop.f32.mrf.mxu0
        %v2014 = vadd.f32 %v1949, %v2013
        %v2015 = vpop.f32.mrf.mxu0
        %v2016 = vadd.f32 %v1949, %v2015
        %2017 = vmatmul.bf16.gmra.mxu0 %v1929
        %v2018 = vpop.f32.mrf.mxu0
        %v2019 = vadd.f32 %v1949, %v2018
        %v2020 = vpop.f32.mrf.mxu0
        %v2021 = vadd.f32 %v1949, %v2020
        %2022 = vmatmul.bf16.gmra.mxu0 %v1930
        %v2023 = vpop.f32.mrf.mxu0
        %v2024 = vadd.f32 %v1949, %v2023
        %v2025 = vpop.f32.mrf.mxu0
        %v2026 = vadd.f32 %v1949, %v2025
        %2027 = vdwg.mxu0
        %v2028 = vld [vmem:[%s17] sm:$0xff]
        %v2029 = vld [vmem:[%s18] sm:$0xff]
        %2030 = vadd.xlane.f32.xlu0 %v2009
        %v2031 = vpop.xlane.xlu0 %2030
        %2032 = vadd.xlane.f32.xlu0 %v2011
        %v2033 = vpop.xlane.xlu0 %2032
        %2034 = vadd.xlane.f32.xlu0 %v2014
        %v2035 = vpop.xlane.xlu0 %2034
        %2036 = vadd.xlane.f32.xlu0 %v2016
        %v2037 = vpop.xlane.xlu0 %2036
        %2038 = vadd.xlane.f32.xlu0 %v2019
        %v2039 = vpop.xlane.xlu0 %2038
        %2040 = vadd.xlane.f32.xlu0 %v2021
        %v2041 = vpop.xlane.xlu0 %2040
        %2042 = vadd.xlane.f32.xlu0 %v2024
        %v2043 = vpop.xlane.xlu0 %2042
        %2044 = vadd.xlane.f32.xlu0 %v2026
        %v2045 = vpop.xlane.xlu0 %2044
        %v2046 = vadd.f32 %v2031, %v2033
        %v2047 = vadd.f32 %v2046, %v2035
        %v2048 = vadd.f32 %v2047, %v2037
        %v2049 = vadd.f32 %v2048, %v2039
        %v2050 = vadd.f32 %v2049, %v2041
        %v2051 = vadd.f32 %v2050, %v2043
        %v2052 = vadd.f32 %v2051, %v2045
        %v2053 = vrcp.pop 1024.0
        %v2054 = vmul.f32 1024.0, %v2053
        %v2055 = vsub.f32 1.0, %v2054
        %v2056 = vmul.f32 %v2053, %v2055
        %v2057 = vadd.f32 %v2053, %v2056
        %vm2058 = vweird.f32 %v2053
        %v2059 = vsel %vm2058, %v2053, %v2057
        %v2060 = vmul.f32 %v2052, %v2059
        %v2061 = vsub.f32 %v2009, %v2060
        %v2062 = vsub.f32 %v2011, %v2060
        %v2063 = vsub.f32 %v2014, %v2060
        %v2064 = vsub.f32 %v2016, %v2060
        %v2065 = vsub.f32 %v2019, %v2060
        %v2066 = vsub.f32 %v2021, %v2060
        %v2067 = vsub.f32 %v2024, %v2060
        %v2068 = vsub.f32 %v2026, %v2060
        %v2069 = vmul.f32 %v2061, %v2061
        %v2070 = vmul.f32 %v2062, %v2062
        %v2071 = vmul.f32 %v2063, %v2063
        %v2072 = vmul.f32 %v2064, %v2064
        %v2073 = vmul.f32 %v2065, %v2065
        %v2074 = vmul.f32 %v2066, %v2066
        %v2075 = vmul.f32 %v2067, %v2067
        %v2076 = vmul.f32 %v2068, %v2068
        %2077 = vadd.xlane.f32.xlu0 %v2069
        %v2078 = vpop.xlane.xlu0 %2077
        %2079 = vadd.xlane.f32.xlu0 %v2070
        %v2080 = vpop.xlane.xlu0 %2079
        %2081 = vadd.xlane.f32.xlu0 %v2071
        %v2082 = vpop.xlane.xlu0 %2081
        %2083 = vadd.xlane.f32.xlu0 %v2072
        %v2084 = vpop.xlane.xlu0 %2083
        %2085 = vadd.xlane.f32.xlu0 %v2073
        %v2086 = vpop.xlane.xlu0 %2085
        %2087 = vadd.xlane.f32.xlu0 %v2074
        %v2088 = vpop.xlane.xlu0 %2087
        %2089 = vadd.xlane.f32.xlu0 %v2075
        %v2090 = vpop.xlane.xlu0 %2089
        %2091 = vadd.xlane.f32.xlu0 %v2076
        %v2092 = vpop.xlane.xlu0 %2091
        %v2093 = vadd.f32 %v2078, %v2080
        %v2094 = vadd.f32 %v2093, %v2082
        %v2095 = vadd.f32 %v2094, %v2084
        %v2096 = vadd.f32 %v2095, %v2086
        %v2097 = vadd.f32 %v2096, %v2088
        %v2098 = vadd.f32 %v2097, %v2090
        %v2099 = vadd.f32 %v2098, %v2092
        %v2100 = vmul.f32 %v2099, %v2059
        %v2101 = vadd.f32 %v2100, 1e-05
        %v2102 = vrsqrt.pop %v2101
        %v2103 = vmul.f32 %v2102, %v2101
        %v2104 = vmul.f32 %v2103, %v2102
        %v2105 = vmul.f32 0.5, %v2104
        %v2106 = vsub.f32 1.5, %v2105
        %v2107 = vmul.f32 %v2102, %v2106
        %vm2108 = vweird.f32 %v2101
        %vm2109 = vweird.f32 %v2102
        %vm2110 = vmor %vm2108, %vm2109
        %v2111 = vsel %vm2110, %v2102, %v2107
        %v2112 = vmul.f32 %v2061, %v2111
        %v2113 = vmul.f32 %v2062, %v2111
        %v2114 = vmul.f32 %v2063, %v2111
        %v2115 = vmul.f32 %v2064, %v2111
        %v2116 = vmul.f32 %v2065, %v2111
        %v2117 = vmul.f32 %v2066, %v2111
        %v2118 = vmul.f32 %v2067, %v2111
        %v2119 = vmul.f32 %v2068, %v2111
        %2121 = vset.pattern.permute.xlu0 0
        %2122 = vperm.xlu0 %2121, %v2028
        %v2123 = vpop.permute.xlu0 %2122
        %v2125 = vmul.f32 %v2112, %v2123
        %v2126 = vmul.f32 %v2113, %v2123
        %v2127 = vmul.f32 %v2114, %v2123
        %v2128 = vmul.f32 %v2115, %v2123
        %v2129 = vmul.f32 %v2116, %v2123
        %v2130 = vmul.f32 %v2117, %v2123
        %v2131 = vmul.f32 %v2118, %v2123
        %v2132 = vmul.f32 %v2119, %v2123
        %2134 = vset.pattern.permute.xlu0 0
        %2135 = vperm.xlu0 %2134, %v2029
        %v2136 = vpop.permute.xlu0 %2135
        %v2138 = vadd.f32 %v2125, %v2136
        %v2139 = vadd.f32 %v2126, %v2136
        %v2140 = vadd.f32 %v2127, %v2136
        %v2141 = vadd.f32 %v2128, %v2136
        %v2142 = vadd.f32 %v2129, %v2136
        %v2143 = vadd.f32 %v2130, %v2136
        %v2144 = vadd.f32 %v2131, %v2136
        %v2145 = vadd.f32 %v2132, %v2136
        %2146 = vadd.xlane.f32.xlu0 %v1170
        %v2147 = vpop.xlane.xlu0 %2146
        %v2148 = vrot.slane %v2147, 4
        %v2149 = vadd.f32 %v2147, %v2148
        %v2150 = vrot.slane %v2149, 2
        %v2151 = vadd.f32 %v2149, %v2150
        %v2152 = vrot.slane %v2151, 1
        %v2153 = vadd.f32 %v2151, %v2152
        %s2154 = vtos %v2153
        %v2155 = vrcp.pop 1024.0
        %v2156 = vmul.f32 1024.0, %v2155
        %v2157 = vsub.f32 1.0, %v2156
        %v2158 = vmul.f32 %v2155, %v2157
        %v2159 = vadd.f32 %v2155, %v2158
        %vm2160 = vweird.f32 %v2155
        %v2161 = vsel %vm2160, %v2155, %v2159
        %s2162 = vtos %v2161
        %s2163 = smul.f32 %s2154, %s2162
        %v2164 = vstv %s2163
        %v2165 = vsub.f32 %v1170, %v2164
        %v2166 = vmul.f32 %v2165, %v2165
        %2167 = vadd.xlane.f32.xlu0 %v2166
        %v2168 = vpop.xlane.xlu0 %2167
        %v2169 = vrot.slane %v2168, 4
        %v2170 = vadd.f32 %v2168, %v2169
        %v2171 = vrot.slane %v2170, 2
        %v2172 = vadd.f32 %v2170, %v2171
        %v2173 = vrot.slane %v2172, 1
        %v2174 = vadd.f32 %v2172, %v2173
        %s2175 = vtos %v2174
        %v2176 = vrcp.pop 1024.0
        %v2177 = vmul.f32 1024.0, %v2176
        %v2178 = vsub.f32 1.0, %v2177
        %v2179 = vmul.f32 %v2176, %v2178
        %v2180 = vadd.f32 %v2176, %v2179
        %vm2181 = vweird.f32 %v2176
        %v2182 = vsel %vm2181, %v2176, %v2180
        %s2183 = vtos %v2182
        %s2184 = smul.f32 %s2175, %s2183
        %s2185 = sadd.f32 %s2184, 1e-05
        %v2186 = vstv %s2185
        %v2187 = vrsqrt.pop %v2186
        %v2188 = vmul.f32 %v2187, %v2186
        %v2189 = vmul.f32 %v2188, %v2187
        %v2190 = vmul.f32 0.5, %v2189
        %v2191 = vsub.f32 1.5, %v2190
        %v2192 = vmul.f32 %v2187, %v2191
        %vm2193 = vweird.f32 %v2186
        %vm2194 = vweird.f32 %v2187
        %vm2195 = vmor %vm2193, %vm2194
        %v2196 = vsel %vm2195, %v2187, %v2192
        %s2197 = vtos %v2196
        %v2198 = vstv %s2197
        %v2199 = vmul.f32 %v2165, %v2198
        %v2200 = vld [vmem:[%s21] sm:$0x1]
        %v2202 = vperm.slane %v2200, 0
        %2203 = vset.pattern.permute.xlu0 0
        %2204 = vperm.xlu0 %2203, %v2202
        %v2205 = vpop.permute.xlu0 %2204
        %v2207 = vmul.f32 %v2199, %v2205
        %2208 = vset.pattern.permute.xlu0 1
        %2209 = vperm.xlu0 %2208, %v2202
        %v2210 = vpop.permute.xlu0 %2209
        %v2212 = vadd.f32 %v2207, %v2210
        %v2214 = vrot.slane %v2212, 1
        %v2215 = vrot.slane %v2212, 2
        %v2216 = vrot.slane %v2212, 3
        %v2217 = vrot.slane %v2212, 4
        %v2218 = vrot.slane %v2212, 5
        %v2219 = vrot.slane %v2212, 6
        %v2220 = vrot.slane %v2212, 7
        %v2221 = vperm.slane %v2212, 0
        %v2222 = vperm.slane %v2214, 0
        %v2223 = vperm.slane %v2215, 0
        %v2224 = vperm.slane %v2216, 0
        %v2225 = vperm.slane %v2217, 0
        %v2226 = vperm.slane %v2218, 0
        %v2227 = vperm.slane %v2219, 0
        %v2228 = vperm.slane %v2220, 0
        %v2237 = vadd.f32 %v2221, %v2138
        %v2238 = vadd.f32 %v2222, %v2139
        %v2239 = vadd.f32 %v2223, %v2140
        %v2240 = vadd.f32 %v2224, %v2141
        %v2241 = vadd.f32 %v2225, %v2142
        %v2242 = vadd.f32 %v2226, %v2143
        %v2243 = vadd.f32 %v2227, %v2144
        %v2244 = vadd.f32 %v2228, %v2145
        %v2245 = vtanh.pop %v2237
        %v2246 = vtanh.pop %v2238
        %v2247 = vtanh.pop %v2239
        %v2248 = vtanh.pop %v2240
        %v2249 = vtanh.pop %v2241
        %v2250 = vtanh.pop %v2242
        %v2251 = vtanh.pop %v2243
        %v2252 = vtanh.pop %v2244
        %v2253 = vpack.c.bf16 %v2246, %v2245
        %v2254 = vpack.c.bf16 %v2248, %v2247
        %v2255 = vpack.c.bf16 %v2250, %v2249
        %v2256 = vpack.c.bf16 %v2252, %v2251
        %v2257 = vld [vmem:[#allocation19] sm:$0xf]
        %v2258 = vld [vmem:[#allocation19 + $0x4] sm:$0xf]
        %v2259 = vld [vmem:[#allocation19 + $0x8] sm:$0xf]
        %v2260 = vld [vmem:[#allocation19 + $0xc] sm:$0xf]
        %v2261 = vld [vmem:[#allocation19 + $0x10] sm:$0xf]
        %v2262 = vld [vmem:[#allocation19 + $0x14] sm:$0xf]
        %v2263 = vld [vmem:[#allocation19 + $0x18] sm:$0xf]
        %v2264 = vld [vmem:[#allocation19 + $0x1c] sm:$0xf]
        %v2265 = vld [vmem:[#allocation19 + $0x20] sm:$0xf]
        %v2266 = vld [vmem:[#allocation19 + $0x24] sm:$0xf]
        %v2267 = vld [vmem:[#allocation19 + $0x28] sm:$0xf]
        %v2268 = vld [vmem:[#allocation19 + $0x2c] sm:$0xf]
        %v2269 = vld [vmem:[#allocation19 + $0x30] sm:$0xf]
        %v2270 = vld [vmem:[#allocation19 + $0x34] sm:$0xf]
        %v2271 = vld [vmem:[#allocation19 + $0x38] sm:$0xf]
        %v2272 = vld [vmem:[#allocation19 + $0x3c] sm:$0xf]
        %v2273 = vld [vmem:[#allocation20] sm:$0x1]
        %v2275 = vperm.slane %v2273, 0
        %v2293 = vunpack.c.l.b16 %v2257
        %v2294 = vunpack.c.l.b16 %v2258
        %v2295 = vunpack.c.l.b16 %v2259
        %v2296 = vunpack.c.l.b16 %v2260
        %v2297 = vunpack.c.l.b16 %v2261
        %v2298 = vunpack.c.l.b16 %v2262
        %v2299 = vunpack.c.l.b16 %v2263
        %v2300 = vunpack.c.l.b16 %v2264
        %v2301 = vunpack.c.l.b16 %v2265
        %v2302 = vunpack.c.l.b16 %v2266
        %v2303 = vunpack.c.l.b16 %v2267
        %v2304 = vunpack.c.l.b16 %v2268
        %v2305 = vunpack.c.l.b16 %v2269
        %v2306 = vunpack.c.l.b16 %v2270
        %v2307 = vunpack.c.l.b16 %v2271
        %v2308 = vunpack.c.l.b16 %v2272
        %v2309 = vpack.c.b16 %v2294, %v2293
        %v2310 = vpack.c.b16 %v2296, %v2295
        %v2311 = vpack.c.b16 %v2298, %v2297
        %v2312 = vpack.c.b16 %v2300, %v2299
        %v2313 = vpack.c.b16 %v2302, %v2301
        %v2314 = vpack.c.b16 %v2304, %v2303
        %v2315 = vpack.c.b16 %v2306, %v2305
        %v2316 = vpack.c.b16 %v2308, %v2307
        %2325 = vmatpush.bf16.msra.mxu0 %v2316
        %2326 = vmatpush.bf16.msra.mxu0 %v2315
        %2327 = vmatpush.bf16.msra.mxu0 %v2314
        %2328 = vmatpush.bf16.msra.mxu0 %v2313
        %2329 = vmatpush.bf16.msra.mxu0 %v2312
        %2330 = vmatpush.bf16.msra.mxu0 %v2311
        %2331 = vmatpush.bf16.msra.mxu0 %v2310
        %2332 = vmatpush.bf16.msra.mxu0 %v2309
        %2333 = vmatmul.bf16.gmra.mxu0 %v2253
        %v2334 = vpop.f32.mrf.mxu0
        %v2335 = vadd.f32 %v2275, %v2334
        %v2336 = vpop.f32.mrf.mxu0
        %v2337 = vadd.f32 %v2275, %v2336
        %2338 = vmatmul.bf16.gmra.mxu0 %v2254
        %v2339 = vpop.f32.mrf.mxu0
        %v2340 = vadd.f32 %v2275, %v2339
        %v2341 = vpop.f32.mrf.mxu0
        %v2342 = vadd.f32 %v2275, %v2341
        %2343 = vmatmul.bf16.gmra.mxu0 %v2255
        %v2344 = vpop.f32.mrf.mxu0
        %v2345 = vadd.f32 %v2275, %v2344
        %v2346 = vpop.f32.mrf.mxu0
        %v2347 = vadd.f32 %v2275, %v2346
        %2348 = vmatmul.bf16.gmra.mxu0 %v2256
        %v2349 = vpop.f32.mrf.mxu0
        %v2350 = vadd.f32 %v2275, %v2349
        %v2351 = vpop.f32.mrf.mxu0
        %v2352 = vadd.f32 %v2275, %v2351
        %2353 = vdwg.mxu0
        %v2354 = vld [vmem:[%s19] sm:$0xff]
        %v2355 = vld [vmem:[%s20] sm:$0xff]
        %2356 = vadd.xlane.f32.xlu0 %v2335
        %v2357 = vpop.xlane.xlu0 %2356
        %2358 = vadd.xlane.f32.xlu0 %v2337
        %v2359 = vpop.xlane.xlu0 %2358
        %2360 = vadd.xlane.f32.xlu0 %v2340
        %v2361 = vpop.xlane.xlu0 %2360
        %2362 = vadd.xlane.f32.xlu0 %v2342
        %v2363 = vpop.xlane.xlu0 %2362
        %2364 = vadd.xlane.f32.xlu0 %v2345
        %v2365 = vpop.xlane.xlu0 %2364
        %2366 = vadd.xlane.f32.xlu0 %v2347
        %v2367 = vpop.xlane.xlu0 %2366
        %2368 = vadd.xlane.f32.xlu0 %v2350
        %v2369 = vpop.xlane.xlu0 %2368
        %2370 = vadd.xlane.f32.xlu0 %v2352
        %v2371 = vpop.xlane.xlu0 %2370
        %v2372 = vadd.f32 %v2357, %v2359
        %v2373 = vadd.f32 %v2372, %v2361
        %v2374 = vadd.f32 %v2373, %v2363
        %v2375 = vadd.f32 %v2374, %v2365
        %v2376 = vadd.f32 %v2375, %v2367
        %v2377 = vadd.f32 %v2376, %v2369
        %v2378 = vadd.f32 %v2377, %v2371
        %v2379 = vmul.f32 %v2378, %v2059
        %v2380 = vsub.f32 %v2335, %v2379
        %v2381 = vsub.f32 %v2337, %v2379
        %v2382 = vsub.f32 %v2340, %v2379
        %v2383 = vsub.f32 %v2342, %v2379
        %v2384 = vsub.f32 %v2345, %v2379
        %v2385 = vsub.f32 %v2347, %v2379
        %v2386 = vsub.f32 %v2350, %v2379
        %v2387 = vsub.f32 %v2352, %v2379
        %v2388 = vmul.f32 %v2380, %v2380
        %v2389 = vmul.f32 %v2381, %v2381
        %v2390 = vmul.f32 %v2382, %v2382
        %v2391 = vmul.f32 %v2383, %v2383
        %v2392 = vmul.f32 %v2384, %v2384
        %v2393 = vmul.f32 %v2385, %v2385
        %v2394 = vmul.f32 %v2386, %v2386
        %v2395 = vmul.f32 %v2387, %v2387
        %2396 = vadd.xlane.f32.xlu0 %v2388
        %v2397 = vpop.xlane.xlu0 %2396
        %2398 = vadd.xlane.f32.xlu0 %v2389
        %v2399 = vpop.xlane.xlu0 %2398
        %2400 = vadd.xlane.f32.xlu0 %v2390
        %v2401 = vpop.xlane.xlu0 %2400
        %2402 = vadd.xlane.f32.xlu0 %v2391
        %v2403 = vpop.xlane.xlu0 %2402
        %2404 = vadd.xlane.f32.xlu0 %v2392
        %v2405 = vpop.xlane.xlu0 %2404
        %2406 = vadd.xlane.f32.xlu0 %v2393
        %v2407 = vpop.xlane.xlu0 %2406
        %2408 = vadd.xlane.f32.xlu0 %v2394
        %v2409 = vpop.xlane.xlu0 %2408
        %2410 = vadd.xlane.f32.xlu0 %v2395
        %v2411 = vpop.xlane.xlu0 %2410
        %v2412 = vadd.f32 %v2397, %v2399
        %v2413 = vadd.f32 %v2412, %v2401
        %v2414 = vadd.f32 %v2413, %v2403
        %v2415 = vadd.f32 %v2414, %v2405
        %v2416 = vadd.f32 %v2415, %v2407
        %v2417 = vadd.f32 %v2416, %v2409
        %v2418 = vadd.f32 %v2417, %v2411
        %v2419 = vmul.f32 %v2418, %v2059
        %v2420 = vadd.f32 %v2419, 1e-05
        %v2421 = vrsqrt.pop %v2420
        %v2422 = vmul.f32 %v2421, %v2420
        %v2423 = vmul.f32 %v2422, %v2421
        %v2424 = vmul.f32 0.5, %v2423
        %v2425 = vsub.f32 1.5, %v2424
        %v2426 = vmul.f32 %v2421, %v2425
        %vm2427 = vweird.f32 %v2420
        %vm2428 = vweird.f32 %v2421
        %vm2429 = vmor %vm2427, %vm2428
        %v2430 = vsel %vm2429, %v2421, %v2426
        %v2431 = vmul.f32 %v2380, %v2430
        %v2432 = vmul.f32 %v2381, %v2430
        %v2433 = vmul.f32 %v2382, %v2430
        %v2434 = vmul.f32 %v2383, %v2430
        %v2435 = vmul.f32 %v2384, %v2430
        %v2436 = vmul.f32 %v2385, %v2430
        %v2437 = vmul.f32 %v2386, %v2430
        %v2438 = vmul.f32 %v2387, %v2430
        %2440 = vset.pattern.permute.xlu0 0
        %2441 = vperm.xlu0 %2440, %v2354
        %v2442 = vpop.permute.xlu0 %2441
        %v2444 = vmul.f32 %v2431, %v2442
        %v2445 = vmul.f32 %v2432, %v2442
        %v2446 = vmul.f32 %v2433, %v2442
        %v2447 = vmul.f32 %v2434, %v2442
        %v2448 = vmul.f32 %v2435, %v2442
        %v2449 = vmul.f32 %v2436, %v2442
        %v2450 = vmul.f32 %v2437, %v2442
        %v2451 = vmul.f32 %v2438, %v2442
        %2453 = vset.pattern.permute.xlu0 0
        %2454 = vperm.xlu0 %2453, %v2355
        %v2455 = vpop.permute.xlu0 %2454
        %v2457 = vadd.f32 %v2444, %v2455
        %v2458 = vadd.f32 %v2445, %v2455
        %v2459 = vadd.f32 %v2446, %v2455
        %v2460 = vadd.f32 %v2447, %v2455
        %v2461 = vadd.f32 %v2448, %v2455
        %v2462 = vadd.f32 %v2449, %v2455
        %v2463 = vadd.f32 %v2450, %v2455
        %v2464 = vadd.f32 %v2451, %v2455
        %2465 = vmax.xlane.f32.xlu0 %v2457
        %v2466 = vpop.xlane.xlu0 %2465
        %2467 = vmax.xlane.f32.xlu0 %v2458
        %v2468 = vpop.xlane.xlu0 %2467
        %2469 = vmax.xlane.f32.xlu0 %v2459
        %v2470 = vpop.xlane.xlu0 %2469
        %2471 = vmax.xlane.f32.xlu0 %v2460
        %v2472 = vpop.xlane.xlu0 %2471
        %2473 = vmax.xlane.f32.xlu0 %v2461
        %v2474 = vpop.xlane.xlu0 %2473
        %2475 = vmax.xlane.f32.xlu0 %v2462
        %v2476 = vpop.xlane.xlu0 %2475
        %2477 = vmax.xlane.f32.xlu0 %v2463
        %v2478 = vpop.xlane.xlu0 %2477
        %2479 = vmax.xlane.f32.xlu0 %v2464
        %v2480 = vpop.xlane.xlu0 %2479
        %v2481 = vsub.f32 %v2457, %v2466
        %v2482 = vsub.f32 %v2458, %v2468
        %v2483 = vsub.f32 %v2459, %v2470
        %v2484 = vsub.f32 %v2460, %v2472
        %v2485 = vsub.f32 %v2461, %v2474
        %v2486 = vsub.f32 %v2462, %v2476
        %v2487 = vsub.f32 %v2463, %v2478
        %v2488 = vsub.f32 %v2464, %v2480
        %v2489 = vmul.f32 %v2481, 1.442695
        %v2490 = vpow.pop %v2489
        %v2491 = vmul.f32 %v2482, 1.442695
        %v2492 = vpow.pop %v2491
        %v2493 = vmul.f32 %v2483, 1.442695
        %v2494 = vpow.pop %v2493
        %v2495 = vmul.f32 %v2484, 1.442695
        %v2496 = vpow.pop %v2495
        %v2497 = vmul.f32 %v2485, 1.442695
        %v2498 = vpow.pop %v2497
        %v2499 = vmul.f32 %v2486, 1.442695
        %v2500 = vpow.pop %v2499
        %v2501 = vmul.f32 %v2487, 1.442695
        %v2502 = vpow.pop %v2501
        %v2503 = vmul.f32 %v2488, 1.442695
        %v2504 = vpow.pop %v2503
        %2505 = vadd.xlane.f32.xlu0 %v2490
        %v2506 = vpop.xlane.xlu0 %2505
        %2507 = vadd.xlane.f32.xlu0 %v2492
        %v2508 = vpop.xlane.xlu0 %2507
        %2509 = vadd.xlane.f32.xlu0 %v2494
        %v2510 = vpop.xlane.xlu0 %2509
        %2511 = vadd.xlane.f32.xlu0 %v2496
        %v2512 = vpop.xlane.xlu0 %2511
        %2513 = vadd.xlane.f32.xlu0 %v2498
        %v2514 = vpop.xlane.xlu0 %2513
        %2515 = vadd.xlane.f32.xlu0 %v2500
        %v2516 = vpop.xlane.xlu0 %2515
        %2517 = vadd.xlane.f32.xlu0 %v2502
        %v2518 = vpop.xlane.xlu0 %2517
        %2519 = vadd.xlane.f32.xlu0 %v2504
        %v2520 = vpop.xlane.xlu0 %2519
        %v2521 = vrcp.pop %v2506
        %v2522 = vrcp.pop %v2508
        %v2523 = vrcp.pop %v2510
        %v2524 = vrcp.pop %v2512
        %v2525 = vrcp.pop %v2514
        %v2526 = vrcp.pop %v2516
        %v2527 = vrcp.pop %v2518
        %v2528 = vrcp.pop %v2520
        %v2529 = vmul.f32 %v2490, %v2521
        %v2530 = vmul.f32 %v2492, %v2522
        %v2531 = vmul.f32 %v2494, %v2523
        %v2532 = vmul.f32 %v2496, %v2524
        %v2533 = vmul.f32 %v2498, %v2525
        %v2534 = vmul.f32 %v2500, %v2526
        %v2535 = vmul.f32 %v2502, %v2527
        %v2536 = vmul.f32 %v2504, %v2528
        %2537 = vst [vmem:[%s949] sm:$0xff] %v2529
        %2538 = vst [vmem:[%s949 + $0x8] sm:$0xff] %v2530
        %2539 = vst [vmem:[%s949 + $0x10] sm:$0xff] %v2531
        %2540 = vst [vmem:[%s949 + $0x18] sm:$0xff] %v2532
        %2541 = vst [vmem:[%s949 + $0x20] sm:$0xff] %v2533
        %2542 = vst [vmem:[%s949 + $0x28] sm:$0xff] %v2534
        %2543 = vst [vmem:[%s949 + $0x30] sm:$0xff] %v2535
        %2544 = vst [vmem:[%s949 + $0x38] sm:$0xff] %v2536
        %v2545 = vmul.f32 %v2529, %v957
        %v2546 = vmul.f32 %v2530, %v958
        %v2547 = vmul.f32 %v2531, %v959
        %v2548 = vmul.f32 %v2532, %v960
        %v2549 = vmul.f32 %v2533, %v961
        %v2550 = vmul.f32 %v2534, %v962
        %v2551 = vmul.f32 %v2535, %v963
        %v2552 = vmul.f32 %v2536, %v964
        %v2553 = vrot.slane %v2545, 4
        %v2554 = vadd.f32 %v2545, %v2553
        %v2555 = vrot.slane %v2554, 2
        %v2556 = vadd.f32 %v2554, %v2555
        %v2557 = vrot.slane %v2556, 1
        %v2558 = vadd.f32 %v2556, %v2557
        %v2559 = vrot.slane %v2546, 4
        %v2560 = vadd.f32 %v2546, %v2559
        %v2561 = vrot.slane %v2560, 2
        %v2562 = vadd.f32 %v2560, %v2561
        %v2563 = vrot.slane %v2562, 1
        %v2564 = vadd.f32 %v2562, %v2563
        %v2565 = vrot.slane %v2547, 4
        %v2566 = vadd.f32 %v2547, %v2565
        %v2567 = vrot.slane %v2566, 2
        %v2568 = vadd.f32 %v2566, %v2567
        %v2569 = vrot.slane %v2568, 1
        %v2570 = vadd.f32 %v2568, %v2569
        %v2571 = vrot.slane %v2548, 4
        %v2572 = vadd.f32 %v2548, %v2571
        %v2573 = vrot.slane %v2572, 2
        %v2574 = vadd.f32 %v2572, %v2573
        %v2575 = vrot.slane %v2574, 1
        %v2576 = vadd.f32 %v2574, %v2575
        %v2577 = vrot.slane %v2549, 4
        %v2578 = vadd.f32 %v2549, %v2577
        %v2579 = vrot.slane %v2578, 2
        %v2580 = vadd.f32 %v2578, %v2579
        %v2581 = vrot.slane %v2580, 1
        %v2582 = vadd.f32 %v2580, %v2581
        %v2583 = vrot.slane %v2550, 4
        %v2584 = vadd.f32 %v2550, %v2583
        %v2585 = vrot.slane %v2584, 2
        %v2586 = vadd.f32 %v2584, %v2585
        %v2587 = vrot.slane %v2586, 1
        %v2588 = vadd.f32 %v2586, %v2587
        %v2589 = vrot.slane %v2551, 4
        %v2590 = vadd.f32 %v2551, %v2589
        %v2591 = vrot.slane %v2590, 2
        %v2592 = vadd.f32 %v2590, %v2591
        %v2593 = vrot.slane %v2592, 1
        %v2594 = vadd.f32 %v2592, %v2593
        %v2595 = vrot.slane %v2552, 4
        %v2596 = vadd.f32 %v2552, %v2595
        %v2597 = vrot.slane %v2596, 2
        %v2598 = vadd.f32 %v2596, %v2597
        %v2599 = vrot.slane %v2598, 1
        %v2600 = vadd.f32 %v2598, %v2599
        %vm2609 = vcmask 1041409
        %v2610 = vsel %vm2609, %v2564, %v2558
        %vm2611 = vcmask 1042434
        %v2612 = vsel %vm2611, %v2570, %v2610
        %vm2613 = vcmask 1043459
        %v2614 = vsel %vm2613, %v2576, %v2612
        %vm2615 = vcmask 1044484
        %v2616 = vsel %vm2615, %v2582, %v2614
        %vm2617 = vcmask 1045509
        %v2618 = vsel %vm2617, %v2588, %v2616
        %vm2619 = vcmask 1046534
        %v2620 = vsel %vm2619, %v2594, %v2618
        %vm2621 = vcmask 1047559
        %v2622 = vsel %vm2621, %v2600, %v2620
        %v2624 = vpack.c.bf16 %v1925, %v1925
        %v2625 = vpack.c.bf16 %v1926, %v1926
        %v2626 = vpack.c.bf16 %v2622, %v2622
        %v2627 = vld [vmem:[#allocation22] sm:$0xf]
        %v2628 = vld [vmem:[#allocation22 + $0x4] sm:$0xf]
        %v2629 = vld [vmem:[#allocation22 + $0x8] sm:$0xf]
        %v2630 = vld [vmem:[#allocation22 + $0xc] sm:$0xf]
        %v2631 = vld [vmem:[#allocation22 + $0x10] sm:$0xf]
        %v2632 = vld [vmem:[#allocation22 + $0x14] sm:$0xf]
        %v2633 = vld [vmem:[#allocation22 + $0x18] sm:$0xf]
        %v2634 = vld [vmem:[#allocation22 + $0x1c] sm:$0xf]
        %v2635 = vld [vmem:[#allocation22 + $0x20] sm:$0xf]
        %v2636 = vld [vmem:[#allocation22 + $0x24] sm:$0xf]
        %v2637 = vld [vmem:[#allocation22 + $0x28] sm:$0xf]
        %v2638 = vld [vmem:[#allocation22 + $0x2c] sm:$0xf]
        %v2639 = vld [vmem:[#allocation22 + $0x30] sm:$0xf]
        %v2640 = vld [vmem:[#allocation22 + $0x34] sm:$0xf]
        %v2641 = vld [vmem:[#allocation22 + $0x38] sm:$0xf]
        %v2642 = vld [vmem:[#allocation22 + $0x3c] sm:$0xf]
        %v2643 = vld [vmem:[#allocation22 + $0x40] sm:$0xf]
        %v2644 = vld [vmem:[#allocation22 + $0x44] sm:$0xf]
        %v2645 = vld [vmem:[#allocation22 + $0x48] sm:$0xf]
        %v2646 = vld [vmem:[#allocation22 + $0x4c] sm:$0xf]
        %v2647 = vld [vmem:[#allocation22 + $0x50] sm:$0xf]
        %v2648 = vld [vmem:[#allocation22 + $0x54] sm:$0xf]
        %v2649 = vld [vmem:[#allocation22 + $0x58] sm:$0xf]
        %v2650 = vld [vmem:[#allocation22 + $0x5c] sm:$0xf]
        %v2651 = vld [vmem:[#allocation22 + $0x60] sm:$0xf]
        %v2652 = vld [vmem:[#allocation22 + $0x64] sm:$0xf]
        %v2653 = vld [vmem:[#allocation22 + $0x68] sm:$0xf]
        %v2654 = vld [vmem:[#allocation22 + $0x6c] sm:$0xf]
        %v2655 = vld [vmem:[#allocation22 + $0x70] sm:$0xf]
        %v2656 = vld [vmem:[#allocation22 + $0x74] sm:$0xf]
        %v2657 = vld [vmem:[#allocation22 + $0x78] sm:$0xf]
        %v2658 = vld [vmem:[#allocation22 + $0x7c] sm:$0xf]
        %v2659 = vld [vmem:[#allocation22 + $0x80] sm:$0xf]
        %v2660 = vld [vmem:[#allocation22 + $0x84] sm:$0xf]
        %v2661 = vld [vmem:[#allocation22 + $0x88] sm:$0xf]
        %v2662 = vld [vmem:[#allocation22 + $0x8c] sm:$0xf]
        %v2663 = vld [vmem:[#allocation22 + $0x90] sm:$0xf]
        %v2664 = vld [vmem:[#allocation22 + $0x94] sm:$0xf]
        %v2665 = vld [vmem:[#allocation22 + $0x98] sm:$0xf]
        %v2666 = vld [vmem:[#allocation22 + $0x9c] sm:$0xf]
        %v2667 = vld [vmem:[#allocation22 + $0xa0] sm:$0xf]
        %v2668 = vld [vmem:[#allocation22 + $0xa4] sm:$0xf]
        %v2669 = vld [vmem:[#allocation22 + $0xa8] sm:$0xf]
        %v2670 = vld [vmem:[#allocation22 + $0xac] sm:$0xf]
        %v2671 = vld [vmem:[#allocation22 + $0xb0] sm:$0xf]
        %v2672 = vld [vmem:[#allocation22 + $0xb4] sm:$0xf]
        %v2673 = vld [vmem:[#allocation22 + $0xb8] sm:$0xf]
        %v2674 = vld [vmem:[#allocation22 + $0xbc] sm:$0xf]
        %v2675 = vld [vmem:[%s14] sm:$0x1]
        %v2677 = vperm.slane %v2675, 0
        %v2727 = vunpack.c.l.b16 %v2627
        %v2728 = vunpack.c.l.b16 %v2628
        %v2729 = vunpack.c.l.b16 %v2629
        %v2730 = vunpack.c.l.b16 %v2630
        %v2731 = vunpack.c.l.b16 %v2631
        %v2732 = vunpack.c.l.b16 %v2632
        %v2733 = vunpack.c.l.b16 %v2633
        %v2734 = vunpack.c.l.b16 %v2634
        %v2735 = vunpack.c.l.b16 %v2635
        %v2736 = vunpack.c.l.b16 %v2636
        %v2737 = vunpack.c.l.b16 %v2637
        %v2738 = vunpack.c.l.b16 %v2638
        %v2739 = vunpack.c.l.b16 %v2639
        %v2740 = vunpack.c.l.b16 %v2640
        %v2741 = vunpack.c.l.b16 %v2641
        %v2742 = vunpack.c.l.b16 %v2642
        %v2743 = vunpack.c.l.b16 %v2643
        %v2744 = vunpack.c.l.b16 %v2644
        %v2745 = vunpack.c.l.b16 %v2645
        %v2746 = vunpack.c.l.b16 %v2646
        %v2747 = vunpack.c.l.b16 %v2647
        %v2748 = vunpack.c.l.b16 %v2648
        %v2749 = vunpack.c.l.b16 %v2649
        %v2750 = vunpack.c.l.b16 %v2650
        %v2751 = vunpack.c.l.b16 %v2651
        %v2752 = vunpack.c.l.b16 %v2652
        %v2753 = vunpack.c.l.b16 %v2653
        %v2754 = vunpack.c.l.b16 %v2654
        %v2755 = vunpack.c.l.b16 %v2655
        %v2756 = vunpack.c.l.b16 %v2656
        %v2757 = vunpack.c.l.b16 %v2657
        %v2758 = vunpack.c.l.b16 %v2658
        %v2759 = vunpack.c.l.b16 %v2659
        %v2760 = vunpack.c.l.b16 %v2660
        %v2761 = vunpack.c.l.b16 %v2661
        %v2762 = vunpack.c.l.b16 %v2662
        %v2763 = vunpack.c.l.b16 %v2663
        %v2764 = vunpack.c.l.b16 %v2664
        %v2765 = vunpack.c.l.b16 %v2665
        %v2766 = vunpack.c.l.b16 %v2666
        %v2767 = vunpack.c.l.b16 %v2667
        %v2768 = vunpack.c.l.b16 %v2668
        %v2769 = vunpack.c.l.b16 %v2669
        %v2770 = vunpack.c.l.b16 %v2670
        %v2771 = vunpack.c.l.b16 %v2671
        %v2772 = vunpack.c.l.b16 %v2672
        %v2773 = vunpack.c.l.b16 %v2673
        %v2774 = vunpack.c.l.b16 %v2674
        %v2775 = vpack.c.b16 %v2728, %v2727
        %v2776 = vpack.c.b16 %v2730, %v2729
        %v2777 = vpack.c.b16 %v2732, %v2731
        %v2778 = vpack.c.b16 %v2734, %v2733
        %v2779 = vpack.c.b16 %v2736, %v2735
        %v2780 = vpack.c.b16 %v2738, %v2737
        %v2781 = vpack.c.b16 %v2740, %v2739
        %v2782 = vpack.c.b16 %v2742, %v2741
        %v2783 = vpack.c.b16 %v2744, %v2743
        %v2784 = vpack.c.b16 %v2746, %v2745
        %v2785 = vpack.c.b16 %v2748, %v2747
        %v2786 = vpack.c.b16 %v2750, %v2749
        %v2787 = vpack.c.b16 %v2752, %v2751
        %v2788 = vpack.c.b16 %v2754, %v2753
        %v2789 = vpack.c.b16 %v2756, %v2755
        %v2790 = vpack.c.b16 %v2758, %v2757
        %v2791 = vpack.c.b16 %v2760, %v2759
        %v2792 = vpack.c.b16 %v2762, %v2761
        %v2793 = vpack.c.b16 %v2764, %v2763
        %v2794 = vpack.c.b16 %v2766, %v2765
        %v2795 = vpack.c.b16 %v2768, %v2767
        %v2796 = vpack.c.b16 %v2770, %v2769
        %v2797 = vpack.c.b16 %v2772, %v2771
        %v2798 = vpack.c.b16 %v2774, %v2773
        %2823 = vmatpush.bf16.msra.mxu0 %v2782
        %2824 = vmatpush.bf16.msra.mxu0 %v2781
        %2825 = vmatpush.bf16.msra.mxu0 %v2780
        %2826 = vmatpush.bf16.msra.mxu0 %v2779
        %2827 = vmatpush.bf16.msra.mxu0 %v2778
        %2828 = vmatpush.bf16.msra.mxu0 %v2777
        %2829 = vmatpush.bf16.msra.mxu0 %v2776
        %2830 = vmatpush.bf16.msra.mxu0 %v2775
        %2831 = vmatmul.bf16.gmra.mxu0 %v2624
        %v2832 = vpop.f32.mrf.mxu0
        %v2833 = vadd.f32 %v2677, %v2832
        %v2834 = vpop.f32.mrf.mxu0
        %2835 = vdwg.mxu0
        %2836 = vmatpush.bf16.msra.mxu0 %v2790
        %2837 = vmatpush.bf16.msra.mxu0 %v2789
        %2838 = vmatpush.bf16.msra.mxu0 %v2788
        %2839 = vmatpush.bf16.msra.mxu0 %v2787
        %2840 = vmatpush.bf16.msra.mxu0 %v2786
        %2841 = vmatpush.bf16.msra.mxu0 %v2785
        %2842 = vmatpush.bf16.msra.mxu0 %v2784
        %2843 = vmatpush.bf16.msra.mxu0 %v2783
        %2844 = vmatmul.bf16.gmra.mxu0 %v2625
        %v2845 = vpop.f32.mrf.mxu0
        %v2846 = vadd.f32 %v2833, %v2845
        %v2847 = vpop.f32.mrf.mxu0
        %2848 = vdwg.mxu0
        %2849 = vmatpush.bf16.msra.mxu0 %v2798
        %2850 = vmatpush.bf16.msra.mxu0 %v2797
        %2851 = vmatpush.bf16.msra.mxu0 %v2796
        %2852 = vmatpush.bf16.msra.mxu0 %v2795
        %2853 = vmatpush.bf16.msra.mxu0 %v2794
        %2854 = vmatpush.bf16.msra.mxu0 %v2793
        %2855 = vmatpush.bf16.msra.mxu0 %v2792
        %2856 = vmatpush.bf16.msra.mxu0 %v2791
        %2857 = vmatmul.bf16.gmra.mxu0 %v2626
        %v2858 = vpop.f32.mrf.mxu0
        %v2859 = vadd.f32 %v2846, %v2858
        %v2860 = vpop.f32.mrf.mxu0
        %2861 = vdwg.mxu0
        %2862 = vst [vmem:[%s935] sm:$0xff] %v2859
        %s2863 = sand.u32 %s524, 1
        %s2864 = scalar_lea.sflag [#allocation4], %s2863
        %s2865 = sand.u32 %s524, 1
        %s2866 = smul.addr %s2865, 8
        %s2867 = scalar_lea.vmem [#allocation23], %s2866
        %s2868 = sand.u32 %s49, 1
        %s2869 = scalar_lea.sflag [#allocation25], %s2868
        %s2870 = sand.u32 %s550, 1
        %s2871 = smul.addr %s2870, 16
        %s2872 = scalar_lea.vmem [#allocation24], %s2871
        %s2873 = sand.u32 %s49, 1
        %s2874 = scalar_lea.sflag [#allocation25], %s2873
        %s2875 = sand.u32 %s576, 1
        %s2876 = smul.addr %s2875, 64
        %s2877 = scalar_lea.vmem [#allocation26], %s2876
        // Predicated region
        $region161: #{tpu_custom_call.1} parent=107 // pred_check
          %p2878 = pneg %p534
        $region162: #{tpu_custom_call.1} parent=107 // pred_check_branch
          %2880 = sbr.rel (%p2878) target = $region164
        $region163: #{tpu_custom_call.1} parent=107 // pred_region
          %2882 = vsyncadd %s2864, 0
          %s2883 = smul.addr %s49, 8
          %s2884 = scalar_lea.hbm %s22, %s2883
          %s2886 = sshll.u32 %s2867, 4
          %s2887 = int_to_ptr.vmem [resolvable:$true] %s2886
          %s2888 = sshll.u32 %s2884, 4
          %s2889 = int_to_ptr.hbm [resolvable:$true] %s2888
          %2891 = dma.vmem_to_hbm [thread:$0]  %s2887, 128, %s2889, %s2864
        $region164: #{tpu_custom_call.1} parent=107 // pred_fallthru
          _
        // Predicated region
        $region165: #{tpu_custom_call.1} parent=107 // pred_check
          %p2892 = pneg %p560
        $region166: #{tpu_custom_call.1} parent=107 // pred_check_branch
          %2894 = sbr.rel (%p2892) target = $region168
        $region167: #{tpu_custom_call.1} parent=107 // pred_region
          %2896 = vsyncadd %s2869, 0
          %s2897 = smul.addr %s49, 2
          %s2898 = smul.addr %s2897, 8
          %s2899 = scalar_lea.hbm %s23, %s2898
          %s2901 = sshll.u32 %s2872, 4
          %s2902 = int_to_ptr.vmem [resolvable:$true] %s2901
          %s2903 = sshll.u32 %s2899, 4
          %s2904 = int_to_ptr.hbm [resolvable:$true] %s2903
          %2906 = dma.vmem_to_hbm [thread:$0]  %s2902, 256, %s2904, %s2869
        $region168: #{tpu_custom_call.1} parent=107 // pred_fallthru
          _
        // Predicated region
        $region169: #{tpu_custom_call.1} parent=107 // pred_check
          %p2907 = pneg %p586
        $region170: #{tpu_custom_call.1} parent=107 // pred_check_branch
          %2909 = sbr.rel (%p2907) target = $region172
        $region171: #{tpu_custom_call.1} parent=107 // pred_region
          %2911 = vsyncadd %s2874, 0
          %s2912 = smul.addr %s49, 8
          %s2913 = smul.addr %s2912, 8
          %s2914 = scalar_lea.hbm %s24, %s2913
          %s2915 = sshll.u32 %s2877, 4
          %s2916 = int_to_ptr.vmem [resolvable:$true] %s2915
          %s2917 = sshll.u32 %s2914, 4
          %s2918 = int_to_ptr.hbm [resolvable:$true] %s2917
          %2923 = dma.vmem_to_hbm [thread:$0]  %s2916, 1024, %s2918, %s2874, 128, 128, 8
        $region172: #{tpu_custom_call.1} parent=107 // pred_fallthru
          _
      $region108: #{tpu_custom_call.1} parent=5 // pred_fallthru
        _
      %p2924 = scmp.le.s32.totalorder 2, %s44
      // Predicated region
      $region173: #{tpu_custom_call.1} parent=5 // pred_check
        %p2925 = pneg %p2924
      $region174: #{tpu_custom_call.1} parent=5 // pred_check_branch
        %2927 = sbr.rel (%p2925) target = $region176
      $region175: #{tpu_custom_call.1} parent=5 // pred_region
        %s2928 = ssub.s32 %s44, 2
        // Predicated region
        $region177: #{tpu_custom_call.1} parent=175 // pred_check
          %p2929 = pneg %p540
        $region178: #{tpu_custom_call.1} parent=175 // pred_check_branch
          %2931 = sbr.rel (%p2929) target = $region180
        $region179: #{tpu_custom_call.1} parent=175 // pred_region
          %s2932 = sand.u32 %s525, 1
          %s2933 = scalar_lea.sflag [#allocation4], %s2932
          %s2934 = sand.u32 %s525, 1
          %s2935 = smul.addr %s2934, 8
          %s2936 = scalar_lea.vmem [#allocation23], %s2935
          %2938 = dma.done %s2933, 128
        $region180: #{tpu_custom_call.1} parent=175 // pred_fallthru
          _
        // Predicated region
        $region181: #{tpu_custom_call.1} parent=175 // pred_check
          %p2939 = pneg %p566
        $region182: #{tpu_custom_call.1} parent=175 // pred_check_branch
          %2941 = sbr.rel (%p2939) target = $region184
        $region183: #{tpu_custom_call.1} parent=175 // pred_region
          %s2942 = sand.u32 %s50, 1
          %s2943 = scalar_lea.sflag [#allocation25], %s2942
          %s2944 = sand.u32 %s551, 1
          %s2945 = smul.addr %s2944, 16
          %s2946 = scalar_lea.vmem [#allocation24], %s2945
          %2948 = dma.done %s2943, 256
        $region184: #{tpu_custom_call.1} parent=175 // pred_fallthru
          _
        // Predicated region
        $region185: #{tpu_custom_call.1} parent=175 // pred_check
          %p2949 = pneg %p592
        $region186: #{tpu_custom_call.1} parent=175 // pred_check_branch
          %2951 = sbr.rel (%p2949) target = $region188
        $region187: #{tpu_custom_call.1} parent=175 // pred_region
          %s2952 = sand.u32 %s50, 1
          %s2953 = scalar_lea.sflag [#allocation25], %s2952
          %s2954 = sand.u32 %s577, 1
          %s2955 = smul.addr %s2954, 64
          %s2956 = scalar_lea.vmem [#allocation26], %s2955
          %2958 = dma.done %s2953, 1024
        $region188: #{tpu_custom_call.1} parent=175 // pred_fallthru
          _
      $region176: #{tpu_custom_call.1} parent=5 // pred_fallthru
        _
    $region6: #{tpu_custom_call.1} parent=1 // loop_footer
      %s48 = sadd.s32 1, %s44
    $region7: #{tpu_custom_call.1} parent=1 // loop_footer_branch
      %43 = sbr.rel target = $region3
    $region8: #{tpu_custom_call.1} parent=1 // loop_exit
      _
    %2959 = vsyncpa [#allocation3], 1
    %s2960 = scalar_lea.sflag [#allocation3], 1
    %2961 = vsyncpa %s2960, 1
    %2962 = vsyncpa [#allocation6], 1
    %2963 = vsyncpa [#allocation9], 1
    %2964 = vsyncpa [#allocation12], 1
    %2965 = vsyncpa [#allocation15], 1
    %2966 = vsyncpa [#allocation18], 1
    %2967 = vsyncpa [#allocation21], 1
    %2968 = vsyncpa [#allocation4], 1
    %s2969 = scalar_lea.sflag [#allocation4], 1
    %2970 = vsyncpa %s2969, 1
    %2971 = vsyncpa [#allocation25], 1
    %s2972 = scalar_lea.sflag [#allocation25], 1
    %2973 = vsyncpa %s2972, 1

</llo_original>
